<compile_context>
chip_gen: v7x
topology: tpu7x:2x2x1
jax: 0.10.0
libtpu: 0.0.40
codegen_flags: <defaults>
</compile_context>

<pallas_src>
import functools

import jax
import jax.numpy as jnp
from jax.experimental import pallas as pl
from jax.experimental.pallas import tpu as pltpu


# ----------------------------------------------------------------------------
# Fused kernel: LSTM stack (time-major, flat 2D rows) + BN stats + tail head.
#
#   x_ref                : (T*Bp, Din)   layer-0 input rows (time-major, batch-padded)
#   per layer l          : wih_t (Din_l, 4H) bf16, whh_t (H, 4H) f32, b (1, 4H) f32
#   rowmask_ref          : (Bp, 1)       1.0 for real batch rows, 0.0 for padding
#   gamma/beta           : (1, H)        BatchNorm1d affine
#   w1_t,b1,w2_t,b2      : head Linear weights (transposed) / biases
#   mask1/mask2          : pre-scaled dropout masks for the tail rows
#   out_ref              : (n_tail*Bp, O)
#   gx_scr               : (T*Bp, 4H)    hoisted input-projection gates (scratch)
#   y_scr                : (T*Bp, H)     current layer's hidden states (scratch)
# ----------------------------------------------------------------------------
def facecnet_kernel(x_ref, *rest, n_layers, seq_len, b_pad, n_real_rows,
                    n_tail, hidden_dim):
    H = hidden_dim
    T = seq_len
    Bp = b_pad

    weight_refs = rest[:3 * n_layers]
    (rowmask_ref, gamma_ref, beta_ref,
     w1_ref, b1_ref, w2_ref, b2_ref,
     mask1_ref, mask2_ref,
     out_ref, gx_scr, y_scr) = rest[3 * n_layers:]

    last = n_layers - 1
    zeros_1h = jnp.zeros((1, H), jnp.float32)
    bn_sum = zeros_1h
    bn_sumsq = zeros_1h

    for layer in range(n_layers):  # n_layers is static and small
        wih_ref = weight_refs[3 * layer + 0]
        whh_ref = weight_refs[3 * layer + 1]
        b_ref = weight_refs[3 * layer + 2]

        # Layer 0 reads the input rows; deeper layers read the previous layer's
        # output, which is already resident in VMEM (y_scr) -> no HBM round trip.
        src_ref = x_ref if layer == 0 else y_scr

        # Hoisted input projection: one (T*Bp, d_in) x (d_in, 4H) bf16 MXU matmul,
        # f32 accumulation, bias folded in.
        src_bf16 = src_ref[...].astype(jnp.bfloat16)
        gx_scr[...] = (jnp.dot(src_bf16, wih_ref[...],
                               preferred_element_type=jnp.float32) + b_ref[...])

        w_hh = whh_ref[...]                     # loop-invariant recurrent weight (f32)
        is_last = (layer == last)
        rmask = rowmask_ref[...] if is_last else None

        def step(t, carry, w_hh=w_hh, rmask=rmask, is_last=is_last):
            h, c, s, ss = carry                 # h / c / stats live in vregs
            row0 = pl.multiple_of(t * Bp, Bp)   # sublane-aligned dynamic slice
            gates = gx_scr[pl.ds(row0, Bp), :] + jnp.dot(
                h, w_hh, preferred_element_type=jnp.float32)      # (Bp, 4H)
            i = jax.nn.sigmoid(gates[:, 0 * H:1 * H])
            f = jax.nn.sigmoid(gates[:, 1 * H:2 * H])
            g = jnp.tanh(gates[:, 2 * H:3 * H])
            o = jax.nn.sigmoid(gates[:, 3 * H:4 * H])
            c_new = f * c + i * g
            h_new = o * jnp.tanh(c_new)
            y_scr[pl.ds(row0, Bp), :] = h_new   # only remaining per-step VMEM store
            if is_last:
                # one-pass BatchNorm batch statistics, padded rows masked out
                hm = h_new * rmask
                s = s + jnp.sum(hm, axis=0, keepdims=True)
                ss = ss + jnp.sum(hm * h_new, axis=0, keepdims=True)
            return (h_new, c_new, s, ss)

        h0 = jnp.zeros((Bp, H), jnp.float32)
        c0 = jnp.zeros((Bp, H), jnp.float32)
        _, _, s_fin, ss_fin = jax.lax.fori_loop(
            0, T, step, (h0, c0, zeros_1h, zeros_1h), unroll=min(T, 8))

        if is_last:
            bn_sum, bn_sumsq = s_fin, ss_fin

    # ---- fused head on the tail timesteps only ------------------------------------
    inv_n = 1.0 / float(n_real_rows)
    mean = bn_sum * inv_n
    var = bn_sumsq * inv_n - mean * mean               # biased variance (BN training)
    scale = jax.lax.rsqrt(var + 1e-5) * gamma_ref[...]

    z = y_scr[pl.ds((T - n_tail) * Bp, n_tail * Bp), :]          # tail rows, VMEM
    zn = (z - mean) * scale + beta_ref[...]
    zn = zn * mask1_ref[...]                                     # dropout(0.5, train)
    h1 = jnp.dot(zn, w1_ref[...], preferred_element_type=jnp.float32) + b1_ref[...]
    h2 = jnp.dot(h1, w2_ref[...], preferred_element_type=jnp.float32) + b2_ref[...]
    h2 = h2 * mask2_ref[...]                                     # dropout(0.5, train)
    # TODO(synk): out last dim is O << 128 lanes (masked vst); negligible at demo size.
    out_ref[...] = jax.nn.sigmoid(h2)


def facecnet_fused(x2d, params, rowmask, mask1, mask2, *, T, Bp, B, n_tail):
    H = params["bn_gamma"].shape[1]
    O = params["w2_t"].shape[1]
    L = len(params["lstm_layers"])

    flat_weights = []
    for (wih_t, whh_t, b2d) in params["lstm_layers"]:
        flat_weights += [wih_t.astype(jnp.bfloat16), whh_t, b2d]

    args = ([x2d] + flat_weights +
            [rowmask, params["bn_gamma"], params["bn_beta"],
             params["w1_t"], params["b1"], params["w2_t"], params["b2"],
             mask1, mask2])

    # VMEM budget: raise the scoped limit past the 16/32 MiB defaults when needed,
    # capped at 64 MiB (v7x physical).  At demo shapes this stays at the 32 MiB floor.
    def nbytes(a):
        return int(a.size) * a.dtype.itemsize
    scratch_bytes = T * Bp * 4 * H * 4 + T * Bp * H * 4
    total = sum(nbytes(a) for a in args) + scratch_bytes + n_tail * Bp * O * 4
    vmem_limit = int(min(64 * 1024 * 1024, max(32 * 1024 * 1024, 2 * total)))

    kernel = functools.partial(
        facecnet_kernel, n_layers=L, seq_len=T, b_pad=Bp,
        n_real_rows=T * B, n_tail=n_tail, hidden_dim=H)

    return pl.pallas_call(
        kernel,
        out_shape=jax.ShapeDtypeStruct((n_tail * Bp, O), jnp.float32),
        in_specs=[pl.BlockSpec(memory_space=pltpu.MemorySpace.VMEM)] * len(args),
        out_specs=pl.BlockSpec(memory_space=pltpu.MemorySpace.VMEM),
        scratch_shapes=[
            pltpu.VMEM((T * Bp, 4 * H), jnp.float32),   # hoisted gates
            pltpu.VMEM((T * Bp, H), jnp.float32),       # layer output (stays in VMEM)
        ],
        compiler_params=pltpu.CompilerParams(vmem_limit_bytes=vmem_limit),
    )(*args)


# ----------------------------------------------------------------------------
# FaceCNet forward (wrapper / glue in plain JAX)
# ----------------------------------------------------------------------------
def facecnet_forward(x, params, batch_size, dropout_key=None):
    """x: (B, T, input_dim) float32 (PyTorch batch_first LSTM input)."""
    B, T, Din = x.shape
    H = params["bn_gamma"].shape[1]
    O = params["w2_t"].shape[1]

    Bp = ((B + 7) // 8) * 8                      # pad batch to 8 sublanes
    n_tail = min(T, -(-2 // O))                  # last ceil(2/O) timesteps feed [:, -2:]

    # Single small transpose + zero-pad + flatten outside the kernel (free XLA work);
    # everything inside the kernel stays in a flat 2D (T*Bp, F) time-major layout.
    x_tm = jnp.transpose(x, (1, 0, 2)).astype(jnp.float32)       # (T, B, Din)
    x_tm = jnp.pad(x_tm, ((0, 0), (0, Bp - B), (0, 0)))          # (T, Bp, Din)
    x2d = x_tm.reshape(T * Bp, Din)

    rowmask = (jnp.arange(Bp) < B).astype(jnp.float32).reshape(Bp, 1)

    if dropout_key is None:
        dropout_key = jax.random.PRNGKey(42)
    k1, k2 = jax.random.split(dropout_key)
    # TODO(synk): jax.random dropout stream cannot bit-match torch's RNG; only the
    #             distributional (p=0.5, scale 2.0) semantics are reproduced.
    mask1 = jax.random.bernoulli(k1, 0.5, (n_tail * Bp, H)).astype(jnp.float32) * 2.0
    mask2 = jax.random.bernoulli(k2, 0.5, (n_tail * Bp, O)).astype(jnp.float32) * 2.0

    out_tail = facecnet_fused(x2d, params, rowmask, mask1, mask2,
                              T=T, Bp=Bp, B=B, n_tail=n_tail)    # (n_tail*Bp, O)

    # drop padded batch rows, replicate PyTorch's batch-first flatten + [:, -2:]
    # (the torch `if sig.shape[0] < batch_size` branch is dead for T >= 1 and dropped)
    out = out_tail.reshape(n_tail, Bp, O)[:, :B, :]
    out_bt = jnp.transpose(out, (1, 0, 2)).reshape(B, n_tail * O)
    return out_bt[:, -2:]


# ----------------------------------------------------------------------------
# Deterministic parameter construction (shapes from FaceCNet.__init__)
# ----------------------------------------------------------------------------
def make_params(key, input_dim, hidden_dim, hidden_dim2, output_dim, n_layers):
    H = hidden_dim
    scale = 1.0 / jnp.sqrt(jnp.float32(H))
    keys = jax.random.split(key, 4 * n_layers + 4)
    ki = iter(range(len(keys)))

    lstm_layers = []
    for layer in range(n_layers):
        din = input_dim if layer == 0 else H
        w_ih = jax.random.uniform(keys[next(ki)], (4 * H, din), jnp.float32, -scale, scale)
        w_hh = jax.random.uniform(keys[next(ki)], (4 * H, H), jnp.float32, -scale, scale)
        b_ih = jax.random.uniform(keys[next(ki)], (4 * H,), jnp.float32, -scale, scale)
        b_hh = jax.random.uniform(keys[next(ki)], (4 * H,), jnp.float32, -scale, scale)
        lstm_layers.append((w_ih.T, w_hh.T, (b_ih + b_hh).reshape(1, 4 * H)))

    s1 = 1.0 / jnp.sqrt(jnp.float32(H))
    w1 = jax.random.uniform(keys[next(ki)], (hidden_dim2, H), jnp.float32, -s1, s1)
    b1 = jax.random.uniform(keys[next(ki)], (hidden_dim2,), jnp.float32, -s1, s1)
    s2 = 1.0 / jnp.sqrt(jnp.float32(hidden_dim2))
    w2 = jax.random.uniform(keys[next(ki)], (output_dim, hidden_dim2), jnp.float32, -s2, s2)
    b2 = jax.random.uniform(keys[next(ki)], (output_dim,), jnp.float32, -s2, s2)

    return {
        "lstm_layers": lstm_layers,
        "bn_gamma": jnp.ones((1, H), jnp.float32),
        "bn_beta": jnp.zeros((1, H), jnp.float32),
        "w1_t": w1.T, "b1": b1.reshape(1, -1),
        "w2_t": w2.T, "b2": b2.reshape(1, -1),
    }


if __name__ == "__main__":
    # small shapes consistent with the module
    batch_sz, input_dim, hidden_dim, hidden_dim2 = 2, 16, 32, 16
    seq_length, n_layers, output_dim = 8, 2, 2

    key = jax.random.PRNGKey(0)
    k_param, k_x, k_drop = jax.random.split(key, 3)
    params = make_params(k_param, input_dim, hidden_dim, hidden_dim2,
                         output_dim, n_layers)
    x = jax.random.normal(k_x, (batch_sz, seq_length, input_dim), jnp.float32)

    out = facecnet_forward(x, params, batch_sz, dropout_key=k_drop)
    out = jax.block_until_ready(out)
    assert out.shape == (batch_sz, 2), out.shape
    assert bool(jnp.all(jnp.isfinite(out)))
    print("KERNEL_OK")
</pallas_src>

<mosaic_0001>
module attributes {stable_mosaic.version = 11 : i64} {
  func.func @facecnet_kernel(%arg0: memref<64x16xf32, #tpu.memory_space<vmem>>, %arg1: memref<16x128xbf16, #tpu.memory_space<vmem>>, %arg2: memref<32x128xf32, #tpu.memory_space<vmem>>, %arg3: memref<1x128xf32, #tpu.memory_space<vmem>>, %arg4: memref<32x128xbf16, #tpu.memory_space<vmem>>, %arg5: memref<32x128xf32, #tpu.memory_space<vmem>>, %arg6: memref<1x128xf32, #tpu.memory_space<vmem>>, %arg7: memref<8x1xf32, #tpu.memory_space<vmem>>, %arg8: memref<1x32xf32, #tpu.memory_space<vmem>>, %arg9: memref<1x32xf32, #tpu.memory_space<vmem>>, %arg10: memref<32x16xf32, #tpu.memory_space<vmem>>, %arg11: memref<1x16xf32, #tpu.memory_space<vmem>>, %arg12: memref<16x2xf32, #tpu.memory_space<vmem>>, %arg13: memref<1x2xf32, #tpu.memory_space<vmem>>, %arg14: memref<8x32xf32, #tpu.memory_space<vmem>>, %arg15: memref<8x2xf32, #tpu.memory_space<vmem>>, %arg16: memref<8x2xf32, #tpu.memory_space<vmem>>, %arg17: memref<64x128xf32, #tpu.memory_space<vmem>>, %arg18: memref<64x32xf32, #tpu.memory_space<vmem>>) attributes {dimension_semantics = [], scalar_prefetch = 0 : i64, scratch_operands = 2 : i64, tpu.core_type = #tpu.core_type<tc>} {
    %cst = arith.constant 0.000000e+00 : f32
    %0 = vector.broadcast %cst : f32 to vector<1x32xf32>
    %c0 = arith.constant 0 : index
    %c0_0 = arith.constant 0 : index
    %1 = vector.load %arg0[%c0, %c0_0] : memref<64x16xf32, #tpu.memory_space<vmem>>, vector<64x16xf32>
    %2 = arith.truncf %1 : vector<64x16xf32> to vector<64x16xbf16>
    %c0_1 = arith.constant 0 : index
    %c0_2 = arith.constant 0 : index
    %3 = vector.load %arg1[%c0_1, %c0_2] : memref<16x128xbf16, #tpu.memory_space<vmem>>, vector<16x128xbf16>
    %cst_3 = arith.constant dense<0.000000e+00> : vector<64x128xf32>
    %4 = tpu.matmul %2, %3, %cst_3 {dimension_numbers = #tpu.dot_dimension_numbers<[1], [0], [0], [1], [0, 0, 1, 1], [], []>} : vector<64x16xbf16>, vector<16x128xbf16>, vector<64x128xf32> -> vector<64x128xf32>
    %c0_4 = arith.constant 0 : index
    %c0_5 = arith.constant 0 : index
    %5 = vector.load %arg3[%c0_4, %c0_5] : memref<1x128xf32, #tpu.memory_space<vmem>>, vector<1x128xf32>
    %6 = vector.broadcast %5 : vector<1x128xf32> to vector<64x128xf32>
    %7 = arith.addf %4, %6 : vector<64x128xf32>
    %c0_6 = arith.constant 0 : index
    %c0_7 = arith.constant 0 : index
    %8 = vector.load %arg17[%c0_6, %c0_7] : memref<64x128xf32, #tpu.memory_space<vmem>>, vector<64x128xf32>
    tpu.vector_store %arg17[%c0_6, %c0_7], %7 {strides = array<i32>} : memref<64x128xf32, #tpu.memory_space<vmem>>, vector<64x128xf32>,
    %c0_8 = arith.constant 0 : index
    %c0_9 = arith.constant 0 : index
    %9 = vector.load %arg2[%c0_8, %c0_9] : memref<32x128xf32, #tpu.memory_space<vmem>>, vector<32x128xf32>
    %cst_10 = arith.constant 0.000000e+00 : f32
    %10 = vector.broadcast %cst_10 : f32 to vector<8x32xf32>
    %cst_11 = arith.constant 0.000000e+00 : f32
    %11 = vector.broadcast %cst_11 : f32 to vector<8x32xf32>
    %c0_i32 = arith.constant 0 : i32
    %c8_i32 = arith.constant 8 : i32
    %12 = arith.muli %c0_i32, %c8_i32 : i32
    %13 = tpu.assume_multiple %12, 8 : i32
    %14 = arith.index_cast %13 : i32 to index
    %c0_12 = arith.constant 0 : index
    %15 = vector.load %arg17[%14, %c0_12] : memref<64x128xf32, #tpu.memory_space<vmem>>, vector<8x128xf32>
    %cst_13 = arith.constant dense<0.000000e+00> : vector<8x128xf32>
    %16 = tpu.matmul %10, %9, %cst_13 {dimension_numbers = #tpu.dot_dimension_numbers<[1], [0], [0], [1], [0, 0, 1, 1], [], []>} : vector<8x32xf32>, vector<32x128xf32>, vector<8x128xf32> -> vector<8x128xf32>
    %17 = arith.addf %15, %16 : vector<8x128xf32>
    %18 = vector.extract_strided_slice %17 {offsets = [0, 0], sizes = [8, 32], strides = [1, 1]} : vector<8x128xf32> to vector<8x32xf32>
    %19 = arith.negf %18 : vector<8x32xf32>
    %20 = math.exp %19 : vector<8x32xf32>
    %cst_14 = arith.constant 1.000000e+00 : f32
    %21 = vector.broadcast %cst_14 : f32 to vector<8x32xf32>
    %22 = arith.addf %21, %20 : vector<8x32xf32>
    %23 = arith.divf %21, %22 : vector<8x32xf32>
    %24 = vector.extract_strided_slice %17 {offsets = [0, 32], sizes = [8, 32], strides = [1, 1]} : vector<8x128xf32> to vector<8x32xf32>
    %25 = arith.negf %24 : vector<8x32xf32>
    %26 = math.exp %25 : vector<8x32xf32>
    %cst_15 = arith.constant 1.000000e+00 : f32
    %27 = vector.broadcast %cst_15 : f32 to vector<8x32xf32>
    %28 = arith.addf %27, %26 : vector<8x32xf32>
    %29 = arith.divf %27, %28 : vector<8x32xf32>
    %30 = vector.extract_strided_slice %17 {offsets = [0, 64], sizes = [8, 32], strides = [1, 1]} : vector<8x128xf32> to vector<8x32xf32>
    %31 = math.tanh %30 : vector<8x32xf32>
    %32 = vector.extract_strided_slice %17 {offsets = [0, 96], sizes = [8, 32], strides = [1, 1]} : vector<8x128xf32> to vector<8x32xf32>
    %33 = arith.negf %32 : vector<8x32xf32>
    %34 = math.exp %33 : vector<8x32xf32>
    %cst_16 = arith.constant 1.000000e+00 : f32
    %35 = vector.broadcast %cst_16 : f32 to vector<8x32xf32>
    %36 = arith.addf %35, %34 : vector<8x32xf32>
    %37 = arith.divf %35, %36 : vector<8x32xf32>
    %38 = arith.mulf %29, %11 : vector<8x32xf32>
    %39 = arith.mulf %23, %31 : vector<8x32xf32>
    %40 = arith.addf %38, %39 : vector<8x32xf32>
    %41 = math.tanh %40 : vector<8x32xf32>
    %42 = arith.mulf %37, %41 : vector<8x32xf32>
    %43 = arith.index_cast %13 : i32 to index
    %c0_17 = arith.constant 0 : index
    %44 = vector.load %arg18[%43, %c0_17] : memref<64x32xf32, #tpu.memory_space<vmem>>, vector<8x32xf32>
    tpu.vector_store %arg18[%43, %c0_17], %42 {strides = array<i32>} : memref<64x32xf32, #tpu.memory_space<vmem>>, vector<8x32xf32>,
    %c1_i32 = arith.constant 1 : i32
    %c8_i32_18 = arith.constant 8 : i32
    %45 = arith.muli %c1_i32, %c8_i32_18 : i32
    %46 = tpu.assume_multiple %45, 8 : i32
    %47 = arith.index_cast %46 : i32 to index
    %c0_19 = arith.constant 0 : index
    %48 = vector.load %arg17[%47, %c0_19] : memref<64x128xf32, #tpu.memory_space<vmem>>, vector<8x128xf32>
    %cst_20 = arith.constant dense<0.000000e+00> : vector<8x128xf32>
    %49 = tpu.matmul %42, %9, %cst_20 {dimension_numbers = #tpu.dot_dimension_numbers<[1], [0], [0], [1], [0, 0, 1, 1], [], []>} : vector<8x32xf32>, vector<32x128xf32>, vector<8x128xf32> -> vector<8x128xf32>
    %50 = arith.addf %48, %49 : vector<8x128xf32>
    %51 = vector.extract_strided_slice %50 {offsets = [0, 0], sizes = [8, 32], strides = [1, 1]} : vector<8x128xf32> to vector<8x32xf32>
    %52 = arith.negf %51 : vector<8x32xf32>
    %53 = math.exp %52 : vector<8x32xf32>
    %cst_21 = arith.constant 1.000000e+00 : f32
    %54 = vector.broadcast %cst_21 : f32 to vector<8x32xf32>
    %55 = arith.addf %54, %53 : vector<8x32xf32>
    %56 = arith.divf %54, %55 : vector<8x32xf32>
    %57 = vector.extract_strided_slice %50 {offsets = [0, 32], sizes = [8, 32], strides = [1, 1]} : vector<8x128xf32> to vector<8x32xf32>
    %58 = arith.negf %57 : vector<8x32xf32>
    %59 = math.exp %58 : vector<8x32xf32>
    %cst_22 = arith.constant 1.000000e+00 : f32
    %60 = vector.broadcast %cst_22 : f32 to vector<8x32xf32>
    %61 = arith.addf %60, %59 : vector<8x32xf32>
    %62 = arith.divf %60, %61 : vector<8x32xf32>
    %63 = vector.extract_strided_slice %50 {offsets = [0, 64], sizes = [8, 32], strides = [1, 1]} : vector<8x128xf32> to vector<8x32xf32>
    %64 = math.tanh %63 : vector<8x32xf32>
    %65 = vector.extract_strided_slice %50 {offsets = [0, 96], sizes = [8, 32], strides = [1, 1]} : vector<8x128xf32> to vector<8x32xf32>
    %66 = arith.negf %65 : vector<8x32xf32>
    %67 = math.exp %66 : vector<8x32xf32>
    %cst_23 = arith.constant 1.000000e+00 : f32
    %68 = vector.broadcast %cst_23 : f32 to vector<8x32xf32>
    %69 = arith.addf %68, %67 : vector<8x32xf32>
    %70 = arith.divf %68, %69 : vector<8x32xf32>
    %71 = arith.mulf %62, %40 : vector<8x32xf32>
    %72 = arith.mulf %56, %64 : vector<8x32xf32>
    %73 = arith.addf %71, %72 : vector<8x32xf32>
    %74 = math.tanh %73 : vector<8x32xf32>
    %75 = arith.mulf %70, %74 : vector<8x32xf32>
    %76 = arith.index_cast %46 : i32 to index
    %c0_24 = arith.constant 0 : index
    %77 = vector.load %arg18[%76, %c0_24] : memref<64x32xf32, #tpu.memory_space<vmem>>, vector<8x32xf32>
    tpu.vector_store %arg18[%76, %c0_24], %75 {strides = array<i32>} : memref<64x32xf32, #tpu.memory_space<vmem>>, vector<8x32xf32>,
    %c2_i32 = arith.constant 2 : i32
    %c8_i32_25 = arith.constant 8 : i32
    %78 = arith.muli %c2_i32, %c8_i32_25 : i32
    %79 = tpu.assume_multiple %78, 8 : i32
    %80 = arith.index_cast %79 : i32 to index
    %c0_26 = arith.constant 0 : index
    %81 = vector.load %arg17[%80, %c0_26] : memref<64x128xf32, #tpu.memory_space<vmem>>, vector<8x128xf32>
    %cst_27 = arith.constant dense<0.000000e+00> : vector<8x128xf32>
    %82 = tpu.matmul %75, %9, %cst_27 {dimension_numbers = #tpu.dot_dimension_numbers<[1], [0], [0], [1], [0, 0, 1, 1], [], []>} : vector<8x32xf32>, vector<32x128xf32>, vector<8x128xf32> -> vector<8x128xf32>
    %83 = arith.addf %81, %82 : vector<8x128xf32>
    %84 = vector.extract_strided_slice %83 {offsets = [0, 0], sizes = [8, 32], strides = [1, 1]} : vector<8x128xf32> to vector<8x32xf32>
    %85 = arith.negf %84 : vector<8x32xf32>
    %86 = math.exp %85 : vector<8x32xf32>
    %cst_28 = arith.constant 1.000000e+00 : f32
    %87 = vector.broadcast %cst_28 : f32 to vector<8x32xf32>
    %88 = arith.addf %87, %86 : vector<8x32xf32>
    %89 = arith.divf %87, %88 : vector<8x32xf32>
    %90 = vector.extract_strided_slice %83 {offsets = [0, 32], sizes = [8, 32], strides = [1, 1]} : vector<8x128xf32> to vector<8x32xf32>
    %91 = arith.negf %90 : vector<8x32xf32>
    %92 = math.exp %91 : vector<8x32xf32>
    %cst_29 = arith.constant 1.000000e+00 : f32
    %93 = vector.broadcast %cst_29 : f32 to vector<8x32xf32>
    %94 = arith.addf %93, %92 : vector<8x32xf32>
    %95 = arith.divf %93, %94 : vector<8x32xf32>
    %96 = vector.extract_strided_slice %83 {offsets = [0, 64], sizes = [8, 32], strides = [1, 1]} : vector<8x128xf32> to vector<8x32xf32>
    %97 = math.tanh %96 : vector<8x32xf32>
    %98 = vector.extract_strided_slice %83 {offsets = [0, 96], sizes = [8, 32], strides = [1, 1]} : vector<8x128xf32> to vector<8x32xf32>
    %99 = arith.negf %98 : vector<8x32xf32>
    %100 = math.exp %99 : vector<8x32xf32>
    %cst_30 = arith.constant 1.000000e+00 : f32
    %101 = vector.broadcast %cst_30 : f32 to vector<8x32xf32>
    %102 = arith.addf %101, %100 : vector<8x32xf32>
    %103 = arith.divf %101, %102 : vector<8x32xf32>
    %104 = arith.mulf %95, %73 : vector<8x32xf32>
    %105 = arith.mulf %89, %97 : vector<8x32xf32>
    %106 = arith.addf %104, %105 : vector<8x32xf32>
    %107 = math.tanh %106 : vector<8x32xf32>
    %108 = arith.mulf %103, %107 : vector<8x32xf32>
    %109 = arith.index_cast %79 : i32 to index
    %c0_31 = arith.constant 0 : index
    %110 = vector.load %arg18[%109, %c0_31] : memref<64x32xf32, #tpu.memory_space<vmem>>, vector<8x32xf32>
    tpu.vector_store %arg18[%109, %c0_31], %108 {strides = array<i32>} : memref<64x32xf32, #tpu.memory_space<vmem>>, vector<8x32xf32>,
    %c3_i32 = arith.constant 3 : i32
    %c8_i32_32 = arith.constant 8 : i32
    %111 = arith.muli %c3_i32, %c8_i32_32 : i32
    %112 = tpu.assume_multiple %111, 8 : i32
    %113 = arith.index_cast %112 : i32 to index
    %c0_33 = arith.constant 0 : index
    %114 = vector.load %arg17[%113, %c0_33] : memref<64x128xf32, #tpu.memory_space<vmem>>, vector<8x128xf32>
    %cst_34 = arith.constant dense<0.000000e+00> : vector<8x128xf32>
    %115 = tpu.matmul %108, %9, %cst_34 {dimension_numbers = #tpu.dot_dimension_numbers<[1], [0], [0], [1], [0, 0, 1, 1], [], []>} : vector<8x32xf32>, vector<32x128xf32>, vector<8x128xf32> -> vector<8x128xf32>
    %116 = arith.addf %114, %115 : vector<8x128xf32>
    %117 = vector.extract_strided_slice %116 {offsets = [0, 0], sizes = [8, 32], strides = [1, 1]} : vector<8x128xf32> to vector<8x32xf32>
    %118 = arith.negf %117 : vector<8x32xf32>
    %119 = math.exp %118 : vector<8x32xf32>
    %cst_35 = arith.constant 1.000000e+00 : f32
    %120 = vector.broadcast %cst_35 : f32 to vector<8x32xf32>
    %121 = arith.addf %120, %119 : vector<8x32xf32>
    %122 = arith.divf %120, %121 : vector<8x32xf32>
    %123 = vector.extract_strided_slice %116 {offsets = [0, 32], sizes = [8, 32], strides = [1, 1]} : vector<8x128xf32> to vector<8x32xf32>
    %124 = arith.negf %123 : vector<8x32xf32>
    %125 = math.exp %124 : vector<8x32xf32>
    %cst_36 = arith.constant 1.000000e+00 : f32
    %126 = vector.broadcast %cst_36 : f32 to vector<8x32xf32>
    %127 = arith.addf %126, %125 : vector<8x32xf32>
    %128 = arith.divf %126, %127 : vector<8x32xf32>
    %129 = vector.extract_strided_slice %116 {offsets = [0, 64], sizes = [8, 32], strides = [1, 1]} : vector<8x128xf32> to vector<8x32xf32>
    %130 = math.tanh %129 : vector<8x32xf32>
    %131 = vector.extract_strided_slice %116 {offsets = [0, 96], sizes = [8, 32], strides = [1, 1]} : vector<8x128xf32> to vector<8x32xf32>
    %132 = arith.negf %131 : vector<8x32xf32>
    %133 = math.exp %132 : vector<8x32xf32>
    %cst_37 = arith.constant 1.000000e+00 : f32
    %134 = vector.broadcast %cst_37 : f32 to vector<8x32xf32>
    %135 = arith.addf %134, %133 : vector<8x32xf32>
    %136 = arith.divf %134, %135 : vector<8x32xf32>
    %137 = arith.mulf %128, %106 : vector<8x32xf32>
    %138 = arith.mulf %122, %130 : vector<8x32xf32>
    %139 = arith.addf %137, %138 : vector<8x32xf32>
    %140 = math.tanh %139 : vector<8x32xf32>
    %141 = arith.mulf %136, %140 : vector<8x32xf32>
    %142 = arith.index_cast %112 : i32 to index
    %c0_38 = arith.constant 0 : index
    %143 = vector.load %arg18[%142, %c0_38] : memref<64x32xf32, #tpu.memory_space<vmem>>, vector<8x32xf32>
    tpu.vector_store %arg18[%142, %c0_38], %141 {strides = array<i32>} : memref<64x32xf32, #tpu.memory_space<vmem>>, vector<8x32xf32>,
    %c4_i32 = arith.constant 4 : i32
    %c8_i32_39 = arith.constant 8 : i32
    %144 = arith.muli %c4_i32, %c8_i32_39 : i32
    %145 = tpu.assume_multiple %144, 8 : i32
    %146 = arith.index_cast %145 : i32 to index
    %c0_40 = arith.constant 0 : index
    %147 = vector.load %arg17[%146, %c0_40] : memref<64x128xf32, #tpu.memory_space<vmem>>, vector<8x128xf32>
    %cst_41 = arith.constant dense<0.000000e+00> : vector<8x128xf32>
    %148 = tpu.matmul %141, %9, %cst_41 {dimension_numbers = #tpu.dot_dimension_numbers<[1], [0], [0], [1], [0, 0, 1, 1], [], []>} : vector<8x32xf32>, vector<32x128xf32>, vector<8x128xf32> -> vector<8x128xf32>
    %149 = arith.addf %147, %148 : vector<8x128xf32>
    %150 = vector.extract_strided_slice %149 {offsets = [0, 0], sizes = [8, 32], strides = [1, 1]} : vector<8x128xf32> to vector<8x32xf32>
    %151 = arith.negf %150 : vector<8x32xf32>
    %152 = math.exp %151 : vector<8x32xf32>
    %cst_42 = arith.constant 1.000000e+00 : f32
    %153 = vector.broadcast %cst_42 : f32 to vector<8x32xf32>
    %154 = arith.addf %153, %152 : vector<8x32xf32>
    %155 = arith.divf %153, %154 : vector<8x32xf32>
    %156 = vector.extract_strided_slice %149 {offsets = [0, 32], sizes = [8, 32], strides = [1, 1]} : vector<8x128xf32> to vector<8x32xf32>
    %157 = arith.negf %156 : vector<8x32xf32>
    %158 = math.exp %157 : vector<8x32xf32>
    %cst_43 = arith.constant 1.000000e+00 : f32
    %159 = vector.broadcast %cst_43 : f32 to vector<8x32xf32>
    %160 = arith.addf %159, %158 : vector<8x32xf32>
    %161 = arith.divf %159, %160 : vector<8x32xf32>
    %162 = vector.extract_strided_slice %149 {offsets = [0, 64], sizes = [8, 32], strides = [1, 1]} : vector<8x128xf32> to vector<8x32xf32>
    %163 = math.tanh %162 : vector<8x32xf32>
    %164 = vector.extract_strided_slice %149 {offsets = [0, 96], sizes = [8, 32], strides = [1, 1]} : vector<8x128xf32> to vector<8x32xf32>
    %165 = arith.negf %164 : vector<8x32xf32>
    %166 = math.exp %165 : vector<8x32xf32>
    %cst_44 = arith.constant 1.000000e+00 : f32
    %167 = vector.broadcast %cst_44 : f32 to vector<8x32xf32>
    %168 = arith.addf %167, %166 : vector<8x32xf32>
    %169 = arith.divf %167, %168 : vector<8x32xf32>
    %170 = arith.mulf %161, %139 : vector<8x32xf32>
    %171 = arith.mulf %155, %163 : vector<8x32xf32>
    %172 = arith.addf %170, %171 : vector<8x32xf32>
    %173 = math.tanh %172 : vector<8x32xf32>
    %174 = arith.mulf %169, %173 : vector<8x32xf32>
    %175 = arith.index_cast %145 : i32 to index
    %c0_45 = arith.constant 0 : index
    %176 = vector.load %arg18[%175, %c0_45] : memref<64x32xf32, #tpu.memory_space<vmem>>, vector<8x32xf32>
    tpu.vector_store %arg18[%175, %c0_45], %174 {strides = array<i32>} : memref<64x32xf32, #tpu.memory_space<vmem>>, vector<8x32xf32>,
    %c5_i32 = arith.constant 5 : i32
    %c8_i32_46 = arith.constant 8 : i32
    %177 = arith.muli %c5_i32, %c8_i32_46 : i32
    %178 = tpu.assume_multiple %177, 8 : i32
    %179 = arith.index_cast %178 : i32 to index
    %c0_47 = arith.constant 0 : index
    %180 = vector.load %arg17[%179, %c0_47] : memref<64x128xf32, #tpu.memory_space<vmem>>, vector<8x128xf32>
    %cst_48 = arith.constant dense<0.000000e+00> : vector<8x128xf32>
    %181 = tpu.matmul %174, %9, %cst_48 {dimension_numbers = #tpu.dot_dimension_numbers<[1], [0], [0], [1], [0, 0, 1, 1], [], []>} : vector<8x32xf32>, vector<32x128xf32>, vector<8x128xf32> -> vector<8x128xf32>
    %182 = arith.addf %180, %181 : vector<8x128xf32>
    %183 = vector.extract_strided_slice %182 {offsets = [0, 0], sizes = [8, 32], strides = [1, 1]} : vector<8x128xf32> to vector<8x32xf32>
    %184 = arith.negf %183 : vector<8x32xf32>
    %185 = math.exp %184 : vector<8x32xf32>
    %cst_49 = arith.constant 1.000000e+00 : f32
    %186 = vector.broadcast %cst_49 : f32 to vector<8x32xf32>
    %187 = arith.addf %186, %185 : vector<8x32xf32>
    %188 = arith.divf %186, %187 : vector<8x32xf32>
    %189 = vector.extract_strided_slice %182 {offsets = [0, 32], sizes = [8, 32], strides = [1, 1]} : vector<8x128xf32> to vector<8x32xf32>
    %190 = arith.negf %189 : vector<8x32xf32>
    %191 = math.exp %190 : vector<8x32xf32>
    %cst_50 = arith.constant 1.000000e+00 : f32
    %192 = vector.broadcast %cst_50 : f32 to vector<8x32xf32>
    %193 = arith.addf %192, %191 : vector<8x32xf32>
    %194 = arith.divf %192, %193 : vector<8x32xf32>
    %195 = vector.extract_strided_slice %182 {offsets = [0, 64], sizes = [8, 32], strides = [1, 1]} : vector<8x128xf32> to vector<8x32xf32>
    %196 = math.tanh %195 : vector<8x32xf32>
    %197 = vector.extract_strided_slice %182 {offsets = [0, 96], sizes = [8, 32], strides = [1, 1]} : vector<8x128xf32> to vector<8x32xf32>
    %198 = arith.negf %197 : vector<8x32xf32>
    %199 = math.exp %198 : vector<8x32xf32>
    %cst_51 = arith.constant 1.000000e+00 : f32
    %200 = vector.broadcast %cst_51 : f32 to vector<8x32xf32>
    %201 = arith.addf %200, %199 : vector<8x32xf32>
    %202 = arith.divf %200, %201 : vector<8x32xf32>
    %203 = arith.mulf %194, %172 : vector<8x32xf32>
    %204 = arith.mulf %188, %196 : vector<8x32xf32>
    %205 = arith.addf %203, %204 : vector<8x32xf32>
    %206 = math.tanh %205 : vector<8x32xf32>
    %207 = arith.mulf %202, %206 : vector<8x32xf32>
    %208 = arith.index_cast %178 : i32 to index
    %c0_52 = arith.constant 0 : index
    %209 = vector.load %arg18[%208, %c0_52] : memref<64x32xf32, #tpu.memory_space<vmem>>, vector<8x32xf32>
    tpu.vector_store %arg18[%208, %c0_52], %207 {strides = array<i32>} : memref<64x32xf32, #tpu.memory_space<vmem>>, vector<8x32xf32>,
    %c6_i32 = arith.constant 6 : i32
    %c8_i32_53 = arith.constant 8 : i32
    %210 = arith.muli %c6_i32, %c8_i32_53 : i32
    %211 = tpu.assume_multiple %210, 8 : i32
    %212 = arith.index_cast %211 : i32 to index
    %c0_54 = arith.constant 0 : index
    %213 = vector.load %arg17[%212, %c0_54] : memref<64x128xf32, #tpu.memory_space<vmem>>, vector<8x128xf32>
    %cst_55 = arith.constant dense<0.000000e+00> : vector<8x128xf32>
    %214 = tpu.matmul %207, %9, %cst_55 {dimension_numbers = #tpu.dot_dimension_numbers<[1], [0], [0], [1], [0, 0, 1, 1], [], []>} : vector<8x32xf32>, vector<32x128xf32>, vector<8x128xf32> -> vector<8x128xf32>
    %215 = arith.addf %213, %214 : vector<8x128xf32>
    %216 = vector.extract_strided_slice %215 {offsets = [0, 0], sizes = [8, 32], strides = [1, 1]} : vector<8x128xf32> to vector<8x32xf32>
    %217 = arith.negf %216 : vector<8x32xf32>
    %218 = math.exp %217 : vector<8x32xf32>
    %cst_56 = arith.constant 1.000000e+00 : f32
    %219 = vector.broadcast %cst_56 : f32 to vector<8x32xf32>
    %220 = arith.addf %219, %218 : vector<8x32xf32>
    %221 = arith.divf %219, %220 : vector<8x32xf32>
    %222 = vector.extract_strided_slice %215 {offsets = [0, 32], sizes = [8, 32], strides = [1, 1]} : vector<8x128xf32> to vector<8x32xf32>
    %223 = arith.negf %222 : vector<8x32xf32>
    %224 = math.exp %223 : vector<8x32xf32>
    %cst_57 = arith.constant 1.000000e+00 : f32
    %225 = vector.broadcast %cst_57 : f32 to vector<8x32xf32>
    %226 = arith.addf %225, %224 : vector<8x32xf32>
    %227 = arith.divf %225, %226 : vector<8x32xf32>
    %228 = vector.extract_strided_slice %215 {offsets = [0, 64], sizes = [8, 32], strides = [1, 1]} : vector<8x128xf32> to vector<8x32xf32>
    %229 = math.tanh %228 : vector<8x32xf32>
    %230 = vector.extract_strided_slice %215 {offsets = [0, 96], sizes = [8, 32], strides = [1, 1]} : vector<8x128xf32> to vector<8x32xf32>
    %231 = arith.negf %230 : vector<8x32xf32>
    %232 = math.exp %231 : vector<8x32xf32>
    %cst_58 = arith.constant 1.000000e+00 : f32
    %233 = vector.broadcast %cst_58 : f32 to vector<8x32xf32>
    %234 = arith.addf %233, %232 : vector<8x32xf32>
    %235 = arith.divf %233, %234 : vector<8x32xf32>
    %236 = arith.mulf %227, %205 : vector<8x32xf32>
    %237 = arith.mulf %221, %229 : vector<8x32xf32>
    %238 = arith.addf %236, %237 : vector<8x32xf32>
    %239 = math.tanh %238 : vector<8x32xf32>
    %240 = arith.mulf %235, %239 : vector<8x32xf32>
    %241 = arith.index_cast %211 : i32 to index
    %c0_59 = arith.constant 0 : index
    %242 = vector.load %arg18[%241, %c0_59] : memref<64x32xf32, #tpu.memory_space<vmem>>, vector<8x32xf32>
    tpu.vector_store %arg18[%241, %c0_59], %240 {strides = array<i32>} : memref<64x32xf32, #tpu.memory_space<vmem>>, vector<8x32xf32>,
    %c7_i32 = arith.constant 7 : i32
    %c8_i32_60 = arith.constant 8 : i32
    %243 = arith.muli %c7_i32, %c8_i32_60 : i32
    %244 = tpu.assume_multiple %243, 8 : i32
    %245 = arith.index_cast %244 : i32 to index
    %c0_61 = arith.constant 0 : index
    %246 = vector.load %arg17[%245, %c0_61] : memref<64x128xf32, #tpu.memory_space<vmem>>, vector<8x128xf32>
    %cst_62 = arith.constant dense<0.000000e+00> : vector<8x128xf32>
    %247 = tpu.matmul %240, %9, %cst_62 {dimension_numbers = #tpu.dot_dimension_numbers<[1], [0], [0], [1], [0, 0, 1, 1], [], []>} : vector<8x32xf32>, vector<32x128xf32>, vector<8x128xf32> -> vector<8x128xf32>
    %248 = arith.addf %246, %247 : vector<8x128xf32>
    %249 = vector.extract_strided_slice %248 {offsets = [0, 0], sizes = [8, 32], strides = [1, 1]} : vector<8x128xf32> to vector<8x32xf32>
    %250 = arith.negf %249 : vector<8x32xf32>
    %251 = math.exp %250 : vector<8x32xf32>
    %cst_63 = arith.constant 1.000000e+00 : f32
    %252 = vector.broadcast %cst_63 : f32 to vector<8x32xf32>
    %253 = arith.addf %252, %251 : vector<8x32xf32>
    %254 = arith.divf %252, %253 : vector<8x32xf32>
    %255 = vector.extract_strided_slice %248 {offsets = [0, 32], sizes = [8, 32], strides = [1, 1]} : vector<8x128xf32> to vector<8x32xf32>
    %256 = arith.negf %255 : vector<8x32xf32>
    %257 = math.exp %256 : vector<8x32xf32>
    %cst_64 = arith.constant 1.000000e+00 : f32
    %258 = vector.broadcast %cst_64 : f32 to vector<8x32xf32>
    %259 = arith.addf %258, %257 : vector<8x32xf32>
    %260 = arith.divf %258, %259 : vector<8x32xf32>
    %261 = vector.extract_strided_slice %248 {offsets = [0, 64], sizes = [8, 32], strides = [1, 1]} : vector<8x128xf32> to vector<8x32xf32>
    %262 = math.tanh %261 : vector<8x32xf32>
    %263 = vector.extract_strided_slice %248 {offsets = [0, 96], sizes = [8, 32], strides = [1, 1]} : vector<8x128xf32> to vector<8x32xf32>
    %264 = arith.negf %263 : vector<8x32xf32>
    %265 = math.exp %264 : vector<8x32xf32>
    %cst_65 = arith.constant 1.000000e+00 : f32
    %266 = vector.broadcast %cst_65 : f32 to vector<8x32xf32>
    %267 = arith.addf %266, %265 : vector<8x32xf32>
    %268 = arith.divf %266, %267 : vector<8x32xf32>
    %269 = arith.mulf %260, %238 : vector<8x32xf32>
    %270 = arith.mulf %254, %262 : vector<8x32xf32>
    %271 = arith.addf %269, %270 : vector<8x32xf32>
    %272 = math.tanh %271 : vector<8x32xf32>
    %273 = arith.mulf %268, %272 : vector<8x32xf32>
    %274 = arith.index_cast %244 : i32 to index
    %c0_66 = arith.constant 0 : index
    %275 = vector.load %arg18[%274, %c0_66] : memref<64x32xf32, #tpu.memory_space<vmem>>, vector<8x32xf32>
    tpu.vector_store %arg18[%274, %c0_66], %273 {strides = array<i32>} : memref<64x32xf32, #tpu.memory_space<vmem>>, vector<8x32xf32>,
    %c8_i32_67 = arith.constant 8 : i32
    %c0_68 = arith.constant 0 : index
    %c0_69 = arith.constant 0 : index
    %276 = vector.load %arg18[%c0_68, %c0_69] : memref<64x32xf32, #tpu.memory_space<vmem>>, vector<64x32xf32>
    %277 = arith.truncf %276 : vector<64x32xf32> to vector<64x32xbf16>
    %c0_70 = arith.constant 0 : index
    %c0_71 = arith.constant 0 : index
    %278 = vector.load %arg4[%c0_70, %c0_71] : memref<32x128xbf16, #tpu.memory_space<vmem>>, vector<32x128xbf16>
    %cst_72 = arith.constant dense<0.000000e+00> : vector<64x128xf32>
    %279 = tpu.matmul %277, %278, %cst_72 {dimension_numbers = #tpu.dot_dimension_numbers<[1], [0], [0], [1], [0, 0, 1, 1], [], []>} : vector<64x32xbf16>, vector<32x128xbf16>, vector<64x128xf32> -> vector<64x128xf32>
    %c0_73 = arith.constant 0 : index
    %c0_74 = arith.constant 0 : index
    %280 = vector.load %arg6[%c0_73, %c0_74] : memref<1x128xf32, #tpu.memory_space<vmem>>, vector<1x128xf32>
    %281 = vector.broadcast %280 : vector<1x128xf32> to vector<64x128xf32>
    %282 = arith.addf %279, %281 : vector<64x128xf32>
    %c0_75 = arith.constant 0 : index
    %c0_76 = arith.constant 0 : index
    %283 = vector.load %arg17[%c0_75, %c0_76] : memref<64x128xf32, #tpu.memory_space<vmem>>, vector<64x128xf32>
    tpu.vector_store %arg17[%c0_75, %c0_76], %282 {strides = array<i32>} : memref<64x128xf32, #tpu.memory_space<vmem>>, vector<64x128xf32>,
    %c0_77 = arith.constant 0 : index
    %c0_78 = arith.constant 0 : index
    %284 = vector.load %arg5[%c0_77, %c0_78] : memref<32x128xf32, #tpu.memory_space<vmem>>, vector<32x128xf32>
    %c0_79 = arith.constant 0 : index
    %c0_80 = arith.constant 0 : index
    %285 = vector.load %arg7[%c0_79, %c0_80] : memref<8x1xf32, #tpu.memory_space<vmem>>, vector<8x1xf32>
    %cst_81 = arith.constant 0.000000e+00 : f32
    %286 = vector.broadcast %cst_81 : f32 to vector<8x32xf32>
    %cst_82 = arith.constant 0.000000e+00 : f32
    %287 = vector.broadcast %cst_82 : f32 to vector<8x32xf32>
    %c0_i32_83 = arith.constant 0 : i32
    %c8_i32_84 = arith.constant 8 : i32
    %288 = arith.muli %c0_i32_83, %c8_i32_84 : i32
    %289 = tpu.assume_multiple %288, 8 : i32
    %290 = arith.index_cast %289 : i32 to index
    %c0_85 = arith.constant 0 : index
    %291 = vector.load %arg17[%290, %c0_85] : memref<64x128xf32, #tpu.memory_space<vmem>>, vector<8x128xf32>
    %cst_86 = arith.constant dense<0.000000e+00> : vector<8x128xf32>
    %292 = tpu.matmul %286, %284, %cst_86 {dimension_numbers = #tpu.dot_dimension_numbers<[1], [0], [0], [1], [0, 0, 1, 1], [], []>} : vector<8x32xf32>, vector<32x128xf32>, vector<8x128xf32> -> vector<8x128xf32>
    %293 = arith.addf %291, %292 : vector<8x128xf32>
    %294 = vector.extract_strided_slice %293 {offsets = [0, 0], sizes = [8, 32], strides = [1, 1]} : vector<8x128xf32> to vector<8x32xf32>
    %295 = arith.negf %294 : vector<8x32xf32>
    %296 = math.exp %295 : vector<8x32xf32>
    %cst_87 = arith.constant 1.000000e+00 : f32
    %297 = vector.broadcast %cst_87 : f32 to vector<8x32xf32>
    %298 = arith.addf %297, %296 : vector<8x32xf32>
    %299 = arith.divf %297, %298 : vector<8x32xf32>
    %300 = vector.extract_strided_slice %293 {offsets = [0, 32], sizes = [8, 32], strides = [1, 1]} : vector<8x128xf32> to vector<8x32xf32>
    %301 = arith.negf %300 : vector<8x32xf32>
    %302 = math.exp %301 : vector<8x32xf32>
    %cst_88 = arith.constant 1.000000e+00 : f32
    %303 = vector.broadcast %cst_88 : f32 to vector<8x32xf32>
    %304 = arith.addf %303, %302 : vector<8x32xf32>
    %305 = arith.divf %303, %304 : vector<8x32xf32>
    %306 = vector.extract_strided_slice %293 {offsets = [0, 64], sizes = [8, 32], strides = [1, 1]} : vector<8x128xf32> to vector<8x32xf32>
    %307 = math.tanh %306 : vector<8x32xf32>
    %308 = vector.extract_strided_slice %293 {offsets = [0, 96], sizes = [8, 32], strides = [1, 1]} : vector<8x128xf32> to vector<8x32xf32>
    %309 = arith.negf %308 : vector<8x32xf32>
    %310 = math.exp %309 : vector<8x32xf32>
    %cst_89 = arith.constant 1.000000e+00 : f32
    %311 = vector.broadcast %cst_89 : f32 to vector<8x32xf32>
    %312 = arith.addf %311, %310 : vector<8x32xf32>
    %313 = arith.divf %311, %312 : vector<8x32xf32>
    %314 = arith.mulf %305, %287 : vector<8x32xf32>
    %315 = arith.mulf %299, %307 : vector<8x32xf32>
    %316 = arith.addf %314, %315 : vector<8x32xf32>
    %317 = math.tanh %316 : vector<8x32xf32>
    %318 = arith.mulf %313, %317 : vector<8x32xf32>
    %319 = arith.index_cast %289 : i32 to index
    %c0_90 = arith.constant 0 : index
    %320 = vector.load %arg18[%319, %c0_90] : memref<64x32xf32, #tpu.memory_space<vmem>>, vector<8x32xf32>
    tpu.vector_store %arg18[%319, %c0_90], %318 {strides = array<i32>} : memref<64x32xf32, #tpu.memory_space<vmem>>, vector<8x32xf32>,
    %321 = vector.broadcast %285 : vector<8x1xf32> to vector<8x32xf32>
    %322 = arith.mulf %318, %321 : vector<8x32xf32>
    %cst_91 = arith.constant dense<0.000000e+00> : vector<32xf32>
    %323 = vector.multi_reduction <add>, %322, %cst_91 [0] : vector<8x32xf32> to vector<32xf32>
    %324 = vector.shape_cast %323 : vector<32xf32> to vector<1x32xf32>
    %325 = arith.addf %0, %324 : vector<1x32xf32>
    %326 = arith.mulf %322, %318 : vector<8x32xf32>
    %cst_92 = arith.constant dense<0.000000e+00> : vector<32xf32>
    %327 = vector.multi_reduction <add>, %326, %cst_92 [0] : vector<8x32xf32> to vector<32xf32>
    %328 = vector.shape_cast %327 : vector<32xf32> to vector<1x32xf32>
    %329 = arith.addf %0, %328 : vector<1x32xf32>
    %c1_i32_93 = arith.constant 1 : i32
    %c8_i32_94 = arith.constant 8 : i32
    %330 = arith.muli %c1_i32_93, %c8_i32_94 : i32
    %331 = tpu.assume_multiple %330, 8 : i32
    %332 = arith.index_cast %331 : i32 to index
    %c0_95 = arith.constant 0 : index
    %333 = vector.load %arg17[%332, %c0_95] : memref<64x128xf32, #tpu.memory_space<vmem>>, vector<8x128xf32>
    %cst_96 = arith.constant dense<0.000000e+00> : vector<8x128xf32>
    %334 = tpu.matmul %318, %284, %cst_96 {dimension_numbers = #tpu.dot_dimension_numbers<[1], [0], [0], [1], [0, 0, 1, 1], [], []>} : vector<8x32xf32>, vector<32x128xf32>, vector<8x128xf32> -> vector<8x128xf32>
    %335 = arith.addf %333, %334 : vector<8x128xf32>
    %336 = vector.extract_strided_slice %335 {offsets = [0, 0], sizes = [8, 32], strides = [1, 1]} : vector<8x128xf32> to vector<8x32xf32>
    %337 = arith.negf %336 : vector<8x32xf32>
    %338 = math.exp %337 : vector<8x32xf32>
    %cst_97 = arith.constant 1.000000e+00 : f32
    %339 = vector.broadcast %cst_97 : f32 to vector<8x32xf32>
    %340 = arith.addf %339, %338 : vector<8x32xf32>
    %341 = arith.divf %339, %340 : vector<8x32xf32>
    %342 = vector.extract_strided_slice %335 {offsets = [0, 32], sizes = [8, 32], strides = [1, 1]} : vector<8x128xf32> to vector<8x32xf32>
    %343 = arith.negf %342 : vector<8x32xf32>
    %344 = math.exp %343 : vector<8x32xf32>
    %cst_98 = arith.constant 1.000000e+00 : f32
    %345 = vector.broadcast %cst_98 : f32 to vector<8x32xf32>
    %346 = arith.addf %345, %344 : vector<8x32xf32>
    %347 = arith.divf %345, %346 : vector<8x32xf32>
    %348 = vector.extract_strided_slice %335 {offsets = [0, 64], sizes = [8, 32], strides = [1, 1]} : vector<8x128xf32> to vector<8x32xf32>
    %349 = math.tanh %348 : vector<8x32xf32>
    %350 = vector.extract_strided_slice %335 {offsets = [0, 96], sizes = [8, 32], strides = [1, 1]} : vector<8x128xf32> to vector<8x32xf32>
    %351 = arith.negf %350 : vector<8x32xf32>
    %352 = math.exp %351 : vector<8x32xf32>
    %cst_99 = arith.constant 1.000000e+00 : f32
    %353 = vector.broadcast %cst_99 : f32 to vector<8x32xf32>
    %354 = arith.addf %353, %352 : vector<8x32xf32>
    %355 = arith.divf %353, %354 : vector<8x32xf32>
    %356 = arith.mulf %347, %316 : vector<8x32xf32>
    %357 = arith.mulf %341, %349 : vector<8x32xf32>
    %358 = arith.addf %356, %357 : vector<8x32xf32>
    %359 = math.tanh %358 : vector<8x32xf32>
    %360 = arith.mulf %355, %359 : vector<8x32xf32>
    %361 = arith.index_cast %331 : i32 to index
    %c0_100 = arith.constant 0 : index
    %362 = vector.load %arg18[%361, %c0_100] : memref<64x32xf32, #tpu.memory_space<vmem>>, vector<8x32xf32>
    tpu.vector_store %arg18[%361, %c0_100], %360 {strides = array<i32>} : memref<64x32xf32, #tpu.memory_space<vmem>>, vector<8x32xf32>,
    %363 = vector.broadcast %285 : vector<8x1xf32> to vector<8x32xf32>
    %364 = arith.mulf %360, %363 : vector<8x32xf32>
    %cst_101 = arith.constant dense<0.000000e+00> : vector<32xf32>
    %365 = vector.multi_reduction <add>, %364, %cst_101 [0] : vector<8x32xf32> to vector<32xf32>
    %366 = vector.shape_cast %365 : vector<32xf32> to vector<1x32xf32>
    %367 = arith.addf %325, %366 : vector<1x32xf32>
    %368 = arith.mulf %364, %360 : vector<8x32xf32>
    %cst_102 = arith.constant dense<0.000000e+00> : vector<32xf32>
    %369 = vector.multi_reduction <add>, %368, %cst_102 [0] : vector<8x32xf32> to vector<32xf32>
    %370 = vector.shape_cast %369 : vector<32xf32> to vector<1x32xf32>
    %371 = arith.addf %329, %370 : vector<1x32xf32>
    %c2_i32_103 = arith.constant 2 : i32
    %c8_i32_104 = arith.constant 8 : i32
    %372 = arith.muli %c2_i32_103, %c8_i32_104 : i32
    %373 = tpu.assume_multiple %372, 8 : i32
    %374 = arith.index_cast %373 : i32 to index
    %c0_105 = arith.constant 0 : index
    %375 = vector.load %arg17[%374, %c0_105] : memref<64x128xf32, #tpu.memory_space<vmem>>, vector<8x128xf32>
    %cst_106 = arith.constant dense<0.000000e+00> : vector<8x128xf32>
    %376 = tpu.matmul %360, %284, %cst_106 {dimension_numbers = #tpu.dot_dimension_numbers<[1], [0], [0], [1], [0, 0, 1, 1], [], []>} : vector<8x32xf32>, vector<32x128xf32>, vector<8x128xf32> -> vector<8x128xf32>
    %377 = arith.addf %375, %376 : vector<8x128xf32>
    %378 = vector.extract_strided_slice %377 {offsets = [0, 0], sizes = [8, 32], strides = [1, 1]} : vector<8x128xf32> to vector<8x32xf32>
    %379 = arith.negf %378 : vector<8x32xf32>
    %380 = math.exp %379 : vector<8x32xf32>
    %cst_107 = arith.constant 1.000000e+00 : f32
    %381 = vector.broadcast %cst_107 : f32 to vector<8x32xf32>
    %382 = arith.addf %381, %380 : vector<8x32xf32>
    %383 = arith.divf %381, %382 : vector<8x32xf32>
    %384 = vector.extract_strided_slice %377 {offsets = [0, 32], sizes = [8, 32], strides = [1, 1]} : vector<8x128xf32> to vector<8x32xf32>
    %385 = arith.negf %384 : vector<8x32xf32>
    %386 = math.exp %385 : vector<8x32xf32>
    %cst_108 = arith.constant 1.000000e+00 : f32
    %387 = vector.broadcast %cst_108 : f32 to vector<8x32xf32>
    %388 = arith.addf %387, %386 : vector<8x32xf32>
    %389 = arith.divf %387, %388 : vector<8x32xf32>
    %390 = vector.extract_strided_slice %377 {offsets = [0, 64], sizes = [8, 32], strides = [1, 1]} : vector<8x128xf32> to vector<8x32xf32>
    %391 = math.tanh %390 : vector<8x32xf32>
    %392 = vector.extract_strided_slice %377 {offsets = [0, 96], sizes = [8, 32], strides = [1, 1]} : vector<8x128xf32> to vector<8x32xf32>
    %393 = arith.negf %392 : vector<8x32xf32>
    %394 = math.exp %393 : vector<8x32xf32>
    %cst_109 = arith.constant 1.000000e+00 : f32
    %395 = vector.broadcast %cst_109 : f32 to vector<8x32xf32>
    %396 = arith.addf %395, %394 : vector<8x32xf32>
    %397 = arith.divf %395, %396 : vector<8x32xf32>
    %398 = arith.mulf %389, %358 : vector<8x32xf32>
    %399 = arith.mulf %383, %391 : vector<8x32xf32>
    %400 = arith.addf %398, %399 : vector<8x32xf32>
    %401 = math.tanh %400 : vector<8x32xf32>
    %402 = arith.mulf %397, %401 : vector<8x32xf32>
    %403 = arith.index_cast %373 : i32 to index
    %c0_110 = arith.constant 0 : index
    %404 = vector.load %arg18[%403, %c0_110] : memref<64x32xf32, #tpu.memory_space<vmem>>, vector<8x32xf32>
    tpu.vector_store %arg18[%403, %c0_110], %402 {strides = array<i32>} : memref<64x32xf32, #tpu.memory_space<vmem>>, vector<8x32xf32>,
    %405 = vector.broadcast %285 : vector<8x1xf32> to vector<8x32xf32>
    %406 = arith.mulf %402, %405 : vector<8x32xf32>
    %cst_111 = arith.constant dense<0.000000e+00> : vector<32xf32>
    %407 = vector.multi_reduction <add>, %406, %cst_111 [0] : vector<8x32xf32> to vector<32xf32>
    %408 = vector.shape_cast %407 : vector<32xf32> to vector<1x32xf32>
    %409 = arith.addf %367, %408 : vector<1x32xf32>
    %410 = arith.mulf %406, %402 : vector<8x32xf32>
    %cst_112 = arith.constant dense<0.000000e+00> : vector<32xf32>
    %411 = vector.multi_reduction <add>, %410, %cst_112 [0] : vector<8x32xf32> to vector<32xf32>
    %412 = vector.shape_cast %411 : vector<32xf32> to vector<1x32xf32>
    %413 = arith.addf %371, %412 : vector<1x32xf32>
    %c3_i32_113 = arith.constant 3 : i32
    %c8_i32_114 = arith.constant 8 : i32
    %414 = arith.muli %c3_i32_113, %c8_i32_114 : i32
    %415 = tpu.assume_multiple %414, 8 : i32
    %416 = arith.index_cast %415 : i32 to index
    %c0_115 = arith.constant 0 : index
    %417 = vector.load %arg17[%416, %c0_115] : memref<64x128xf32, #tpu.memory_space<vmem>>, vector<8x128xf32>
    %cst_116 = arith.constant dense<0.000000e+00> : vector<8x128xf32>
    %418 = tpu.matmul %402, %284, %cst_116 {dimension_numbers = #tpu.dot_dimension_numbers<[1], [0], [0], [1], [0, 0, 1, 1], [], []>} : vector<8x32xf32>, vector<32x128xf32>, vector<8x128xf32> -> vector<8x128xf32>
    %419 = arith.addf %417, %418 : vector<8x128xf32>
    %420 = vector.extract_strided_slice %419 {offsets = [0, 0], sizes = [8, 32], strides = [1, 1]} : vector<8x128xf32> to vector<8x32xf32>
    %421 = arith.negf %420 : vector<8x32xf32>
    %422 = math.exp %421 : vector<8x32xf32>
    %cst_117 = arith.constant 1.000000e+00 : f32
    %423 = vector.broadcast %cst_117 : f32 to vector<8x32xf32>
    %424 = arith.addf %423, %422 : vector<8x32xf32>
    %425 = arith.divf %423, %424 : vector<8x32xf32>
    %426 = vector.extract_strided_slice %419 {offsets = [0, 32], sizes = [8, 32], strides = [1, 1]} : vector<8x128xf32> to vector<8x32xf32>
    %427 = arith.negf %426 : vector<8x32xf32>
    %428 = math.exp %427 : vector<8x32xf32>
    %cst_118 = arith.constant 1.000000e+00 : f32
    %429 = vector.broadcast %cst_118 : f32 to vector<8x32xf32>
    %430 = arith.addf %429, %428 : vector<8x32xf32>
    %431 = arith.divf %429, %430 : vector<8x32xf32>
    %432 = vector.extract_strided_slice %419 {offsets = [0, 64], sizes = [8, 32], strides = [1, 1]} : vector<8x128xf32> to vector<8x32xf32>
    %433 = math.tanh %432 : vector<8x32xf32>
    %434 = vector.extract_strided_slice %419 {offsets = [0, 96], sizes = [8, 32], strides = [1, 1]} : vector<8x128xf32> to vector<8x32xf32>
    %435 = arith.negf %434 : vector<8x32xf32>
    %436 = math.exp %435 : vector<8x32xf32>
    %cst_119 = arith.constant 1.000000e+00 : f32
    %437 = vector.broadcast %cst_119 : f32 to vector<8x32xf32>
    %438 = arith.addf %437, %436 : vector<8x32xf32>
    %439 = arith.divf %437, %438 : vector<8x32xf32>
    %440 = arith.mulf %431, %400 : vector<8x32xf32>
    %441 = arith.mulf %425, %433 : vector<8x32xf32>
    %442 = arith.addf %440, %441 : vector<8x32xf32>
    %443 = math.tanh %442 : vector<8x32xf32>
    %444 = arith.mulf %439, %443 : vector<8x32xf32>
    %445 = arith.index_cast %415 : i32 to index
    %c0_120 = arith.constant 0 : index
    %446 = vector.load %arg18[%445, %c0_120] : memref<64x32xf32, #tpu.memory_space<vmem>>, vector<8x32xf32>
    tpu.vector_store %arg18[%445, %c0_120], %444 {strides = array<i32>} : memref<64x32xf32, #tpu.memory_space<vmem>>, vector<8x32xf32>,
    %447 = vector.broadcast %285 : vector<8x1xf32> to vector<8x32xf32>
    %448 = arith.mulf %444, %447 : vector<8x32xf32>
    %cst_121 = arith.constant dense<0.000000e+00> : vector<32xf32>
    %449 = vector.multi_reduction <add>, %448, %cst_121 [0] : vector<8x32xf32> to vector<32xf32>
    %450 = vector.shape_cast %449 : vector<32xf32> to vector<1x32xf32>
    %451 = arith.addf %409, %450 : vector<1x32xf32>
    %452 = arith.mulf %448, %444 : vector<8x32xf32>
    %cst_122 = arith.constant dense<0.000000e+00> : vector<32xf32>
    %453 = vector.multi_reduction <add>, %452, %cst_122 [0] : vector<8x32xf32> to vector<32xf32>
    %454 = vector.shape_cast %453 : vector<32xf32> to vector<1x32xf32>
    %455 = arith.addf %413, %454 : vector<1x32xf32>
    %c4_i32_123 = arith.constant 4 : i32
    %c8_i32_124 = arith.constant 8 : i32
    %456 = arith.muli %c4_i32_123, %c8_i32_124 : i32
    %457 = tpu.assume_multiple %456, 8 : i32
    %458 = arith.index_cast %457 : i32 to index
    %c0_125 = arith.constant 0 : index
    %459 = vector.load %arg17[%458, %c0_125] : memref<64x128xf32, #tpu.memory_space<vmem>>, vector<8x128xf32>
    %cst_126 = arith.constant dense<0.000000e+00> : vector<8x128xf32>
    %460 = tpu.matmul %444, %284, %cst_126 {dimension_numbers = #tpu.dot_dimension_numbers<[1], [0], [0], [1], [0, 0, 1, 1], [], []>} : vector<8x32xf32>, vector<32x128xf32>, vector<8x128xf32> -> vector<8x128xf32>
    %461 = arith.addf %459, %460 : vector<8x128xf32>
    %462 = vector.extract_strided_slice %461 {offsets = [0, 0], sizes = [8, 32], strides = [1, 1]} : vector<8x128xf32> to vector<8x32xf32>
    %463 = arith.negf %462 : vector<8x32xf32>
    %464 = math.exp %463 : vector<8x32xf32>
    %cst_127 = arith.constant 1.000000e+00 : f32
    %465 = vector.broadcast %cst_127 : f32 to vector<8x32xf32>
    %466 = arith.addf %465, %464 : vector<8x32xf32>
    %467 = arith.divf %465, %466 : vector<8x32xf32>
    %468 = vector.extract_strided_slice %461 {offsets = [0, 32], sizes = [8, 32], strides = [1, 1]} : vector<8x128xf32> to vector<8x32xf32>
    %469 = arith.negf %468 : vector<8x32xf32>
    %470 = math.exp %469 : vector<8x32xf32>
    %cst_128 = arith.constant 1.000000e+00 : f32
    %471 = vector.broadcast %cst_128 : f32 to vector<8x32xf32>
    %472 = arith.addf %471, %470 : vector<8x32xf32>
    %473 = arith.divf %471, %472 : vector<8x32xf32>
    %474 = vector.extract_strided_slice %461 {offsets = [0, 64], sizes = [8, 32], strides = [1, 1]} : vector<8x128xf32> to vector<8x32xf32>
    %475 = math.tanh %474 : vector<8x32xf32>
    %476 = vector.extract_strided_slice %461 {offsets = [0, 96], sizes = [8, 32], strides = [1, 1]} : vector<8x128xf32> to vector<8x32xf32>
    %477 = arith.negf %476 : vector<8x32xf32>
    %478 = math.exp %477 : vector<8x32xf32>
    %cst_129 = arith.constant 1.000000e+00 : f32
    %479 = vector.broadcast %cst_129 : f32 to vector<8x32xf32>
    %480 = arith.addf %479, %478 : vector<8x32xf32>
    %481 = arith.divf %479, %480 : vector<8x32xf32>
    %482 = arith.mulf %473, %442 : vector<8x32xf32>
    %483 = arith.mulf %467, %475 : vector<8x32xf32>
    %484 = arith.addf %482, %483 : vector<8x32xf32>
    %485 = math.tanh %484 : vector<8x32xf32>
    %486 = arith.mulf %481, %485 : vector<8x32xf32>
    %487 = arith.index_cast %457 : i32 to index
    %c0_130 = arith.constant 0 : index
    %488 = vector.load %arg18[%487, %c0_130] : memref<64x32xf32, #tpu.memory_space<vmem>>, vector<8x32xf32>
    tpu.vector_store %arg18[%487, %c0_130], %486 {strides = array<i32>} : memref<64x32xf32, #tpu.memory_space<vmem>>, vector<8x32xf32>,
    %489 = vector.broadcast %285 : vector<8x1xf32> to vector<8x32xf32>
    %490 = arith.mulf %486, %489 : vector<8x32xf32>
    %cst_131 = arith.constant dense<0.000000e+00> : vector<32xf32>
    %491 = vector.multi_reduction <add>, %490, %cst_131 [0] : vector<8x32xf32> to vector<32xf32>
    %492 = vector.shape_cast %491 : vector<32xf32> to vector<1x32xf32>
    %493 = arith.addf %451, %492 : vector<1x32xf32>
    %494 = arith.mulf %490, %486 : vector<8x32xf32>
    %cst_132 = arith.constant dense<0.000000e+00> : vector<32xf32>
    %495 = vector.multi_reduction <add>, %494, %cst_132 [0] : vector<8x32xf32> to vector<32xf32>
    %496 = vector.shape_cast %495 : vector<32xf32> to vector<1x32xf32>
    %497 = arith.addf %455, %496 : vector<1x32xf32>
    %c5_i32_133 = arith.constant 5 : i32
    %c8_i32_134 = arith.constant 8 : i32
    %498 = arith.muli %c5_i32_133, %c8_i32_134 : i32
    %499 = tpu.assume_multiple %498, 8 : i32
    %500 = arith.index_cast %499 : i32 to index
    %c0_135 = arith.constant 0 : index
    %501 = vector.load %arg17[%500, %c0_135] : memref<64x128xf32, #tpu.memory_space<vmem>>, vector<8x128xf32>
    %cst_136 = arith.constant dense<0.000000e+00> : vector<8x128xf32>
    %502 = tpu.matmul %486, %284, %cst_136 {dimension_numbers = #tpu.dot_dimension_numbers<[1], [0], [0], [1], [0, 0, 1, 1], [], []>} : vector<8x32xf32>, vector<32x128xf32>, vector<8x128xf32> -> vector<8x128xf32>
    %503 = arith.addf %501, %502 : vector<8x128xf32>
    %504 = vector.extract_strided_slice %503 {offsets = [0, 0], sizes = [8, 32], strides = [1, 1]} : vector<8x128xf32> to vector<8x32xf32>
    %505 = arith.negf %504 : vector<8x32xf32>
    %506 = math.exp %505 : vector<8x32xf32>
    %cst_137 = arith.constant 1.000000e+00 : f32
    %507 = vector.broadcast %cst_137 : f32 to vector<8x32xf32>
    %508 = arith.addf %507, %506 : vector<8x32xf32>
    %509 = arith.divf %507, %508 : vector<8x32xf32>
    %510 = vector.extract_strided_slice %503 {offsets = [0, 32], sizes = [8, 32], strides = [1, 1]} : vector<8x128xf32> to vector<8x32xf32>
    %511 = arith.negf %510 : vector<8x32xf32>
    %512 = math.exp %511 : vector<8x32xf32>
    %cst_138 = arith.constant 1.000000e+00 : f32
    %513 = vector.broadcast %cst_138 : f32 to vector<8x32xf32>
    %514 = arith.addf %513, %512 : vector<8x32xf32>
    %515 = arith.divf %513, %514 : vector<8x32xf32>
    %516 = vector.extract_strided_slice %503 {offsets = [0, 64], sizes = [8, 32], strides = [1, 1]} : vector<8x128xf32> to vector<8x32xf32>
    %517 = math.tanh %516 : vector<8x32xf32>
    %518 = vector.extract_strided_slice %503 {offsets = [0, 96], sizes = [8, 32], strides = [1, 1]} : vector<8x128xf32> to vector<8x32xf32>
    %519 = arith.negf %518 : vector<8x32xf32>
    %520 = math.exp %519 : vector<8x32xf32>
    %cst_139 = arith.constant 1.000000e+00 : f32
    %521 = vector.broadcast %cst_139 : f32 to vector<8x32xf32>
    %522 = arith.addf %521, %520 : vector<8x32xf32>
    %523 = arith.divf %521, %522 : vector<8x32xf32>
    %524 = arith.mulf %515, %484 : vector<8x32xf32>
    %525 = arith.mulf %509, %517 : vector<8x32xf32>
    %526 = arith.addf %524, %525 : vector<8x32xf32>
    %527 = math.tanh %526 : vector<8x32xf32>
    %528 = arith.mulf %523, %527 : vector<8x32xf32>
    %529 = arith.index_cast %499 : i32 to index
    %c0_140 = arith.constant 0 : index
    %530 = vector.load %arg18[%529, %c0_140] : memref<64x32xf32, #tpu.memory_space<vmem>>, vector<8x32xf32>
    tpu.vector_store %arg18[%529, %c0_140], %528 {strides = array<i32>} : memref<64x32xf32, #tpu.memory_space<vmem>>, vector<8x32xf32>,
    %531 = vector.broadcast %285 : vector<8x1xf32> to vector<8x32xf32>
    %532 = arith.mulf %528, %531 : vector<8x32xf32>
    %cst_141 = arith.constant dense<0.000000e+00> : vector<32xf32>
    %533 = vector.multi_reduction <add>, %532, %cst_141 [0] : vector<8x32xf32> to vector<32xf32>
    %534 = vector.shape_cast %533 : vector<32xf32> to vector<1x32xf32>
    %535 = arith.addf %493, %534 : vector<1x32xf32>
    %536 = arith.mulf %532, %528 : vector<8x32xf32>
    %cst_142 = arith.constant dense<0.000000e+00> : vector<32xf32>
    %537 = vector.multi_reduction <add>, %536, %cst_142 [0] : vector<8x32xf32> to vector<32xf32>
    %538 = vector.shape_cast %537 : vector<32xf32> to vector<1x32xf32>
    %539 = arith.addf %497, %538 : vector<1x32xf32>
    %c6_i32_143 = arith.constant 6 : i32
    %c8_i32_144 = arith.constant 8 : i32
    %540 = arith.muli %c6_i32_143, %c8_i32_144 : i32
    %541 = tpu.assume_multiple %540, 8 : i32
    %542 = arith.index_cast %541 : i32 to index
    %c0_145 = arith.constant 0 : index
    %543 = vector.load %arg17[%542, %c0_145] : memref<64x128xf32, #tpu.memory_space<vmem>>, vector<8x128xf32>
    %cst_146 = arith.constant dense<0.000000e+00> : vector<8x128xf32>
    %544 = tpu.matmul %528, %284, %cst_146 {dimension_numbers = #tpu.dot_dimension_numbers<[1], [0], [0], [1], [0, 0, 1, 1], [], []>} : vector<8x32xf32>, vector<32x128xf32>, vector<8x128xf32> -> vector<8x128xf32>
    %545 = arith.addf %543, %544 : vector<8x128xf32>
    %546 = vector.extract_strided_slice %545 {offsets = [0, 0], sizes = [8, 32], strides = [1, 1]} : vector<8x128xf32> to vector<8x32xf32>
    %547 = arith.negf %546 : vector<8x32xf32>
    %548 = math.exp %547 : vector<8x32xf32>
    %cst_147 = arith.constant 1.000000e+00 : f32
    %549 = vector.broadcast %cst_147 : f32 to vector<8x32xf32>
    %550 = arith.addf %549, %548 : vector<8x32xf32>
    %551 = arith.divf %549, %550 : vector<8x32xf32>
    %552 = vector.extract_strided_slice %545 {offsets = [0, 32], sizes = [8, 32], strides = [1, 1]} : vector<8x128xf32> to vector<8x32xf32>
    %553 = arith.negf %552 : vector<8x32xf32>
    %554 = math.exp %553 : vector<8x32xf32>
    %cst_148 = arith.constant 1.000000e+00 : f32
    %555 = vector.broadcast %cst_148 : f32 to vector<8x32xf32>
    %556 = arith.addf %555, %554 : vector<8x32xf32>
    %557 = arith.divf %555, %556 : vector<8x32xf32>
    %558 = vector.extract_strided_slice %545 {offsets = [0, 64], sizes = [8, 32], strides = [1, 1]} : vector<8x128xf32> to vector<8x32xf32>
    %559 = math.tanh %558 : vector<8x32xf32>
    %560 = vector.extract_strided_slice %545 {offsets = [0, 96], sizes = [8, 32], strides = [1, 1]} : vector<8x128xf32> to vector<8x32xf32>
    %561 = arith.negf %560 : vector<8x32xf32>
    %562 = math.exp %561 : vector<8x32xf32>
    %cst_149 = arith.constant 1.000000e+00 : f32
    %563 = vector.broadcast %cst_149 : f32 to vector<8x32xf32>
    %564 = arith.addf %563, %562 : vector<8x32xf32>
    %565 = arith.divf %563, %564 : vector<8x32xf32>
    %566 = arith.mulf %557, %526 : vector<8x32xf32>
    %567 = arith.mulf %551, %559 : vector<8x32xf32>
    %568 = arith.addf %566, %567 : vector<8x32xf32>
    %569 = math.tanh %568 : vector<8x32xf32>
    %570 = arith.mulf %565, %569 : vector<8x32xf32>
    %571 = arith.index_cast %541 : i32 to index
    %c0_150 = arith.constant 0 : index
    %572 = vector.load %arg18[%571, %c0_150] : memref<64x32xf32, #tpu.memory_space<vmem>>, vector<8x32xf32>
    tpu.vector_store %arg18[%571, %c0_150], %570 {strides = array<i32>} : memref<64x32xf32, #tpu.memory_space<vmem>>, vector<8x32xf32>,
    %573 = vector.broadcast %285 : vector<8x1xf32> to vector<8x32xf32>
    %574 = arith.mulf %570, %573 : vector<8x32xf32>
    %cst_151 = arith.constant dense<0.000000e+00> : vector<32xf32>
    %575 = vector.multi_reduction <add>, %574, %cst_151 [0] : vector<8x32xf32> to vector<32xf32>
    %576 = vector.shape_cast %575 : vector<32xf32> to vector<1x32xf32>
    %577 = arith.addf %535, %576 : vector<1x32xf32>
    %578 = arith.mulf %574, %570 : vector<8x32xf32>
    %cst_152 = arith.constant dense<0.000000e+00> : vector<32xf32>
    %579 = vector.multi_reduction <add>, %578, %cst_152 [0] : vector<8x32xf32> to vector<32xf32>
    %580 = vector.shape_cast %579 : vector<32xf32> to vector<1x32xf32>
    %581 = arith.addf %539, %580 : vector<1x32xf32>
    %c7_i32_153 = arith.constant 7 : i32
    %c8_i32_154 = arith.constant 8 : i32
    %582 = arith.muli %c7_i32_153, %c8_i32_154 : i32
    %583 = tpu.assume_multiple %582, 8 : i32
    %584 = arith.index_cast %583 : i32 to index
    %c0_155 = arith.constant 0 : index
    %585 = vector.load %arg17[%584, %c0_155] : memref<64x128xf32, #tpu.memory_space<vmem>>, vector<8x128xf32>
    %cst_156 = arith.constant dense<0.000000e+00> : vector<8x128xf32>
    %586 = tpu.matmul %570, %284, %cst_156 {dimension_numbers = #tpu.dot_dimension_numbers<[1], [0], [0], [1], [0, 0, 1, 1], [], []>} : vector<8x32xf32>, vector<32x128xf32>, vector<8x128xf32> -> vector<8x128xf32>
    %587 = arith.addf %585, %586 : vector<8x128xf32>
    %588 = vector.extract_strided_slice %587 {offsets = [0, 0], sizes = [8, 32], strides = [1, 1]} : vector<8x128xf32> to vector<8x32xf32>
    %589 = arith.negf %588 : vector<8x32xf32>
    %590 = math.exp %589 : vector<8x32xf32>
    %cst_157 = arith.constant 1.000000e+00 : f32
    %591 = vector.broadcast %cst_157 : f32 to vector<8x32xf32>
    %592 = arith.addf %591, %590 : vector<8x32xf32>
    %593 = arith.divf %591, %592 : vector<8x32xf32>
    %594 = vector.extract_strided_slice %587 {offsets = [0, 32], sizes = [8, 32], strides = [1, 1]} : vector<8x128xf32> to vector<8x32xf32>
    %595 = arith.negf %594 : vector<8x32xf32>
    %596 = math.exp %595 : vector<8x32xf32>
    %cst_158 = arith.constant 1.000000e+00 : f32
    %597 = vector.broadcast %cst_158 : f32 to vector<8x32xf32>
    %598 = arith.addf %597, %596 : vector<8x32xf32>
    %599 = arith.divf %597, %598 : vector<8x32xf32>
    %600 = vector.extract_strided_slice %587 {offsets = [0, 64], sizes = [8, 32], strides = [1, 1]} : vector<8x128xf32> to vector<8x32xf32>
    %601 = math.tanh %600 : vector<8x32xf32>
    %602 = vector.extract_strided_slice %587 {offsets = [0, 96], sizes = [8, 32], strides = [1, 1]} : vector<8x128xf32> to vector<8x32xf32>
    %603 = arith.negf %602 : vector<8x32xf32>
    %604 = math.exp %603 : vector<8x32xf32>
    %cst_159 = arith.constant 1.000000e+00 : f32
    %605 = vector.broadcast %cst_159 : f32 to vector<8x32xf32>
    %606 = arith.addf %605, %604 : vector<8x32xf32>
    %607 = arith.divf %605, %606 : vector<8x32xf32>
    %608 = arith.mulf %599, %568 : vector<8x32xf32>
    %609 = arith.mulf %593, %601 : vector<8x32xf32>
    %610 = arith.addf %608, %609 : vector<8x32xf32>
    %611 = math.tanh %610 : vector<8x32xf32>
    %612 = arith.mulf %607, %611 : vector<8x32xf32>
    %613 = arith.index_cast %583 : i32 to index
    %c0_160 = arith.constant 0 : index
    %614 = vector.load %arg18[%613, %c0_160] : memref<64x32xf32, #tpu.memory_space<vmem>>, vector<8x32xf32>
    tpu.vector_store %arg18[%613, %c0_160], %612 {strides = array<i32>} : memref<64x32xf32, #tpu.memory_space<vmem>>, vector<8x32xf32>,
    %615 = vector.broadcast %285 : vector<8x1xf32> to vector<8x32xf32>
    %616 = arith.mulf %612, %615 : vector<8x32xf32>
    %cst_161 = arith.constant dense<0.000000e+00> : vector<32xf32>
    %617 = vector.multi_reduction <add>, %616, %cst_161 [0] : vector<8x32xf32> to vector<32xf32>
    %618 = vector.shape_cast %617 : vector<32xf32> to vector<1x32xf32>
    %619 = arith.addf %577, %618 : vector<1x32xf32>
    %620 = arith.mulf %616, %612 : vector<8x32xf32>
    %cst_162 = arith.constant dense<0.000000e+00> : vector<32xf32>
    %621 = vector.multi_reduction <add>, %620, %cst_162 [0] : vector<8x32xf32> to vector<32xf32>
    %622 = vector.shape_cast %621 : vector<32xf32> to vector<1x32xf32>
    %623 = arith.addf %581, %622 : vector<1x32xf32>
    %c8_i32_163 = arith.constant 8 : i32
    %cst_164 = arith.constant 6.250000e-02 : f32
    %624 = vector.broadcast %cst_164 : f32 to vector<1x32xf32>
    %625 = arith.mulf %619, %624 : vector<1x32xf32>
    %cst_165 = arith.constant 6.250000e-02 : f32
    %626 = vector.broadcast %cst_165 : f32 to vector<1x32xf32>
    %627 = arith.mulf %623, %626 : vector<1x32xf32>
    %628 = arith.mulf %625, %625 : vector<1x32xf32>
    %629 = arith.subf %627, %628 : vector<1x32xf32>
    %cst_166 = arith.constant 9.99999974E-6 : f32
    %630 = vector.broadcast %cst_166 : f32 to vector<1x32xf32>
    %631 = arith.addf %629, %630 : vector<1x32xf32>
    %632 = math.rsqrt %631 : vector<1x32xf32>
    %c0_167 = arith.constant 0 : index
    %c0_168 = arith.constant 0 : index
    %633 = vector.load %arg8[%c0_167, %c0_168] : memref<1x32xf32, #tpu.memory_space<vmem>>, vector<1x32xf32>
    %634 = arith.mulf %632, %633 : vector<1x32xf32>
    %c56 = arith.constant 56 : index
    %c0_169 = arith.constant 0 : index
    %635 = vector.load %arg18[%c56, %c0_169] : memref<64x32xf32, #tpu.memory_space<vmem>>, vector<8x32xf32>
    %636 = vector.broadcast %625 : vector<1x32xf32> to vector<8x32xf32>
    %637 = arith.subf %635, %636 : vector<8x32xf32>
    %638 = vector.broadcast %634 : vector<1x32xf32> to vector<8x32xf32>
    %639 = arith.mulf %637, %638 : vector<8x32xf32>
    %c0_170 = arith.constant 0 : index
    %c0_171 = arith.constant 0 : index
    %640 = vector.load %arg9[%c0_170, %c0_171] : memref<1x32xf32, #tpu.memory_space<vmem>>, vector<1x32xf32>
    %641 = vector.broadcast %640 : vector<1x32xf32> to vector<8x32xf32>
    %642 = arith.addf %639, %641 : vector<8x32xf32>
    %c0_172 = arith.constant 0 : index
    %c0_173 = arith.constant 0 : index
    %643 = vector.load %arg14[%c0_172, %c0_173] : memref<8x32xf32, #tpu.memory_space<vmem>>, vector<8x32xf32>
    %644 = arith.mulf %642, %643 : vector<8x32xf32>
    %c0_174 = arith.constant 0 : index
    %c0_175 = arith.constant 0 : index
    %645 = vector.load %arg10[%c0_174, %c0_175] : memref<32x16xf32, #tpu.memory_space<vmem>>, vector<32x16xf32>
    %cst_176 = arith.constant dense<0.000000e+00> : vector<8x16xf32>
    %646 = tpu.matmul %644, %645, %cst_176 {dimension_numbers = #tpu.dot_dimension_numbers<[1], [0], [0], [1], [0, 0, 1, 1], [], []>} : vector<8x32xf32>, vector<32x16xf32>, vector<8x16xf32> -> vector<8x16xf32>
    %c0_177 = arith.constant 0 : index
    %c0_178 = arith.constant 0 : index
    %647 = vector.load %arg11[%c0_177, %c0_178] : memref<1x16xf32, #tpu.memory_space<vmem>>, vector<1x16xf32>
    %648 = vector.broadcast %647 : vector<1x16xf32> to vector<8x16xf32>
    %649 = arith.addf %646, %648 : vector<8x16xf32>
    %c0_179 = arith.constant 0 : index
    %c0_180 = arith.constant 0 : index
    %650 = vector.load %arg12[%c0_179, %c0_180] : memref<16x2xf32, #tpu.memory_space<vmem>>, vector<16x2xf32>
    %cst_181 = arith.constant dense<0.000000e+00> : vector<8x2xf32>
    %651 = tpu.matmul %649, %650, %cst_181 {dimension_numbers = #tpu.dot_dimension_numbers<[1], [0], [0], [1], [0, 0, 1, 1], [], []>} : vector<8x16xf32>, vector<16x2xf32>, vector<8x2xf32> -> vector<8x2xf32>
    %c0_182 = arith.constant 0 : index
    %c0_183 = arith.constant 0 : index
    %652 = vector.load %arg13[%c0_182, %c0_183] : memref<1x2xf32, #tpu.memory_space<vmem>>, vector<1x2xf32>
    %653 = vector.broadcast %652 : vector<1x2xf32> to vector<8x2xf32>
    %654 = arith.addf %651, %653 : vector<8x2xf32>
    %c0_184 = arith.constant 0 : index
    %c0_185 = arith.constant 0 : index
    %655 = vector.load %arg15[%c0_184, %c0_185] : memref<8x2xf32, #tpu.memory_space<vmem>>, vector<8x2xf32>
    %656 = arith.mulf %654, %655 : vector<8x2xf32>
    %657 = arith.negf %656 : vector<8x2xf32>
    %658 = math.exp %657 : vector<8x2xf32>
    %cst_186 = arith.constant 1.000000e+00 : f32
    %659 = vector.broadcast %cst_186 : f32 to vector<8x2xf32>
    %660 = arith.addf %659, %658 : vector<8x2xf32>
    %661 = arith.divf %659, %660 : vector<8x2xf32>
    %c0_187 = arith.constant 0 : index
    %c0_188 = arith.constant 0 : index
    %662 = vector.load %arg16[%c0_187, %c0_188] : memref<8x2xf32, #tpu.memory_space<vmem>>, vector<8x2xf32>
    tpu.vector_store %arg16[%c0_187, %c0_188], %661 {strides = array<i32>} : memref<8x2xf32, #tpu.memory_space<vmem>>, vector<8x2xf32>,
    return
  }
}

</mosaic_0001>

<llo_original>
// kernel: tpu_custom_call.1
$region0: #{tpu_custom_call.1}
  #allocation0 [shape = 'u32[]', space=smem, size = 0x4, offset = 0x4, fixed_abs, tag = 'smem constant byte address 0x4 - core index']
  #allocation1 [shape = 'u32[144,128]{1,0:T(1,128)}', space=vmem, size = 0x12000, scoped, tag = 'internal scratch']
  #allocation2 [shape = 'f32[64,128]{1,0:T(8,128)}', space=vmem, size = 0x8000, scoped, tag = 'scratch operand']
  #allocation3 [shape = 'f32[64,32]{1,0:T(8,128)}', space=vmem, size = 0x8000, scoped, tag = 'scratch operand']
  %s0 = inlined_call_operand.vmem [shape: f32[64,16], index: 0, kind: input, shape index: {}]
  %s1 = inlined_call_operand.vmem [shape: bf16[16,128], index: 1, kind: input, shape index: {}]
  %s2 = inlined_call_operand.vmem [shape: f32[32,128], index: 2, kind: input, shape index: {}]
  %s3 = inlined_call_operand.vmem [shape: f32[1,128], index: 3, kind: input, shape index: {}]
  %s4 = inlined_call_operand.vmem [shape: bf16[32,128], index: 4, kind: input, shape index: {}]
  %s5 = inlined_call_operand.vmem [shape: f32[32,128], index: 5, kind: input, shape index: {}]
  %s6 = inlined_call_operand.vmem [shape: f32[1,128], index: 6, kind: input, shape index: {}]
  %s7 = inlined_call_operand.vmem [shape: f32[8,1], index: 7, kind: input, shape index: {}]
  %s8 = inlined_call_operand.vmem [shape: f32[1,32], index: 8, kind: input, shape index: {}]
  %s9 = inlined_call_operand.vmem [shape: f32[1,32], index: 9, kind: input, shape index: {}]
  %s10 = inlined_call_operand.vmem [shape: f32[32,16], index: 10, kind: input, shape index: {}]
  %s11 = inlined_call_operand.vmem [shape: f32[1,16], index: 11, kind: input, shape index: {}]
  %s12 = inlined_call_operand.vmem [shape: f32[16,2], index: 12, kind: input, shape index: {}]
  %s13 = inlined_call_operand.vmem [shape: f32[1,2], index: 13, kind: input, shape index: {}]
  %s14 = inlined_call_operand.vmem [shape: f32[8,32], index: 14, kind: input, shape index: {}]
  %s15 = inlined_call_operand.vmem [shape: f32[8,2], index: 15, kind: input, shape index: {}]
  %s16 = inlined_call_operand.vmem [shape: f32[8,2], index: 16, kind: output, shape index: {}]
  %s17 = sld [smem:[#allocation0]]
  $region74: #{tpu_custom_call.1} parent=0
    _
  %s19 = ssub.s32 1, %s17
  %s20 = scalar_select 0, %s19, %s17
  // Predicated region
  $region2: #{tpu_custom_call.1} parent=0 // pred_check
    _
  $region3: #{tpu_custom_call.1} parent=0 // pred_check_branch
    %22 = sbr.rel (0) target = $region5
  $region4: #{tpu_custom_call.1} parent=0 // pred_region
    _
  $region5: #{tpu_custom_call.1} parent=0 // pred_fallthru
    _
  // Predicated region
  $region6: #{tpu_custom_call.1} parent=0 // pred_check
    _
  $region7: #{tpu_custom_call.1} parent=0 // pred_check_branch
    %24 = sbr.rel (0) target = $region9
  $region8: #{tpu_custom_call.1} parent=0 // pred_region
    _
  $region9: #{tpu_custom_call.1} parent=0 // pred_fallthru
    _
  // Predicated region
  $region10: #{tpu_custom_call.1} parent=0 // pred_check
    _
  $region11: #{tpu_custom_call.1} parent=0 // pred_check_branch
    %26 = sbr.rel (0) target = $region13
  $region12: #{tpu_custom_call.1} parent=0 // pred_region
    _
  $region13: #{tpu_custom_call.1} parent=0 // pred_fallthru
    _
  // Predicated region
  $region14: #{tpu_custom_call.1} parent=0 // pred_check
    _
  $region15: #{tpu_custom_call.1} parent=0 // pred_check_branch
    %28 = sbr.rel (0) target = $region17
  $region16: #{tpu_custom_call.1} parent=0 // pred_region
    _
  $region17: #{tpu_custom_call.1} parent=0 // pred_fallthru
    _
  // Predicated region
  $region18: #{tpu_custom_call.1} parent=0 // pred_check
    _
  $region19: #{tpu_custom_call.1} parent=0 // pred_check_branch
    %30 = sbr.rel (0) target = $region21
  $region20: #{tpu_custom_call.1} parent=0 // pred_region
    _
  $region21: #{tpu_custom_call.1} parent=0 // pred_fallthru
    _
  // Predicated region
  $region22: #{tpu_custom_call.1} parent=0 // pred_check
    _
  $region23: #{tpu_custom_call.1} parent=0 // pred_check_branch
    %32 = sbr.rel (0) target = $region25
  $region24: #{tpu_custom_call.1} parent=0 // pred_region
    _
  $region25: #{tpu_custom_call.1} parent=0 // pred_fallthru
    _
  // Predicated region
  $region26: #{tpu_custom_call.1} parent=0 // pred_check
    _
  $region27: #{tpu_custom_call.1} parent=0 // pred_check_branch
    %34 = sbr.rel (0) target = $region29
  $region28: #{tpu_custom_call.1} parent=0 // pred_region
    _
  $region29: #{tpu_custom_call.1} parent=0 // pred_fallthru
    _
  // Predicated region
  $region30: #{tpu_custom_call.1} parent=0 // pred_check
    _
  $region31: #{tpu_custom_call.1} parent=0 // pred_check_branch
    %36 = sbr.rel (0) target = $region33
  $region32: #{tpu_custom_call.1} parent=0 // pred_region
    _
  $region33: #{tpu_custom_call.1} parent=0 // pred_fallthru
    _
  // Predicated region
  $region34: #{tpu_custom_call.1} parent=0 // pred_check
    _
  $region35: #{tpu_custom_call.1} parent=0 // pred_check_branch
    %38 = sbr.rel (0) target = $region37
  $region36: #{tpu_custom_call.1} parent=0 // pred_region
    _
  $region37: #{tpu_custom_call.1} parent=0 // pred_fallthru
    _
  // Predicated region
  $region38: #{tpu_custom_call.1} parent=0 // pred_check
    _
  $region39: #{tpu_custom_call.1} parent=0 // pred_check_branch
    %40 = sbr.rel (0) target = $region41
  $region40: #{tpu_custom_call.1} parent=0 // pred_region
    _
  $region41: #{tpu_custom_call.1} parent=0 // pred_fallthru
    _
  // Predicated region
  $region42: #{tpu_custom_call.1} parent=0 // pred_check
    _
  $region43: #{tpu_custom_call.1} parent=0 // pred_check_branch
    %42 = sbr.rel (0) target = $region45
  $region44: #{tpu_custom_call.1} parent=0 // pred_region
    _
  $region45: #{tpu_custom_call.1} parent=0 // pred_fallthru
    _
  // Predicated region
  $region46: #{tpu_custom_call.1} parent=0 // pred_check
    _
  $region47: #{tpu_custom_call.1} parent=0 // pred_check_branch
    %44 = sbr.rel (0) target = $region49
  $region48: #{tpu_custom_call.1} parent=0 // pred_region
    _
  $region49: #{tpu_custom_call.1} parent=0 // pred_fallthru
    _
  // Predicated region
  $region50: #{tpu_custom_call.1} parent=0 // pred_check
    _
  $region51: #{tpu_custom_call.1} parent=0 // pred_check_branch
    %46 = sbr.rel (0) target = $region53
  $region52: #{tpu_custom_call.1} parent=0 // pred_region
    _
  $region53: #{tpu_custom_call.1} parent=0 // pred_fallthru
    _
  // Predicated region
  $region54: #{tpu_custom_call.1} parent=0 // pred_check
    _
  $region55: #{tpu_custom_call.1} parent=0 // pred_check_branch
    %48 = sbr.rel (0) target = $region57
  $region56: #{tpu_custom_call.1} parent=0 // pred_region
    _
  $region57: #{tpu_custom_call.1} parent=0 // pred_fallthru
    _
  // Predicated region
  $region58: #{tpu_custom_call.1} parent=0 // pred_check
    _
  $region59: #{tpu_custom_call.1} parent=0 // pred_check_branch
    %50 = sbr.rel (0) target = $region61
  $region60: #{tpu_custom_call.1} parent=0 // pred_region
    _
  $region61: #{tpu_custom_call.1} parent=0 // pred_fallthru
    _
  // Predicated region
  $region62: #{tpu_custom_call.1} parent=0 // pred_check
    _
  $region63: #{tpu_custom_call.1} parent=0 // pred_check_branch
    %52 = sbr.rel (0) target = $region65
  $region64: #{tpu_custom_call.1} parent=0 // pred_region
    _
  $region65: #{tpu_custom_call.1} parent=0 // pred_fallthru
    _
  %v54 = vld [vmem:[%s0] sm:$0xff]
  %v55 = vld [vmem:[%s0 + $0x8] sm:$0xff]
  %v56 = vld [vmem:[%s0 + $0x10] sm:$0xff]
  %v57 = vld [vmem:[%s0 + $0x18] sm:$0xff]
  %v58 = vld [vmem:[%s0 + $0x20] sm:$0xff]
  %v59 = vld [vmem:[%s0 + $0x28] sm:$0xff]
  %v60 = vld [vmem:[%s0 + $0x30] sm:$0xff]
  %v61 = vld [vmem:[%s0 + $0x38] sm:$0xff]
  %v62 = vpack.c.bf16 %v55, %v54
  %v63 = vpack.c.bf16 %v57, %v56
  %v64 = vpack.c.bf16 %v59, %v58
  %v65 = vpack.c.bf16 %v61, %v60
  %v66 = vld [vmem:[%s1] sm:$0xf]
  %v67 = vld [vmem:[%s1 + $0x4] sm:$0xf]
  %v68 = vld [vmem:[%s3] sm:$0x1]
  %v70 = vlaneseq
  %v71 = vshrl.u32 %v70, 7
  %v72 = vsub.s32 0, %v71
  %v73 = vrot.slane %v68, %v72
  %v77 = vunpack.c.l.b16 %v66
  %v78 = vunpack.c.l.b16 %v67
  %v79 = vpack.c.b16 %v78, %v77
  %vm81 = vcmask 130048
  %v83 = vsel %vm81, %v62, 0
  %v86 = vsel %vm81, %v63, 0
  %v89 = vsel %vm81, %v64, 0
  %v92 = vsel %vm81, %v65, 0
  %94 = vmatprep.subr.bf16.mxu0 0
  %95 = vmatpush1.bf16.msra.mxu0 %v79
  %96 = vmatprep.subr.bf16.mxu0 0
  %97 = vmatpush1.bf16.msra.mxu0 0
  %98 = vmatprep.subr.bf16.mxu0 0
  %99 = vmatpush1.bf16.msra.mxu0 0
  %100 = vmatprep.subr.bf16.mxu0 0
  %101 = vmatpush1.bf16.msra.mxu0 0
  %102 = vmatprep.subr.bf16.mxu0 0
  %103 = vmatpush1.bf16.msra.mxu0 0
  %104 = vmatprep.subr.bf16.mxu0 0
  %105 = vmatpush1.bf16.msra.mxu0 0
  %106 = vmatprep.subr.bf16.mxu0 0
  %107 = vmatpush1.bf16.msra.mxu0 0
  %108 = vmatprep.subr.bf16.mxu0 0
  %109 = vmatpush1.bf16.msra.mxu0 0
  %110 = vmatprep.subr.bf16.mxu0 0
  %111 = vmatpush1.bf16.msra.mxu0 0
  %112 = vmatprep.subr.bf16.mxu0 0
  %113 = vmatpush1.bf16.msra.mxu0 0
  %114 = vmatprep.subr.bf16.mxu0 0
  %115 = vmatpush1.bf16.msra.mxu0 0
  %116 = vmatprep.subr.bf16.mxu0 0
  %117 = vmatpush1.bf16.msra.mxu0 0
  %118 = vmatprep.subr.bf16.mxu0 0
  %119 = vmatpush1.bf16.msra.mxu0 0
  %120 = vmatprep.subr.bf16.mxu0 0
  %121 = vmatpush1.bf16.msra.mxu0 0
  %122 = vmatprep.subr.bf16.mxu0 0
  %123 = vmatpush1.bf16.msra.mxu0 0
  %124 = vmatprep.subr.bf16.mxu0 0
  %125 = vmatpush1.bf16.msra.mxu0 0
  %126 = vmatprep.mubr.bf16.mxu0 0
  %127 = vmatmul.mubr.bf16.gmra.mrb[0].mxu0 %v83
  %v128 = vpop.f32.mrb[0].mxu0
  %v129 = vadd.f32 %v73, %v128
  %v130 = vpop.f32.mrb[0].mxu0
  %v131 = vpop.f32.mrb[0].mxu0
  %v132 = vadd.f32 %v73, %v131
  %v133 = vpop.f32.mrb[0].mxu0
  %134 = vmatprep.mubr.bf16.mxu0 0
  %135 = vmatmul.mubr.bf16.gmra.mrb[0].mxu0 %v86
  %v136 = vpop.f32.mrb[0].mxu0
  %v137 = vadd.f32 %v73, %v136
  %v138 = vpop.f32.mrb[0].mxu0
  %v139 = vpop.f32.mrb[0].mxu0
  %v140 = vadd.f32 %v73, %v139
  %v141 = vpop.f32.mrb[0].mxu0
  %142 = vmatprep.mubr.bf16.mxu0 0
  %143 = vmatmul.mubr.bf16.gmra.mrb[0].mxu0 %v89
  %v144 = vpop.f32.mrb[0].mxu0
  %v145 = vadd.f32 %v73, %v144
  %v146 = vpop.f32.mrb[0].mxu0
  %v147 = vpop.f32.mrb[0].mxu0
  %v148 = vadd.f32 %v73, %v147
  %v149 = vpop.f32.mrb[0].mxu0
  %150 = vmatprep.mubr.bf16.mxu0 0
  %151 = vmatmul.mubr.bf16.gmra.mrb[0].mxu0 %v92
  %v152 = vpop.f32.mrb[0].mxu0
  %v153 = vadd.f32 %v73, %v152
  %v154 = vpop.f32.mrb[0].mxu0
  %v155 = vpop.f32.mrb[0].mxu0
  %v156 = vadd.f32 %v73, %v155
  %v157 = vpop.f32.mrb[0].mxu0
  %158 = vdwg.mxu0
  %159 = vst [vmem:[#allocation2] sm:$0xff] %v129
  %160 = vst [vmem:[#allocation2 + $0x8] sm:$0xff] %v132
  %161 = vst [vmem:[#allocation2 + $0x10] sm:$0xff] %v137
  %162 = vst [vmem:[#allocation2 + $0x18] sm:$0xff] %v140
  %163 = vst [vmem:[#allocation2 + $0x20] sm:$0xff] %v145
  %164 = vst [vmem:[#allocation2 + $0x28] sm:$0xff] %v148
  %165 = vst [vmem:[#allocation2 + $0x30] sm:$0xff] %v153
  %166 = vst [vmem:[#allocation2 + $0x38] sm:$0xff] %v156
  %v167 = vld [vmem:[%s2] sm:$0xff]
  %v168 = vld [vmem:[%s2 + $0x8] sm:$0xff]
  %v169 = vld [vmem:[%s2 + $0x10] sm:$0xff]
  %v170 = vld [vmem:[%s2 + $0x18] sm:$0xff]
  %v171 = vld [vmem:[#allocation2] sm:$0xff]
  %vm172 = vcmask 261120
  %v174 = vsel %vm172, 0.0, 0
  %176 = vmatprep.subr.mxu0 0.0
  %177 = vmatpush1.msra.mxu0 %v167
  %178 = vmatprep.subr.mxu0 0.0
  %179 = vmatpush1.msra.mxu0 %v168
  %180 = vmatprep.subr.mxu0 0.0
  %181 = vmatpush1.msra.mxu0 %v169
  %182 = vmatprep.subr.mxu0 0.0
  %183 = vmatpush1.msra.mxu0 %v170
  %184 = vmatprep.subr.mxu0 0.0
  %185 = vmatpush1.msra.mxu0 0.0
  %186 = vmatprep.subr.mxu0 0.0
  %187 = vmatpush1.msra.mxu0 0.0
  %188 = vmatprep.subr.mxu0 0.0
  %189 = vmatpush1.msra.mxu0 0.0
  %190 = vmatprep.subr.mxu0 0.0
  %191 = vmatpush1.msra.mxu0 0.0
  %192 = vmatprep.subr.mxu0 0.0
  %193 = vmatpush1.msra.mxu0 0.0
  %194 = vmatprep.subr.mxu0 0.0
  %195 = vmatpush1.msra.mxu0 0.0
  %196 = vmatprep.subr.mxu0 0.0
  %197 = vmatpush1.msra.mxu0 0.0
  %198 = vmatprep.subr.mxu0 0.0
  %199 = vmatpush1.msra.mxu0 0.0
  %200 = vmatprep.subr.mxu0 0.0
  %201 = vmatpush1.msra.mxu0 0.0
  %202 = vmatprep.subr.mxu0 0.0
  %203 = vmatpush1.msra.mxu0 0.0
  %204 = vmatprep.subr.mxu0 0.0
  %205 = vmatpush1.msra.mxu0 0.0
  %206 = vmatprep.subr.mxu0 0.0
  %207 = vmatpush1.msra.mxu0 0.0
  %208 = vmatprep.subr.mxu0 0.0
  %209 = vmatpush1.msra.mxu0 0.0
  %210 = vmatprep.subr.mxu0 0.0
  %211 = vmatpush1.msra.mxu0 0.0
  %212 = vmatprep.subr.mxu0 0.0
  %213 = vmatpush1.msra.mxu0 0.0
  %214 = vmatprep.subr.mxu0 0.0
  %215 = vmatpush1.msra.mxu0 0.0
  %216 = vmatprep.subr.mxu0 0.0
  %217 = vmatpush1.msra.mxu0 0.0
  %218 = vmatprep.subr.mxu0 0.0
  %219 = vmatpush1.msra.mxu0 0.0
  %220 = vmatprep.subr.mxu0 0.0
  %221 = vmatpush1.msra.mxu0 0.0
  %222 = vmatprep.subr.mxu0 0.0
  %223 = vmatpush1.msra.mxu0 0.0
  %224 = vmatprep.subr.mxu0 0.0
  %225 = vmatpush1.msra.mxu0 0.0
  %226 = vmatprep.subr.mxu0 0.0
  %227 = vmatpush1.msra.mxu0 0.0
  %228 = vmatprep.subr.mxu0 0.0
  %229 = vmatpush1.msra.mxu0 0.0
  %230 = vmatprep.subr.mxu0 0.0
  %231 = vmatpush1.msra.mxu0 0.0
  %232 = vmatprep.subr.mxu0 0.0
  %233 = vmatpush1.msra.mxu0 0.0
  %234 = vmatprep.subr.mxu0 0.0
  %235 = vmatpush1.msra.mxu0 0.0
  %236 = vmatprep.subr.mxu0 0.0
  %237 = vmatpush1.msra.mxu0 0.0
  %238 = vmatprep.subr.mxu0 0.0
  %239 = vmatpush1.msra.mxu0 0.0
  %240 = vmatprep.mubr.f32.mxu0 0.0
  %241 = vmatmul.mubr.f32.gmra.mrb[0].mxu0 %v174
  %v242 = vpop.f32.mrb[0].mxu0
  %v243 = vadd.f32 0.0, %v242
  %v244 = vpop.f32.mrb[0].mxu0
  %245 = vdwg.mxu0
  %v246 = vadd.f32 %v171, %v243
  %v247 = vxor.u32 %v246, 2147483648
  %v248 = vmul.f32 %v247, 1.442695
  %v249 = vpow.pop %v248
  %v250 = vadd.f32 %v249, 1.0
  %v251 = vrcp.pop %v250
  %v252 = vmul.f32 1.0, %v251
  %v253 = vtanh.pop %v246
  %v254 = vmul.f32 %v252, 0.0
  %256 = vrot.lane.b32.xlu0 %v253, 64
  %v257 = vpop.permute.xlu0 %256
  %v259 = vmul.f32 %v252, %v257
  %261 = vrot.lane.b32.xlu0 %v259, 32
  %v262 = vpop.permute.xlu0 %261
  %v264 = vadd.f32 %v254, %v262
  %v265 = vtanh.pop %v264
  %267 = vrot.lane.b32.xlu0 %v265, 64
  %v268 = vpop.permute.xlu0 %267
  %v270 = vmul.f32 %v252, %v268
  %272 = vrot.lane.b32.xlu0 %v270, 32
  %v273 = vpop.permute.xlu0 %272
  %275 = vst.msk [vmem:[#allocation3] sm:$0xff] %vm172, %v273
  %s276 = scalar_lea.vmem [#allocation2], 8
  %v277 = vld [vmem:[%s276] sm:$0xff]
  %v278 = vsel %vm172, %v273, 0
  %280 = vmatprep.subr.mxu0 0.0
  %281 = vmatpush1.msra.mxu0 %v167
  %282 = vmatprep.subr.mxu0 0.0
  %283 = vmatpush1.msra.mxu0 %v168
  %284 = vmatprep.subr.mxu0 0.0
  %285 = vmatpush1.msra.mxu0 %v169
  %286 = vmatprep.subr.mxu0 0.0
  %287 = vmatpush1.msra.mxu0 %v170
  %288 = vmatprep.subr.mxu0 0.0
  %289 = vmatpush1.msra.mxu0 0.0
  %290 = vmatprep.subr.mxu0 0.0
  %291 = vmatpush1.msra.mxu0 0.0
  %292 = vmatprep.subr.mxu0 0.0
  %293 = vmatpush1.msra.mxu0 0.0
  %294 = vmatprep.subr.mxu0 0.0
  %295 = vmatpush1.msra.mxu0 0.0
  %296 = vmatprep.subr.mxu0 0.0
  %297 = vmatpush1.msra.mxu0 0.0
  %298 = vmatprep.subr.mxu0 0.0
  %299 = vmatpush1.msra.mxu0 0.0
  %300 = vmatprep.subr.mxu0 0.0
  %301 = vmatpush1.msra.mxu0 0.0
  %302 = vmatprep.subr.mxu0 0.0
  %303 = vmatpush1.msra.mxu0 0.0
  %304 = vmatprep.subr.mxu0 0.0
  %305 = vmatpush1.msra.mxu0 0.0
  %306 = vmatprep.subr.mxu0 0.0
  %307 = vmatpush1.msra.mxu0 0.0
  %308 = vmatprep.subr.mxu0 0.0
  %309 = vmatpush1.msra.mxu0 0.0
  %310 = vmatprep.subr.mxu0 0.0
  %311 = vmatpush1.msra.mxu0 0.0
  %312 = vmatprep.subr.mxu0 0.0
  %313 = vmatpush1.msra.mxu0 0.0
  %314 = vmatprep.subr.mxu0 0.0
  %315 = vmatpush1.msra.mxu0 0.0
  %316 = vmatprep.subr.mxu0 0.0
  %317 = vmatpush1.msra.mxu0 0.0
  %318 = vmatprep.subr.mxu0 0.0
  %319 = vmatpush1.msra.mxu0 0.0
  %320 = vmatprep.subr.mxu0 0.0
  %321 = vmatpush1.msra.mxu0 0.0
  %322 = vmatprep.subr.mxu0 0.0
  %323 = vmatpush1.msra.mxu0 0.0
  %324 = vmatprep.subr.mxu0 0.0
  %325 = vmatpush1.msra.mxu0 0.0
  %326 = vmatprep.subr.mxu0 0.0
  %327 = vmatpush1.msra.mxu0 0.0
  %328 = vmatprep.subr.mxu0 0.0
  %329 = vmatpush1.msra.mxu0 0.0
  %330 = vmatprep.subr.mxu0 0.0
  %331 = vmatpush1.msra.mxu0 0.0
  %332 = vmatprep.subr.mxu0 0.0
  %333 = vmatpush1.msra.mxu0 0.0
  %334 = vmatprep.subr.mxu0 0.0
  %335 = vmatpush1.msra.mxu0 0.0
  %336 = vmatprep.subr.mxu0 0.0
  %337 = vmatpush1.msra.mxu0 0.0
  %338 = vmatprep.subr.mxu0 0.0
  %339 = vmatpush1.msra.mxu0 0.0
  %340 = vmatprep.subr.mxu0 0.0
  %341 = vmatpush1.msra.mxu0 0.0
  %342 = vmatprep.subr.mxu0 0.0
  %343 = vmatpush1.msra.mxu0 0.0
  %344 = vmatprep.mubr.f32.mxu0 0.0
  %345 = vmatmul.mubr.f32.gmra.mrb[0].mxu0 %v278
  %v346 = vpop.f32.mrb[0].mxu0
  %v347 = vadd.f32 0.0, %v346
  %v348 = vpop.f32.mrb[0].mxu0
  %349 = vdwg.mxu0
  %v350 = vadd.f32 %v277, %v347
  %v351 = vxor.u32 %v350, 2147483648
  %v352 = vmul.f32 %v351, 1.442695
  %v353 = vpow.pop %v352
  %v354 = vadd.f32 %v353, 1.0
  %v355 = vrcp.pop %v354
  %v356 = vmul.f32 1.0, %v355
  %v357 = vtanh.pop %v350
  %v358 = vmul.f32 %v356, %v264
  %360 = vrot.lane.b32.xlu0 %v357, 64
  %v361 = vpop.permute.xlu0 %360
  %v363 = vmul.f32 %v356, %v361
  %365 = vrot.lane.b32.xlu0 %v363, 32
  %v366 = vpop.permute.xlu0 %365
  %v368 = vadd.f32 %v358, %v366
  %v369 = vtanh.pop %v368
  %371 = vrot.lane.b32.xlu0 %v369, 64
  %v372 = vpop.permute.xlu0 %371
  %v374 = vmul.f32 %v356, %v372
  %376 = vrot.lane.b32.xlu0 %v374, 32
  %v377 = vpop.permute.xlu0 %376
  %s379 = scalar_lea.vmem [#allocation3], 8
  %380 = vst.msk [vmem:[%s379] sm:$0xff] %vm172, %v377
  %s381 = scalar_lea.vmem [#allocation2], 16
  %v382 = vld [vmem:[%s381] sm:$0xff]
  %v383 = vsel %vm172, %v377, 0
  %385 = vmatprep.subr.mxu0 0.0
  %386 = vmatpush1.msra.mxu0 %v167
  %387 = vmatprep.subr.mxu0 0.0
  %388 = vmatpush1.msra.mxu0 %v168
  %389 = vmatprep.subr.mxu0 0.0
  %390 = vmatpush1.msra.mxu0 %v169
  %391 = vmatprep.subr.mxu0 0.0
  %392 = vmatpush1.msra.mxu0 %v170
  %393 = vmatprep.subr.mxu0 0.0
  %394 = vmatpush1.msra.mxu0 0.0
  %395 = vmatprep.subr.mxu0 0.0
  %396 = vmatpush1.msra.mxu0 0.0
  %397 = vmatprep.subr.mxu0 0.0
  %398 = vmatpush1.msra.mxu0 0.0
  %399 = vmatprep.subr.mxu0 0.0
  %400 = vmatpush1.msra.mxu0 0.0
  %401 = vmatprep.subr.mxu0 0.0
  %402 = vmatpush1.msra.mxu0 0.0
  %403 = vmatprep.subr.mxu0 0.0
  %404 = vmatpush1.msra.mxu0 0.0
  %405 = vmatprep.subr.mxu0 0.0
  %406 = vmatpush1.msra.mxu0 0.0
  %407 = vmatprep.subr.mxu0 0.0
  %408 = vmatpush1.msra.mxu0 0.0
  %409 = vmatprep.subr.mxu0 0.0
  %410 = vmatpush1.msra.mxu0 0.0
  %411 = vmatprep.subr.mxu0 0.0
  %412 = vmatpush1.msra.mxu0 0.0
  %413 = vmatprep.subr.mxu0 0.0
  %414 = vmatpush1.msra.mxu0 0.0
  %415 = vmatprep.subr.mxu0 0.0
  %416 = vmatpush1.msra.mxu0 0.0
  %417 = vmatprep.subr.mxu0 0.0
  %418 = vmatpush1.msra.mxu0 0.0
  %419 = vmatprep.subr.mxu0 0.0
  %420 = vmatpush1.msra.mxu0 0.0
  %421 = vmatprep.subr.mxu0 0.0
  %422 = vmatpush1.msra.mxu0 0.0
  %423 = vmatprep.subr.mxu0 0.0
  %424 = vmatpush1.msra.mxu0 0.0
  %425 = vmatprep.subr.mxu0 0.0
  %426 = vmatpush1.msra.mxu0 0.0
  %427 = vmatprep.subr.mxu0 0.0
  %428 = vmatpush1.msra.mxu0 0.0
  %429 = vmatprep.subr.mxu0 0.0
  %430 = vmatpush1.msra.mxu0 0.0
  %431 = vmatprep.subr.mxu0 0.0
  %432 = vmatpush1.msra.mxu0 0.0
  %433 = vmatprep.subr.mxu0 0.0
  %434 = vmatpush1.msra.mxu0 0.0
  %435 = vmatprep.subr.mxu0 0.0
  %436 = vmatpush1.msra.mxu0 0.0
  %437 = vmatprep.subr.mxu0 0.0
  %438 = vmatpush1.msra.mxu0 0.0
  %439 = vmatprep.subr.mxu0 0.0
  %440 = vmatpush1.msra.mxu0 0.0
  %441 = vmatprep.subr.mxu0 0.0
  %442 = vmatpush1.msra.mxu0 0.0
  %443 = vmatprep.subr.mxu0 0.0
  %444 = vmatpush1.msra.mxu0 0.0
  %445 = vmatprep.subr.mxu0 0.0
  %446 = vmatpush1.msra.mxu0 0.0
  %447 = vmatprep.subr.mxu0 0.0
  %448 = vmatpush1.msra.mxu0 0.0
  %449 = vmatprep.mubr.f32.mxu0 0.0
  %450 = vmatmul.mubr.f32.gmra.mrb[0].mxu0 %v383
  %v451 = vpop.f32.mrb[0].mxu0
  %v452 = vadd.f32 0.0, %v451
  %v453 = vpop.f32.mrb[0].mxu0
  %454 = vdwg.mxu0
  %v455 = vadd.f32 %v382, %v452
  %v456 = vxor.u32 %v455, 2147483648
  %v457 = vmul.f32 %v456, 1.442695
  %v458 = vpow.pop %v457
  %v459 = vadd.f32 %v458, 1.0
  %v460 = vrcp.pop %v459
  %v461 = vmul.f32 1.0, %v460
  %v462 = vtanh.pop %v455
  %v463 = vmul.f32 %v461, %v368
  %465 = vrot.lane.b32.xlu0 %v462, 64
  %v466 = vpop.permute.xlu0 %465
  %v468 = vmul.f32 %v461, %v466
  %470 = vrot.lane.b32.xlu0 %v468, 32
  %v471 = vpop.permute.xlu0 %470
  %v473 = vadd.f32 %v463, %v471
  %v474 = vtanh.pop %v473
  %476 = vrot.lane.b32.xlu0 %v474, 64
  %v477 = vpop.permute.xlu0 %476
  %v479 = vmul.f32 %v461, %v477
  %481 = vrot.lane.b32.xlu0 %v479, 32
  %v482 = vpop.permute.xlu0 %481
  %s484 = scalar_lea.vmem [#allocation3], 16
  %485 = vst.msk [vmem:[%s484] sm:$0xff] %vm172, %v482
  %s486 = scalar_lea.vmem [#allocation2], 24
  %v487 = vld [vmem:[%s486] sm:$0xff]
  %v488 = vsel %vm172, %v482, 0
  %490 = vmatprep.subr.mxu0 0.0
  %491 = vmatpush1.msra.mxu0 %v167
  %492 = vmatprep.subr.mxu0 0.0
  %493 = vmatpush1.msra.mxu0 %v168
  %494 = vmatprep.subr.mxu0 0.0
  %495 = vmatpush1.msra.mxu0 %v169
  %496 = vmatprep.subr.mxu0 0.0
  %497 = vmatpush1.msra.mxu0 %v170
  %498 = vmatprep.subr.mxu0 0.0
  %499 = vmatpush1.msra.mxu0 0.0
  %500 = vmatprep.subr.mxu0 0.0
  %501 = vmatpush1.msra.mxu0 0.0
  %502 = vmatprep.subr.mxu0 0.0
  %503 = vmatpush1.msra.mxu0 0.0
  %504 = vmatprep.subr.mxu0 0.0
  %505 = vmatpush1.msra.mxu0 0.0
  %506 = vmatprep.subr.mxu0 0.0
  %507 = vmatpush1.msra.mxu0 0.0
  %508 = vmatprep.subr.mxu0 0.0
  %509 = vmatpush1.msra.mxu0 0.0
  %510 = vmatprep.subr.mxu0 0.0
  %511 = vmatpush1.msra.mxu0 0.0
  %512 = vmatprep.subr.mxu0 0.0
  %513 = vmatpush1.msra.mxu0 0.0
  %514 = vmatprep.subr.mxu0 0.0
  %515 = vmatpush1.msra.mxu0 0.0
  %516 = vmatprep.subr.mxu0 0.0
  %517 = vmatpush1.msra.mxu0 0.0
  %518 = vmatprep.subr.mxu0 0.0
  %519 = vmatpush1.msra.mxu0 0.0
  %520 = vmatprep.subr.mxu0 0.0
  %521 = vmatpush1.msra.mxu0 0.0
  %522 = vmatprep.subr.mxu0 0.0
  %523 = vmatpush1.msra.mxu0 0.0
  %524 = vmatprep.subr.mxu0 0.0
  %525 = vmatpush1.msra.mxu0 0.0
  %526 = vmatprep.subr.mxu0 0.0
  %527 = vmatpush1.msra.mxu0 0.0
  %528 = vmatprep.subr.mxu0 0.0
  %529 = vmatpush1.msra.mxu0 0.0
  %530 = vmatprep.subr.mxu0 0.0
  %531 = vmatpush1.msra.mxu0 0.0
  %532 = vmatprep.subr.mxu0 0.0
  %533 = vmatpush1.msra.mxu0 0.0
  %534 = vmatprep.subr.mxu0 0.0
  %535 = vmatpush1.msra.mxu0 0.0
  %536 = vmatprep.subr.mxu0 0.0
  %537 = vmatpush1.msra.mxu0 0.0
  %538 = vmatprep.subr.mxu0 0.0
  %539 = vmatpush1.msra.mxu0 0.0
  %540 = vmatprep.subr.mxu0 0.0
  %541 = vmatpush1.msra.mxu0 0.0
  %542 = vmatprep.subr.mxu0 0.0
  %543 = vmatpush1.msra.mxu0 0.0
  %544 = vmatprep.subr.mxu0 0.0
  %545 = vmatpush1.msra.mxu0 0.0
  %546 = vmatprep.subr.mxu0 0.0
  %547 = vmatpush1.msra.mxu0 0.0
  %548 = vmatprep.subr.mxu0 0.0
  %549 = vmatpush1.msra.mxu0 0.0
  %550 = vmatprep.subr.mxu0 0.0
  %551 = vmatpush1.msra.mxu0 0.0
  %552 = vmatprep.subr.mxu0 0.0
  %553 = vmatpush1.msra.mxu0 0.0
  %554 = vmatprep.mubr.f32.mxu0 0.0
  %555 = vmatmul.mubr.f32.gmra.mrb[0].mxu0 %v488
  %v556 = vpop.f32.mrb[0].mxu0
  %v557 = vadd.f32 0.0, %v556
  %v558 = vpop.f32.mrb[0].mxu0
  %559 = vdwg.mxu0
  %v560 = vadd.f32 %v487, %v557
  %v561 = vxor.u32 %v560, 2147483648
  %v562 = vmul.f32 %v561, 1.442695
  %v563 = vpow.pop %v562
  %v564 = vadd.f32 %v563, 1.0
  %v565 = vrcp.pop %v564
  %v566 = vmul.f32 1.0, %v565
  %v567 = vtanh.pop %v560
  %v568 = vmul.f32 %v566, %v473
  %570 = vrot.lane.b32.xlu0 %v567, 64
  %v571 = vpop.permute.xlu0 %570
  %v573 = vmul.f32 %v566, %v571
  %575 = vrot.lane.b32.xlu0 %v573, 32
  %v576 = vpop.permute.xlu0 %575
  %v578 = vadd.f32 %v568, %v576
  %v579 = vtanh.pop %v578
  %581 = vrot.lane.b32.xlu0 %v579, 64
  %v582 = vpop.permute.xlu0 %581
  %v584 = vmul.f32 %v566, %v582
  %586 = vrot.lane.b32.xlu0 %v584, 32
  %v587 = vpop.permute.xlu0 %586
  %s589 = scalar_lea.vmem [#allocation3], 24
  %590 = vst.msk [vmem:[%s589] sm:$0xff] %vm172, %v587
  %s591 = scalar_lea.vmem [#allocation2], 32
  %v592 = vld [vmem:[%s591] sm:$0xff]
  %v593 = vsel %vm172, %v587, 0
  %595 = vmatprep.subr.mxu0 0.0
  %596 = vmatpush1.msra.mxu0 %v167
  %597 = vmatprep.subr.mxu0 0.0
  %598 = vmatpush1.msra.mxu0 %v168
  %599 = vmatprep.subr.mxu0 0.0
  %600 = vmatpush1.msra.mxu0 %v169
  %601 = vmatprep.subr.mxu0 0.0
  %602 = vmatpush1.msra.mxu0 %v170
  %603 = vmatprep.subr.mxu0 0.0
  %604 = vmatpush1.msra.mxu0 0.0
  %605 = vmatprep.subr.mxu0 0.0
  %606 = vmatpush1.msra.mxu0 0.0
  %607 = vmatprep.subr.mxu0 0.0
  %608 = vmatpush1.msra.mxu0 0.0
  %609 = vmatprep.subr.mxu0 0.0
  %610 = vmatpush1.msra.mxu0 0.0
  %611 = vmatprep.subr.mxu0 0.0
  %612 = vmatpush1.msra.mxu0 0.0
  %613 = vmatprep.subr.mxu0 0.0
  %614 = vmatpush1.msra.mxu0 0.0
  %615 = vmatprep.subr.mxu0 0.0
  %616 = vmatpush1.msra.mxu0 0.0
  %617 = vmatprep.subr.mxu0 0.0
  %618 = vmatpush1.msra.mxu0 0.0
  %619 = vmatprep.subr.mxu0 0.0
  %620 = vmatpush1.msra.mxu0 0.0
  %621 = vmatprep.subr.mxu0 0.0
  %622 = vmatpush1.msra.mxu0 0.0
  %623 = vmatprep.subr.mxu0 0.0
  %624 = vmatpush1.msra.mxu0 0.0
  %625 = vmatprep.subr.mxu0 0.0
  %626 = vmatpush1.msra.mxu0 0.0
  %627 = vmatprep.subr.mxu0 0.0
  %628 = vmatpush1.msra.mxu0 0.0
  %629 = vmatprep.subr.mxu0 0.0
  %630 = vmatpush1.msra.mxu0 0.0
  %631 = vmatprep.subr.mxu0 0.0
  %632 = vmatpush1.msra.mxu0 0.0
  %633 = vmatprep.subr.mxu0 0.0
  %634 = vmatpush1.msra.mxu0 0.0
  %635 = vmatprep.subr.mxu0 0.0
  %636 = vmatpush1.msra.mxu0 0.0
  %637 = vmatprep.subr.mxu0 0.0
  %638 = vmatpush1.msra.mxu0 0.0
  %639 = vmatprep.subr.mxu0 0.0
  %640 = vmatpush1.msra.mxu0 0.0
  %641 = vmatprep.subr.mxu0 0.0
  %642 = vmatpush1.msra.mxu0 0.0
  %643 = vmatprep.subr.mxu0 0.0
  %644 = vmatpush1.msra.mxu0 0.0
  %645 = vmatprep.subr.mxu0 0.0
  %646 = vmatpush1.msra.mxu0 0.0
  %647 = vmatprep.subr.mxu0 0.0
  %648 = vmatpush1.msra.mxu0 0.0
  %649 = vmatprep.subr.mxu0 0.0
  %650 = vmatpush1.msra.mxu0 0.0
  %651 = vmatprep.subr.mxu0 0.0
  %652 = vmatpush1.msra.mxu0 0.0
  %653 = vmatprep.subr.mxu0 0.0
  %654 = vmatpush1.msra.mxu0 0.0
  %655 = vmatprep.subr.mxu0 0.0
  %656 = vmatpush1.msra.mxu0 0.0
  %657 = vmatprep.subr.mxu0 0.0
  %658 = vmatpush1.msra.mxu0 0.0
  %659 = vmatprep.mubr.f32.mxu0 0.0
  %660 = vmatmul.mubr.f32.gmra.mrb[0].mxu0 %v593
  %v661 = vpop.f32.mrb[0].mxu0
  %v662 = vadd.f32 0.0, %v661
  %v663 = vpop.f32.mrb[0].mxu0
  %664 = vdwg.mxu0
  %v665 = vadd.f32 %v592, %v662
  %v666 = vxor.u32 %v665, 2147483648
  %v667 = vmul.f32 %v666, 1.442695
  %v668 = vpow.pop %v667
  %v669 = vadd.f32 %v668, 1.0
  %v670 = vrcp.pop %v669
  %v671 = vmul.f32 1.0, %v670
  %v672 = vtanh.pop %v665
  %v673 = vmul.f32 %v671, %v578
  %675 = vrot.lane.b32.xlu0 %v672, 64
  %v676 = vpop.permute.xlu0 %675
  %v678 = vmul.f32 %v671, %v676
  %680 = vrot.lane.b32.xlu0 %v678, 32
  %v681 = vpop.permute.xlu0 %680
  %v683 = vadd.f32 %v673, %v681
  %v684 = vtanh.pop %v683
  %686 = vrot.lane.b32.xlu0 %v684, 64
  %v687 = vpop.permute.xlu0 %686
  %v689 = vmul.f32 %v671, %v687
  %691 = vrot.lane.b32.xlu0 %v689, 32
  %v692 = vpop.permute.xlu0 %691
  %s694 = scalar_lea.vmem [#allocation3], 32
  %695 = vst.msk [vmem:[%s694] sm:$0xff] %vm172, %v692
  %s696 = scalar_lea.vmem [#allocation2], 40
  %v697 = vld [vmem:[%s696] sm:$0xff]
  %v698 = vsel %vm172, %v692, 0
  %700 = vmatprep.subr.mxu0 0.0
  %701 = vmatpush1.msra.mxu0 %v167
  %702 = vmatprep.subr.mxu0 0.0
  %703 = vmatpush1.msra.mxu0 %v168
  %704 = vmatprep.subr.mxu0 0.0
  %705 = vmatpush1.msra.mxu0 %v169
  %706 = vmatprep.subr.mxu0 0.0
  %707 = vmatpush1.msra.mxu0 %v170
  %708 = vmatprep.subr.mxu0 0.0
  %709 = vmatpush1.msra.mxu0 0.0
  %710 = vmatprep.subr.mxu0 0.0
  %711 = vmatpush1.msra.mxu0 0.0
  %712 = vmatprep.subr.mxu0 0.0
  %713 = vmatpush1.msra.mxu0 0.0
  %714 = vmatprep.subr.mxu0 0.0
  %715 = vmatpush1.msra.mxu0 0.0
  %716 = vmatprep.subr.mxu0 0.0
  %717 = vmatpush1.msra.mxu0 0.0
  %718 = vmatprep.subr.mxu0 0.0
  %719 = vmatpush1.msra.mxu0 0.0
  %720 = vmatprep.subr.mxu0 0.0
  %721 = vmatpush1.msra.mxu0 0.0
  %722 = vmatprep.subr.mxu0 0.0
  %723 = vmatpush1.msra.mxu0 0.0
  %724 = vmatprep.subr.mxu0 0.0
  %725 = vmatpush1.msra.mxu0 0.0
  %726 = vmatprep.subr.mxu0 0.0
  %727 = vmatpush1.msra.mxu0 0.0
  %728 = vmatprep.subr.mxu0 0.0
  %729 = vmatpush1.msra.mxu0 0.0
  %730 = vmatprep.subr.mxu0 0.0
  %731 = vmatpush1.msra.mxu0 0.0
  %732 = vmatprep.subr.mxu0 0.0
  %733 = vmatpush1.msra.mxu0 0.0
  %734 = vmatprep.subr.mxu0 0.0
  %735 = vmatpush1.msra.mxu0 0.0
  %736 = vmatprep.subr.mxu0 0.0
  %737 = vmatpush1.msra.mxu0 0.0
  %738 = vmatprep.subr.mxu0 0.0
  %739 = vmatpush1.msra.mxu0 0.0
  %740 = vmatprep.subr.mxu0 0.0
  %741 = vmatpush1.msra.mxu0 0.0
  %742 = vmatprep.subr.mxu0 0.0
  %743 = vmatpush1.msra.mxu0 0.0
  %744 = vmatprep.subr.mxu0 0.0
  %745 = vmatpush1.msra.mxu0 0.0
  %746 = vmatprep.subr.mxu0 0.0
  %747 = vmatpush1.msra.mxu0 0.0
  %748 = vmatprep.subr.mxu0 0.0
  %749 = vmatpush1.msra.mxu0 0.0
  %750 = vmatprep.subr.mxu0 0.0
  %751 = vmatpush1.msra.mxu0 0.0
  %752 = vmatprep.subr.mxu0 0.0
  %753 = vmatpush1.msra.mxu0 0.0
  %754 = vmatprep.subr.mxu0 0.0
  %755 = vmatpush1.msra.mxu0 0.0
  %756 = vmatprep.subr.mxu0 0.0
  %757 = vmatpush1.msra.mxu0 0.0
  %758 = vmatprep.subr.mxu0 0.0
  %759 = vmatpush1.msra.mxu0 0.0
  %760 = vmatprep.subr.mxu0 0.0
  %761 = vmatpush1.msra.mxu0 0.0
  %762 = vmatprep.subr.mxu0 0.0
  %763 = vmatpush1.msra.mxu0 0.0
  %764 = vmatprep.mubr.f32.mxu0 0.0
  %765 = vmatmul.mubr.f32.gmra.mrb[0].mxu0 %v698
  %v766 = vpop.f32.mrb[0].mxu0
  %v767 = vadd.f32 0.0, %v766
  %v768 = vpop.f32.mrb[0].mxu0
  %769 = vdwg.mxu0
  %v770 = vadd.f32 %v697, %v767
  %v771 = vxor.u32 %v770, 2147483648
  %v772 = vmul.f32 %v771, 1.442695
  %v773 = vpow.pop %v772
  %v774 = vadd.f32 %v773, 1.0
  %v775 = vrcp.pop %v774
  %v776 = vmul.f32 1.0, %v775
  %v777 = vtanh.pop %v770
  %v778 = vmul.f32 %v776, %v683
  %780 = vrot.lane.b32.xlu0 %v777, 64
  %v781 = vpop.permute.xlu0 %780
  %v783 = vmul.f32 %v776, %v781
  %785 = vrot.lane.b32.xlu0 %v783, 32
  %v786 = vpop.permute.xlu0 %785
  %v788 = vadd.f32 %v778, %v786
  %v789 = vtanh.pop %v788
  %791 = vrot.lane.b32.xlu0 %v789, 64
  %v792 = vpop.permute.xlu0 %791
  %v794 = vmul.f32 %v776, %v792
  %796 = vrot.lane.b32.xlu0 %v794, 32
  %v797 = vpop.permute.xlu0 %796
  %s799 = scalar_lea.vmem [#allocation3], 40
  %800 = vst.msk [vmem:[%s799] sm:$0xff] %vm172, %v797
  %s801 = scalar_lea.vmem [#allocation2], 48
  %v802 = vld [vmem:[%s801] sm:$0xff]
  %v803 = vsel %vm172, %v797, 0
  %805 = vmatprep.subr.mxu0 0.0
  %806 = vmatpush1.msra.mxu0 %v167
  %807 = vmatprep.subr.mxu0 0.0
  %808 = vmatpush1.msra.mxu0 %v168
  %809 = vmatprep.subr.mxu0 0.0
  %810 = vmatpush1.msra.mxu0 %v169
  %811 = vmatprep.subr.mxu0 0.0
  %812 = vmatpush1.msra.mxu0 %v170
  %813 = vmatprep.subr.mxu0 0.0
  %814 = vmatpush1.msra.mxu0 0.0
  %815 = vmatprep.subr.mxu0 0.0
  %816 = vmatpush1.msra.mxu0 0.0
  %817 = vmatprep.subr.mxu0 0.0
  %818 = vmatpush1.msra.mxu0 0.0
  %819 = vmatprep.subr.mxu0 0.0
  %820 = vmatpush1.msra.mxu0 0.0
  %821 = vmatprep.subr.mxu0 0.0
  %822 = vmatpush1.msra.mxu0 0.0
  %823 = vmatprep.subr.mxu0 0.0
  %824 = vmatpush1.msra.mxu0 0.0
  %825 = vmatprep.subr.mxu0 0.0
  %826 = vmatpush1.msra.mxu0 0.0
  %827 = vmatprep.subr.mxu0 0.0
  %828 = vmatpush1.msra.mxu0 0.0
  %829 = vmatprep.subr.mxu0 0.0
  %830 = vmatpush1.msra.mxu0 0.0
  %831 = vmatprep.subr.mxu0 0.0
  %832 = vmatpush1.msra.mxu0 0.0
  %833 = vmatprep.subr.mxu0 0.0
  %834 = vmatpush1.msra.mxu0 0.0
  %835 = vmatprep.subr.mxu0 0.0
  %836 = vmatpush1.msra.mxu0 0.0
  %837 = vmatprep.subr.mxu0 0.0
  %838 = vmatpush1.msra.mxu0 0.0
  %839 = vmatprep.subr.mxu0 0.0
  %840 = vmatpush1.msra.mxu0 0.0
  %841 = vmatprep.subr.mxu0 0.0
  %842 = vmatpush1.msra.mxu0 0.0
  %843 = vmatprep.subr.mxu0 0.0
  %844 = vmatpush1.msra.mxu0 0.0
  %845 = vmatprep.subr.mxu0 0.0
  %846 = vmatpush1.msra.mxu0 0.0
  %847 = vmatprep.subr.mxu0 0.0
  %848 = vmatpush1.msra.mxu0 0.0
  %849 = vmatprep.subr.mxu0 0.0
  %850 = vmatpush1.msra.mxu0 0.0
  %851 = vmatprep.subr.mxu0 0.0
  %852 = vmatpush1.msra.mxu0 0.0
  %853 = vmatprep.subr.mxu0 0.0
  %854 = vmatpush1.msra.mxu0 0.0
  %855 = vmatprep.subr.mxu0 0.0
  %856 = vmatpush1.msra.mxu0 0.0
  %857 = vmatprep.subr.mxu0 0.0
  %858 = vmatpush1.msra.mxu0 0.0
  %859 = vmatprep.subr.mxu0 0.0
  %860 = vmatpush1.msra.mxu0 0.0
  %861 = vmatprep.subr.mxu0 0.0
  %862 = vmatpush1.msra.mxu0 0.0
  %863 = vmatprep.subr.mxu0 0.0
  %864 = vmatpush1.msra.mxu0 0.0
  %865 = vmatprep.subr.mxu0 0.0
  %866 = vmatpush1.msra.mxu0 0.0
  %867 = vmatprep.subr.mxu0 0.0
  %868 = vmatpush1.msra.mxu0 0.0
  %869 = vmatprep.mubr.f32.mxu0 0.0
  %870 = vmatmul.mubr.f32.gmra.mrb[0].mxu0 %v803
  %v871 = vpop.f32.mrb[0].mxu0
  %v872 = vadd.f32 0.0, %v871
  %v873 = vpop.f32.mrb[0].mxu0
  %874 = vdwg.mxu0
  %v875 = vadd.f32 %v802, %v872
  %v876 = vxor.u32 %v875, 2147483648
  %v877 = vmul.f32 %v876, 1.442695
  %v878 = vpow.pop %v877
  %v879 = vadd.f32 %v878, 1.0
  %v880 = vrcp.pop %v879
  %v881 = vmul.f32 1.0, %v880
  %v882 = vtanh.pop %v875
  %v883 = vmul.f32 %v881, %v788
  %885 = vrot.lane.b32.xlu0 %v882, 64
  %v886 = vpop.permute.xlu0 %885
  %v888 = vmul.f32 %v881, %v886
  %890 = vrot.lane.b32.xlu0 %v888, 32
  %v891 = vpop.permute.xlu0 %890
  %v893 = vadd.f32 %v883, %v891
  %v894 = vtanh.pop %v893
  %896 = vrot.lane.b32.xlu0 %v894, 64
  %v897 = vpop.permute.xlu0 %896
  %v899 = vmul.f32 %v881, %v897
  %901 = vrot.lane.b32.xlu0 %v899, 32
  %v902 = vpop.permute.xlu0 %901
  %s904 = scalar_lea.vmem [#allocation3], 48
  %905 = vst.msk [vmem:[%s904] sm:$0xff] %vm172, %v902
  %s906 = scalar_lea.vmem [#allocation2], 56
  %v907 = vld [vmem:[%s906] sm:$0xff]
  %v908 = vsel %vm172, %v902, 0
  %910 = vmatprep.subr.mxu0 0.0
  %911 = vmatpush1.msra.mxu0 %v167
  %912 = vmatprep.subr.mxu0 0.0
  %913 = vmatpush1.msra.mxu0 %v168
  %914 = vmatprep.subr.mxu0 0.0
  %915 = vmatpush1.msra.mxu0 %v169
  %916 = vmatprep.subr.mxu0 0.0
  %917 = vmatpush1.msra.mxu0 %v170
  %918 = vmatprep.subr.mxu0 0.0
  %919 = vmatpush1.msra.mxu0 0.0
  %920 = vmatprep.subr.mxu0 0.0
  %921 = vmatpush1.msra.mxu0 0.0
  %922 = vmatprep.subr.mxu0 0.0
  %923 = vmatpush1.msra.mxu0 0.0
  %924 = vmatprep.subr.mxu0 0.0
  %925 = vmatpush1.msra.mxu0 0.0
  %926 = vmatprep.subr.mxu0 0.0
  %927 = vmatpush1.msra.mxu0 0.0
  %928 = vmatprep.subr.mxu0 0.0
  %929 = vmatpush1.msra.mxu0 0.0
  %930 = vmatprep.subr.mxu0 0.0
  %931 = vmatpush1.msra.mxu0 0.0
  %932 = vmatprep.subr.mxu0 0.0
  %933 = vmatpush1.msra.mxu0 0.0
  %934 = vmatprep.subr.mxu0 0.0
  %935 = vmatpush1.msra.mxu0 0.0
  %936 = vmatprep.subr.mxu0 0.0
  %937 = vmatpush1.msra.mxu0 0.0
  %938 = vmatprep.subr.mxu0 0.0
  %939 = vmatpush1.msra.mxu0 0.0
  %940 = vmatprep.subr.mxu0 0.0
  %941 = vmatpush1.msra.mxu0 0.0
  %942 = vmatprep.subr.mxu0 0.0
  %943 = vmatpush1.msra.mxu0 0.0
  %944 = vmatprep.subr.mxu0 0.0
  %945 = vmatpush1.msra.mxu0 0.0
  %946 = vmatprep.subr.mxu0 0.0
  %947 = vmatpush1.msra.mxu0 0.0
  %948 = vmatprep.subr.mxu0 0.0
  %949 = vmatpush1.msra.mxu0 0.0
  %950 = vmatprep.subr.mxu0 0.0
  %951 = vmatpush1.msra.mxu0 0.0
  %952 = vmatprep.subr.mxu0 0.0
  %953 = vmatpush1.msra.mxu0 0.0
  %954 = vmatprep.subr.mxu0 0.0
  %955 = vmatpush1.msra.mxu0 0.0
  %956 = vmatprep.subr.mxu0 0.0
  %957 = vmatpush1.msra.mxu0 0.0
  %958 = vmatprep.subr.mxu0 0.0
  %959 = vmatpush1.msra.mxu0 0.0
  %960 = vmatprep.subr.mxu0 0.0
  %961 = vmatpush1.msra.mxu0 0.0
  %962 = vmatprep.subr.mxu0 0.0
  %963 = vmatpush1.msra.mxu0 0.0
  %964 = vmatprep.subr.mxu0 0.0
  %965 = vmatpush1.msra.mxu0 0.0
  %966 = vmatprep.subr.mxu0 0.0
  %967 = vmatpush1.msra.mxu0 0.0
  %968 = vmatprep.subr.mxu0 0.0
  %969 = vmatpush1.msra.mxu0 0.0
  %970 = vmatprep.subr.mxu0 0.0
  %971 = vmatpush1.msra.mxu0 0.0
  %972 = vmatprep.subr.mxu0 0.0
  %973 = vmatpush1.msra.mxu0 0.0
  %974 = vmatprep.mubr.f32.mxu0 0.0
  %975 = vmatmul.mubr.f32.gmra.mrb[0].mxu0 %v908
  %v976 = vpop.f32.mrb[0].mxu0
  %v977 = vadd.f32 0.0, %v976
  %v978 = vpop.f32.mrb[0].mxu0
  %979 = vdwg.mxu0
  %v980 = vadd.f32 %v907, %v977
  %v981 = vxor.u32 %v980, 2147483648
  %v982 = vmul.f32 %v981, 1.442695
  %v983 = vpow.pop %v982
  %v984 = vadd.f32 %v983, 1.0
  %v985 = vrcp.pop %v984
  %v986 = vmul.f32 1.0, %v985
  %v987 = vtanh.pop %v980
  %v988 = vmul.f32 %v986, %v893
  %990 = vrot.lane.b32.xlu0 %v987, 64
  %v991 = vpop.permute.xlu0 %990
  %v993 = vmul.f32 %v986, %v991
  %995 = vrot.lane.b32.xlu0 %v993, 32
  %v996 = vpop.permute.xlu0 %995
  %v998 = vadd.f32 %v988, %v996
  %v999 = vtanh.pop %v998
  %1001 = vrot.lane.b32.xlu0 %v999, 64
  %v1002 = vpop.permute.xlu0 %1001
  %v1004 = vmul.f32 %v986, %v1002
  %1006 = vrot.lane.b32.xlu0 %v1004, 32
  %v1007 = vpop.permute.xlu0 %1006
  %s1009 = scalar_lea.vmem [#allocation3], 56
  %1010 = vst.msk [vmem:[%s1009] sm:$0xff] %vm172, %v1007
  %v1011 = vld [vmem:[#allocation3] sm:$0xff]
  %v1012 = vld [vmem:[#allocation3 + $0x8] sm:$0xff]
  %v1013 = vld [vmem:[#allocation3 + $0x10] sm:$0xff]
  %v1014 = vld [vmem:[#allocation3 + $0x18] sm:$0xff]
  %v1015 = vld [vmem:[#allocation3 + $0x20] sm:$0xff]
  %v1016 = vld [vmem:[#allocation3 + $0x28] sm:$0xff]
  %v1017 = vld [vmem:[#allocation3 + $0x30] sm:$0xff]
  %v1018 = vld [vmem:[#allocation3 + $0x38] sm:$0xff]
  %v1019 = vpack.c.bf16 %v1012, %v1011
  %v1020 = vpack.c.bf16 %v1014, %v1013
  %v1021 = vpack.c.bf16 %v1016, %v1015
  %v1022 = vpack.c.bf16 %v1018, %v1017
  %v1023 = vld [vmem:[%s4] sm:$0xf]
  %v1024 = vld [vmem:[%s4 + $0x4] sm:$0xf]
  %v1025 = vld [vmem:[%s4 + $0x8] sm:$0xf]
  %v1026 = vld [vmem:[%s4 + $0xc] sm:$0xf]
  %v1027 = vld [vmem:[%s6] sm:$0x1]
  %v1029 = vlaneseq
  %v1030 = vshrl.u32 %v1029, 7
  %v1031 = vsub.s32 0, %v1030
  %v1032 = vrot.slane %v1027, %v1031
  %v1038 = vunpack.c.l.b16 %v1023
  %v1039 = vunpack.c.l.b16 %v1024
  %v1040 = vunpack.c.l.b16 %v1025
  %v1041 = vunpack.c.l.b16 %v1026
  %v1042 = vpack.c.b16 %v1039, %v1038
  %v1043 = vpack.c.b16 %v1041, %v1040
  %v1047 = vsel %vm172, %v1019, 0
  %v1050 = vsel %vm172, %v1020, 0
  %v1053 = vsel %vm172, %v1021, 0
  %v1056 = vsel %vm172, %v1022, 0
  %1058 = vmatprep.subr.bf16.mxu0 0
  %1059 = vmatpush1.bf16.msra.mxu0 %v1042
  %1060 = vmatprep.subr.bf16.mxu0 0
  %1061 = vmatpush1.bf16.msra.mxu0 %v1043
  %1062 = vmatprep.subr.bf16.mxu0 0
  %1063 = vmatpush1.bf16.msra.mxu0 0
  %1064 = vmatprep.subr.bf16.mxu0 0
  %1065 = vmatpush1.bf16.msra.mxu0 0
  %1066 = vmatprep.subr.bf16.mxu0 0
  %1067 = vmatpush1.bf16.msra.mxu0 0
  %1068 = vmatprep.subr.bf16.mxu0 0
  %1069 = vmatpush1.bf16.msra.mxu0 0
  %1070 = vmatprep.subr.bf16.mxu0 0
  %1071 = vmatpush1.bf16.msra.mxu0 0
  %1072 = vmatprep.subr.bf16.mxu0 0
  %1073 = vmatpush1.bf16.msra.mxu0 0
  %1074 = vmatprep.subr.bf16.mxu0 0
  %1075 = vmatpush1.bf16.msra.mxu0 0
  %1076 = vmatprep.subr.bf16.mxu0 0
  %1077 = vmatpush1.bf16.msra.mxu0 0
  %1078 = vmatprep.subr.bf16.mxu0 0
  %1079 = vmatpush1.bf16.msra.mxu0 0
  %1080 = vmatprep.subr.bf16.mxu0 0
  %1081 = vmatpush1.bf16.msra.mxu0 0
  %1082 = vmatprep.subr.bf16.mxu0 0
  %1083 = vmatpush1.bf16.msra.mxu0 0
  %1084 = vmatprep.subr.bf16.mxu0 0
  %1085 = vmatpush1.bf16.msra.mxu0 0
  %1086 = vmatprep.subr.bf16.mxu0 0
  %1087 = vmatpush1.bf16.msra.mxu0 0
  %1088 = vmatprep.subr.bf16.mxu0 0
  %1089 = vmatpush1.bf16.msra.mxu0 0
  %1090 = vmatprep.mubr.bf16.mxu0 0
  %1091 = vmatmul.mubr.bf16.gmra.mrb[0].mxu0 %v1047
  %v1092 = vpop.f32.mrb[0].mxu0
  %v1093 = vadd.f32 %v1032, %v1092
  %v1094 = vpop.f32.mrb[0].mxu0
  %v1095 = vpop.f32.mrb[0].mxu0
  %v1096 = vadd.f32 %v1032, %v1095
  %v1097 = vpop.f32.mrb[0].mxu0
  %1098 = vmatprep.mubr.bf16.mxu0 0
  %1099 = vmatmul.mubr.bf16.gmra.mrb[0].mxu0 %v1050
  %v1100 = vpop.f32.mrb[0].mxu0
  %v1101 = vadd.f32 %v1032, %v1100
  %v1102 = vpop.f32.mrb[0].mxu0
  %v1103 = vpop.f32.mrb[0].mxu0
  %v1104 = vadd.f32 %v1032, %v1103
  %v1105 = vpop.f32.mrb[0].mxu0
  %1106 = vmatprep.mubr.bf16.mxu0 0
  %1107 = vmatmul.mubr.bf16.gmra.mrb[0].mxu0 %v1053
  %v1108 = vpop.f32.mrb[0].mxu0
  %v1109 = vadd.f32 %v1032, %v1108
  %v1110 = vpop.f32.mrb[0].mxu0
  %v1111 = vpop.f32.mrb[0].mxu0
  %v1112 = vadd.f32 %v1032, %v1111
  %v1113 = vpop.f32.mrb[0].mxu0
  %1114 = vmatprep.mubr.bf16.mxu0 0
  %1115 = vmatmul.mubr.bf16.gmra.mrb[0].mxu0 %v1056
  %v1116 = vpop.f32.mrb[0].mxu0
  %v1117 = vadd.f32 %v1032, %v1116
  %v1118 = vpop.f32.mrb[0].mxu0
  %v1119 = vpop.f32.mrb[0].mxu0
  %v1120 = vadd.f32 %v1032, %v1119
  %v1121 = vpop.f32.mrb[0].mxu0
  %1122 = vdwg.mxu0
  %1123 = vst [vmem:[#allocation2] sm:$0xff] %v1093
  %1124 = vst [vmem:[#allocation2 + $0x8] sm:$0xff] %v1096
  %1125 = vst [vmem:[#allocation2 + $0x10] sm:$0xff] %v1101
  %1126 = vst [vmem:[#allocation2 + $0x18] sm:$0xff] %v1104
  %1127 = vst [vmem:[#allocation2 + $0x20] sm:$0xff] %v1109
  %1128 = vst [vmem:[#allocation2 + $0x28] sm:$0xff] %v1112
  %1129 = vst [vmem:[#allocation2 + $0x30] sm:$0xff] %v1117
  %1130 = vst [vmem:[#allocation2 + $0x38] sm:$0xff] %v1120
  %v1131 = vld [vmem:[%s5] sm:$0xff]
  %v1132 = vld [vmem:[%s5 + $0x8] sm:$0xff]
  %v1133 = vld [vmem:[%s5 + $0x10] sm:$0xff]
  %v1134 = vld [vmem:[%s5 + $0x18] sm:$0xff]
  %v1135 = vld [vmem:[%s7] sm:$0xff]
  %v1136 = vld [vmem:[#allocation2] sm:$0xff]
  %1137 = vmatprep.subr.mxu0 0.0
  %1138 = vmatpush1.msra.mxu0 %v1131
  %1139 = vmatprep.subr.mxu0 0.0
  %1140 = vmatpush1.msra.mxu0 %v1132
  %1141 = vmatprep.subr.mxu0 0.0
  %1142 = vmatpush1.msra.mxu0 %v1133
  %1143 = vmatprep.subr.mxu0 0.0
  %1144 = vmatpush1.msra.mxu0 %v1134
  %1145 = vmatprep.subr.mxu0 0.0
  %1146 = vmatpush1.msra.mxu0 0.0
  %1147 = vmatprep.subr.mxu0 0.0
  %1148 = vmatpush1.msra.mxu0 0.0
  %1149 = vmatprep.subr.mxu0 0.0
  %1150 = vmatpush1.msra.mxu0 0.0
  %1151 = vmatprep.subr.mxu0 0.0
  %1152 = vmatpush1.msra.mxu0 0.0
  %1153 = vmatprep.subr.mxu0 0.0
  %1154 = vmatpush1.msra.mxu0 0.0
  %1155 = vmatprep.subr.mxu0 0.0
  %1156 = vmatpush1.msra.mxu0 0.0
  %1157 = vmatprep.subr.mxu0 0.0
  %1158 = vmatpush1.msra.mxu0 0.0
  %1159 = vmatprep.subr.mxu0 0.0
  %1160 = vmatpush1.msra.mxu0 0.0
  %1161 = vmatprep.subr.mxu0 0.0
  %1162 = vmatpush1.msra.mxu0 0.0
  %1163 = vmatprep.subr.mxu0 0.0
  %1164 = vmatpush1.msra.mxu0 0.0
  %1165 = vmatprep.subr.mxu0 0.0
  %1166 = vmatpush1.msra.mxu0 0.0
  %1167 = vmatprep.subr.mxu0 0.0
  %1168 = vmatpush1.msra.mxu0 0.0
  %1169 = vmatprep.subr.mxu0 0.0
  %1170 = vmatpush1.msra.mxu0 0.0
  %1171 = vmatprep.subr.mxu0 0.0
  %1172 = vmatpush1.msra.mxu0 0.0
  %1173 = vmatprep.subr.mxu0 0.0
  %1174 = vmatpush1.msra.mxu0 0.0
  %1175 = vmatprep.subr.mxu0 0.0
  %1176 = vmatpush1.msra.mxu0 0.0
  %1177 = vmatprep.subr.mxu0 0.0
  %1178 = vmatpush1.msra.mxu0 0.0
  %1179 = vmatprep.subr.mxu0 0.0
  %1180 = vmatpush1.msra.mxu0 0.0
  %1181 = vmatprep.subr.mxu0 0.0
  %1182 = vmatpush1.msra.mxu0 0.0
  %1183 = vmatprep.subr.mxu0 0.0
  %1184 = vmatpush1.msra.mxu0 0.0
  %1185 = vmatprep.subr.mxu0 0.0
  %1186 = vmatpush1.msra.mxu0 0.0
  %1187 = vmatprep.subr.mxu0 0.0
  %1188 = vmatpush1.msra.mxu0 0.0
  %1189 = vmatprep.subr.mxu0 0.0
  %1190 = vmatpush1.msra.mxu0 0.0
  %1191 = vmatprep.subr.mxu0 0.0
  %1192 = vmatpush1.msra.mxu0 0.0
  %1193 = vmatprep.subr.mxu0 0.0
  %1194 = vmatpush1.msra.mxu0 0.0
  %1195 = vmatprep.subr.mxu0 0.0
  %1196 = vmatpush1.msra.mxu0 0.0
  %1197 = vmatprep.subr.mxu0 0.0
  %1198 = vmatpush1.msra.mxu0 0.0
  %1199 = vmatprep.subr.mxu0 0.0
  %1200 = vmatpush1.msra.mxu0 0.0
  %1201 = vmatprep.mubr.f32.mxu0 0.0
  %1202 = vmatmul.mubr.f32.gmra.mrb[0].mxu0 %v174
  %v1203 = vpop.f32.mrb[0].mxu0
  %v1204 = vadd.f32 0.0, %v1203
  %v1205 = vpop.f32.mrb[0].mxu0
  %1206 = vdwg.mxu0
  %v1207 = vadd.f32 %v1136, %v1204
  %v1208 = vxor.u32 %v1207, 2147483648
  %v1209 = vmul.f32 %v1208, 1.442695
  %v1210 = vpow.pop %v1209
  %v1211 = vadd.f32 %v1210, 1.0
  %v1212 = vrcp.pop %v1211
  %v1213 = vmul.f32 1.0, %v1212
  %v1214 = vtanh.pop %v1207
  %v1215 = vmul.f32 %v1213, 0.0
  %1217 = vrot.lane.b32.xlu0 %v1214, 64
  %v1218 = vpop.permute.xlu0 %1217
  %v1220 = vmul.f32 %v1213, %v1218
  %1222 = vrot.lane.b32.xlu0 %v1220, 32
  %v1223 = vpop.permute.xlu0 %1222
  %v1225 = vadd.f32 %v1215, %v1223
  %v1226 = vtanh.pop %v1225
  %1228 = vrot.lane.b32.xlu0 %v1226, 64
  %v1229 = vpop.permute.xlu0 %1228
  %v1231 = vmul.f32 %v1213, %v1229
  %1233 = vrot.lane.b32.xlu0 %v1231, 32
  %v1234 = vpop.permute.xlu0 %1233
  %1236 = vst.msk [vmem:[#allocation3] sm:$0xff] %vm172, %v1234
  %1238 = vset.pattern.permute.xlu0 0
  %1239 = vperm.xlu0 %1238, %v1135
  %v1240 = vpop.permute.xlu0 %1239
  %v1242 = vmul.f32 %v1231, %v1240
  %vm1243 = vcmask 1048320
  %v1244 = vsel %vm1243, %v1242, 0.0
  %v1245 = vrot.slane %v1244, 4
  %v1246 = vadd.f32 %v1244, %v1245
  %v1247 = vrot.slane %v1246, 2
  %v1248 = vadd.f32 %v1246, %v1247
  %v1249 = vrot.slane %v1248, 1
  %v1250 = vadd.f32 %v1248, %v1249
  %v1251 = vadd.f32 %v1250, 0.0
  %v1252 = vmul.f32 %v1242, %v1231
  %v1253 = vsel %vm1243, %v1252, 0.0
  %v1254 = vrot.slane %v1253, 4
  %v1255 = vadd.f32 %v1253, %v1254
  %v1256 = vrot.slane %v1255, 2
  %v1257 = vadd.f32 %v1255, %v1256
  %v1258 = vrot.slane %v1257, 1
  %v1259 = vadd.f32 %v1257, %v1258
  %v1260 = vadd.f32 %v1259, 0.0
  %v1261 = vld [vmem:[%s276] sm:$0xff]
  %v1262 = vsel %vm172, %v1234, 0
  %1264 = vmatprep.subr.mxu0 0.0
  %1265 = vmatpush1.msra.mxu0 %v1131
  %1266 = vmatprep.subr.mxu0 0.0
  %1267 = vmatpush1.msra.mxu0 %v1132
  %1268 = vmatprep.subr.mxu0 0.0
  %1269 = vmatpush1.msra.mxu0 %v1133
  %1270 = vmatprep.subr.mxu0 0.0
  %1271 = vmatpush1.msra.mxu0 %v1134
  %1272 = vmatprep.subr.mxu0 0.0
  %1273 = vmatpush1.msra.mxu0 0.0
  %1274 = vmatprep.subr.mxu0 0.0
  %1275 = vmatpush1.msra.mxu0 0.0
  %1276 = vmatprep.subr.mxu0 0.0
  %1277 = vmatpush1.msra.mxu0 0.0
  %1278 = vmatprep.subr.mxu0 0.0
  %1279 = vmatpush1.msra.mxu0 0.0
  %1280 = vmatprep.subr.mxu0 0.0
  %1281 = vmatpush1.msra.mxu0 0.0
  %1282 = vmatprep.subr.mxu0 0.0
  %1283 = vmatpush1.msra.mxu0 0.0
  %1284 = vmatprep.subr.mxu0 0.0
  %1285 = vmatpush1.msra.mxu0 0.0
  %1286 = vmatprep.subr.mxu0 0.0
  %1287 = vmatpush1.msra.mxu0 0.0
  %1288 = vmatprep.subr.mxu0 0.0
  %1289 = vmatpush1.msra.mxu0 0.0
  %1290 = vmatprep.subr.mxu0 0.0
  %1291 = vmatpush1.msra.mxu0 0.0
  %1292 = vmatprep.subr.mxu0 0.0
  %1293 = vmatpush1.msra.mxu0 0.0
  %1294 = vmatprep.subr.mxu0 0.0
  %1295 = vmatpush1.msra.mxu0 0.0
  %1296 = vmatprep.subr.mxu0 0.0
  %1297 = vmatpush1.msra.mxu0 0.0
  %1298 = vmatprep.subr.mxu0 0.0
  %1299 = vmatpush1.msra.mxu0 0.0
  %1300 = vmatprep.subr.mxu0 0.0
  %1301 = vmatpush1.msra.mxu0 0.0
  %1302 = vmatprep.subr.mxu0 0.0
  %1303 = vmatpush1.msra.mxu0 0.0
  %1304 = vmatprep.subr.mxu0 0.0
  %1305 = vmatpush1.msra.mxu0 0.0
  %1306 = vmatprep.subr.mxu0 0.0
  %1307 = vmatpush1.msra.mxu0 0.0
  %1308 = vmatprep.subr.mxu0 0.0
  %1309 = vmatpush1.msra.mxu0 0.0
  %1310 = vmatprep.subr.mxu0 0.0
  %1311 = vmatpush1.msra.mxu0 0.0
  %1312 = vmatprep.subr.mxu0 0.0
  %1313 = vmatpush1.msra.mxu0 0.0
  %1314 = vmatprep.subr.mxu0 0.0
  %1315 = vmatpush1.msra.mxu0 0.0
  %1316 = vmatprep.subr.mxu0 0.0
  %1317 = vmatpush1.msra.mxu0 0.0
  %1318 = vmatprep.subr.mxu0 0.0
  %1319 = vmatpush1.msra.mxu0 0.0
  %1320 = vmatprep.subr.mxu0 0.0
  %1321 = vmatpush1.msra.mxu0 0.0
  %1322 = vmatprep.subr.mxu0 0.0
  %1323 = vmatpush1.msra.mxu0 0.0
  %1324 = vmatprep.subr.mxu0 0.0
  %1325 = vmatpush1.msra.mxu0 0.0
  %1326 = vmatprep.subr.mxu0 0.0
  %1327 = vmatpush1.msra.mxu0 0.0
  %1328 = vmatprep.mubr.f32.mxu0 0.0
  %1329 = vmatmul.mubr.f32.gmra.mrb[0].mxu0 %v1262
  %v1330 = vpop.f32.mrb[0].mxu0
  %v1331 = vadd.f32 0.0, %v1330
  %v1332 = vpop.f32.mrb[0].mxu0
  %1333 = vdwg.mxu0
  %v1334 = vadd.f32 %v1261, %v1331
  %v1335 = vxor.u32 %v1334, 2147483648
  %v1336 = vmul.f32 %v1335, 1.442695
  %v1337 = vpow.pop %v1336
  %v1338 = vadd.f32 %v1337, 1.0
  %v1339 = vrcp.pop %v1338
  %v1340 = vmul.f32 1.0, %v1339
  %v1341 = vtanh.pop %v1334
  %v1342 = vmul.f32 %v1340, %v1225
  %1344 = vrot.lane.b32.xlu0 %v1341, 64
  %v1345 = vpop.permute.xlu0 %1344
  %v1347 = vmul.f32 %v1340, %v1345
  %1349 = vrot.lane.b32.xlu0 %v1347, 32
  %v1350 = vpop.permute.xlu0 %1349
  %v1352 = vadd.f32 %v1342, %v1350
  %v1353 = vtanh.pop %v1352
  %1355 = vrot.lane.b32.xlu0 %v1353, 64
  %v1356 = vpop.permute.xlu0 %1355
  %v1358 = vmul.f32 %v1340, %v1356
  %1360 = vrot.lane.b32.xlu0 %v1358, 32
  %v1361 = vpop.permute.xlu0 %1360
  %1363 = vst.msk [vmem:[%s379] sm:$0xff] %vm172, %v1361
  %v1364 = vmul.f32 %v1358, %v1240
  %v1365 = vsel %vm1243, %v1364, 0.0
  %v1366 = vrot.slane %v1365, 4
  %v1367 = vadd.f32 %v1365, %v1366
  %v1368 = vrot.slane %v1367, 2
  %v1369 = vadd.f32 %v1367, %v1368
  %v1370 = vrot.slane %v1369, 1
  %v1371 = vadd.f32 %v1369, %v1370
  %v1372 = vadd.f32 %v1251, %v1371
  %v1373 = vmul.f32 %v1364, %v1358
  %v1374 = vsel %vm1243, %v1373, 0.0
  %v1375 = vrot.slane %v1374, 4
  %v1376 = vadd.f32 %v1374, %v1375
  %v1377 = vrot.slane %v1376, 2
  %v1378 = vadd.f32 %v1376, %v1377
  %v1379 = vrot.slane %v1378, 1
  %v1380 = vadd.f32 %v1378, %v1379
  %v1381 = vadd.f32 %v1260, %v1380
  %v1382 = vld [vmem:[%s381] sm:$0xff]
  %v1383 = vsel %vm172, %v1361, 0
  %1385 = vmatprep.subr.mxu0 0.0
  %1386 = vmatpush1.msra.mxu0 %v1131
  %1387 = vmatprep.subr.mxu0 0.0
  %1388 = vmatpush1.msra.mxu0 %v1132
  %1389 = vmatprep.subr.mxu0 0.0
  %1390 = vmatpush1.msra.mxu0 %v1133
  %1391 = vmatprep.subr.mxu0 0.0
  %1392 = vmatpush1.msra.mxu0 %v1134
  %1393 = vmatprep.subr.mxu0 0.0
  %1394 = vmatpush1.msra.mxu0 0.0
  %1395 = vmatprep.subr.mxu0 0.0
  %1396 = vmatpush1.msra.mxu0 0.0
  %1397 = vmatprep.subr.mxu0 0.0
  %1398 = vmatpush1.msra.mxu0 0.0
  %1399 = vmatprep.subr.mxu0 0.0
  %1400 = vmatpush1.msra.mxu0 0.0
  %1401 = vmatprep.subr.mxu0 0.0
  %1402 = vmatpush1.msra.mxu0 0.0
  %1403 = vmatprep.subr.mxu0 0.0
  %1404 = vmatpush1.msra.mxu0 0.0
  %1405 = vmatprep.subr.mxu0 0.0
  %1406 = vmatpush1.msra.mxu0 0.0
  %1407 = vmatprep.subr.mxu0 0.0
  %1408 = vmatpush1.msra.mxu0 0.0
  %1409 = vmatprep.subr.mxu0 0.0
  %1410 = vmatpush1.msra.mxu0 0.0
  %1411 = vmatprep.subr.mxu0 0.0
  %1412 = vmatpush1.msra.mxu0 0.0
  %1413 = vmatprep.subr.mxu0 0.0
  %1414 = vmatpush1.msra.mxu0 0.0
  %1415 = vmatprep.subr.mxu0 0.0
  %1416 = vmatpush1.msra.mxu0 0.0
  %1417 = vmatprep.subr.mxu0 0.0
  %1418 = vmatpush1.msra.mxu0 0.0
  %1419 = vmatprep.subr.mxu0 0.0
  %1420 = vmatpush1.msra.mxu0 0.0
  %1421 = vmatprep.subr.mxu0 0.0
  %1422 = vmatpush1.msra.mxu0 0.0
  %1423 = vmatprep.subr.mxu0 0.0
  %1424 = vmatpush1.msra.mxu0 0.0
  %1425 = vmatprep.subr.mxu0 0.0
  %1426 = vmatpush1.msra.mxu0 0.0
  %1427 = vmatprep.subr.mxu0 0.0
  %1428 = vmatpush1.msra.mxu0 0.0
  %1429 = vmatprep.subr.mxu0 0.0
  %1430 = vmatpush1.msra.mxu0 0.0
  %1431 = vmatprep.subr.mxu0 0.0
  %1432 = vmatpush1.msra.mxu0 0.0
  %1433 = vmatprep.subr.mxu0 0.0
  %1434 = vmatpush1.msra.mxu0 0.0
  %1435 = vmatprep.subr.mxu0 0.0
  %1436 = vmatpush1.msra.mxu0 0.0
  %1437 = vmatprep.subr.mxu0 0.0
  %1438 = vmatpush1.msra.mxu0 0.0
  %1439 = vmatprep.subr.mxu0 0.0
  %1440 = vmatpush1.msra.mxu0 0.0
  %1441 = vmatprep.subr.mxu0 0.0
  %1442 = vmatpush1.msra.mxu0 0.0
  %1443 = vmatprep.subr.mxu0 0.0
  %1444 = vmatpush1.msra.mxu0 0.0
  %1445 = vmatprep.subr.mxu0 0.0
  %1446 = vmatpush1.msra.mxu0 0.0
  %1447 = vmatprep.subr.mxu0 0.0
  %1448 = vmatpush1.msra.mxu0 0.0
  %1449 = vmatprep.mubr.f32.mxu0 0.0
  %1450 = vmatmul.mubr.f32.gmra.mrb[0].mxu0 %v1383
  %v1451 = vpop.f32.mrb[0].mxu0
  %v1452 = vadd.f32 0.0, %v1451
  %v1453 = vpop.f32.mrb[0].mxu0
  %1454 = vdwg.mxu0
  %v1455 = vadd.f32 %v1382, %v1452
  %v1456 = vxor.u32 %v1455, 2147483648
  %v1457 = vmul.f32 %v1456, 1.442695
  %v1458 = vpow.pop %v1457
  %v1459 = vadd.f32 %v1458, 1.0
  %v1460 = vrcp.pop %v1459
  %v1461 = vmul.f32 1.0, %v1460
  %v1462 = vtanh.pop %v1455
  %v1463 = vmul.f32 %v1461, %v1352
  %1465 = vrot.lane.b32.xlu0 %v1462, 64
  %v1466 = vpop.permute.xlu0 %1465
  %v1468 = vmul.f32 %v1461, %v1466
  %1470 = vrot.lane.b32.xlu0 %v1468, 32
  %v1471 = vpop.permute.xlu0 %1470
  %v1473 = vadd.f32 %v1463, %v1471
  %v1474 = vtanh.pop %v1473
  %1476 = vrot.lane.b32.xlu0 %v1474, 64
  %v1477 = vpop.permute.xlu0 %1476
  %v1479 = vmul.f32 %v1461, %v1477
  %1481 = vrot.lane.b32.xlu0 %v1479, 32
  %v1482 = vpop.permute.xlu0 %1481
  %1484 = vst.msk [vmem:[%s484] sm:$0xff] %vm172, %v1482
  %v1485 = vmul.f32 %v1479, %v1240
  %v1486 = vsel %vm1243, %v1485, 0.0
  %v1487 = vrot.slane %v1486, 4
  %v1488 = vadd.f32 %v1486, %v1487
  %v1489 = vrot.slane %v1488, 2
  %v1490 = vadd.f32 %v1488, %v1489
  %v1491 = vrot.slane %v1490, 1
  %v1492 = vadd.f32 %v1490, %v1491
  %v1493 = vadd.f32 %v1372, %v1492
  %v1494 = vmul.f32 %v1485, %v1479
  %v1495 = vsel %vm1243, %v1494, 0.0
  %v1496 = vrot.slane %v1495, 4
  %v1497 = vadd.f32 %v1495, %v1496
  %v1498 = vrot.slane %v1497, 2
  %v1499 = vadd.f32 %v1497, %v1498
  %v1500 = vrot.slane %v1499, 1
  %v1501 = vadd.f32 %v1499, %v1500
  %v1502 = vadd.f32 %v1381, %v1501
  %v1503 = vld [vmem:[%s486] sm:$0xff]
  %v1504 = vsel %vm172, %v1482, 0
  %1506 = vmatprep.subr.mxu0 0.0
  %1507 = vmatpush1.msra.mxu0 %v1131
  %1508 = vmatprep.subr.mxu0 0.0
  %1509 = vmatpush1.msra.mxu0 %v1132
  %1510 = vmatprep.subr.mxu0 0.0
  %1511 = vmatpush1.msra.mxu0 %v1133
  %1512 = vmatprep.subr.mxu0 0.0
  %1513 = vmatpush1.msra.mxu0 %v1134
  %1514 = vmatprep.subr.mxu0 0.0
  %1515 = vmatpush1.msra.mxu0 0.0
  %1516 = vmatprep.subr.mxu0 0.0
  %1517 = vmatpush1.msra.mxu0 0.0
  %1518 = vmatprep.subr.mxu0 0.0
  %1519 = vmatpush1.msra.mxu0 0.0
  %1520 = vmatprep.subr.mxu0 0.0
  %1521 = vmatpush1.msra.mxu0 0.0
  %1522 = vmatprep.subr.mxu0 0.0
  %1523 = vmatpush1.msra.mxu0 0.0
  %1524 = vmatprep.subr.mxu0 0.0
  %1525 = vmatpush1.msra.mxu0 0.0
  %1526 = vmatprep.subr.mxu0 0.0
  %1527 = vmatpush1.msra.mxu0 0.0
  %1528 = vmatprep.subr.mxu0 0.0
  %1529 = vmatpush1.msra.mxu0 0.0
  %1530 = vmatprep.subr.mxu0 0.0
  %1531 = vmatpush1.msra.mxu0 0.0
  %1532 = vmatprep.subr.mxu0 0.0
  %1533 = vmatpush1.msra.mxu0 0.0
  %1534 = vmatprep.subr.mxu0 0.0
  %1535 = vmatpush1.msra.mxu0 0.0
  %1536 = vmatprep.subr.mxu0 0.0
  %1537 = vmatpush1.msra.mxu0 0.0
  %1538 = vmatprep.subr.mxu0 0.0
  %1539 = vmatpush1.msra.mxu0 0.0
  %1540 = vmatprep.subr.mxu0 0.0
  %1541 = vmatpush1.msra.mxu0 0.0
  %1542 = vmatprep.subr.mxu0 0.0
  %1543 = vmatpush1.msra.mxu0 0.0
  %1544 = vmatprep.subr.mxu0 0.0
  %1545 = vmatpush1.msra.mxu0 0.0
  %1546 = vmatprep.subr.mxu0 0.0
  %1547 = vmatpush1.msra.mxu0 0.0
  %1548 = vmatprep.subr.mxu0 0.0
  %1549 = vmatpush1.msra.mxu0 0.0
  %1550 = vmatprep.subr.mxu0 0.0
  %1551 = vmatpush1.msra.mxu0 0.0
  %1552 = vmatprep.subr.mxu0 0.0
  %1553 = vmatpush1.msra.mxu0 0.0
  %1554 = vmatprep.subr.mxu0 0.0
  %1555 = vmatpush1.msra.mxu0 0.0
  %1556 = vmatprep.subr.mxu0 0.0
  %1557 = vmatpush1.msra.mxu0 0.0
  %1558 = vmatprep.subr.mxu0 0.0
  %1559 = vmatpush1.msra.mxu0 0.0
  %1560 = vmatprep.subr.mxu0 0.0
  %1561 = vmatpush1.msra.mxu0 0.0
  %1562 = vmatprep.subr.mxu0 0.0
  %1563 = vmatpush1.msra.mxu0 0.0
  %1564 = vmatprep.subr.mxu0 0.0
  %1565 = vmatpush1.msra.mxu0 0.0
  %1566 = vmatprep.subr.mxu0 0.0
  %1567 = vmatpush1.msra.mxu0 0.0
  %1568 = vmatprep.subr.mxu0 0.0
  %1569 = vmatpush1.msra.mxu0 0.0
  %1570 = vmatprep.mubr.f32.mxu0 0.0
  %1571 = vmatmul.mubr.f32.gmra.mrb[0].mxu0 %v1504
  %v1572 = vpop.f32.mrb[0].mxu0
  %v1573 = vadd.f32 0.0, %v1572
  %v1574 = vpop.f32.mrb[0].mxu0
  %1575 = vdwg.mxu0
  %v1576 = vadd.f32 %v1503, %v1573
  %v1577 = vxor.u32 %v1576, 2147483648
  %v1578 = vmul.f32 %v1577, 1.442695
  %v1579 = vpow.pop %v1578
  %v1580 = vadd.f32 %v1579, 1.0
  %v1581 = vrcp.pop %v1580
  %v1582 = vmul.f32 1.0, %v1581
  %v1583 = vtanh.pop %v1576
  %v1584 = vmul.f32 %v1582, %v1473
  %1586 = vrot.lane.b32.xlu0 %v1583, 64
  %v1587 = vpop.permute.xlu0 %1586
  %v1589 = vmul.f32 %v1582, %v1587
  %1591 = vrot.lane.b32.xlu0 %v1589, 32
  %v1592 = vpop.permute.xlu0 %1591
  %v1594 = vadd.f32 %v1584, %v1592
  %v1595 = vtanh.pop %v1594
  %1597 = vrot.lane.b32.xlu0 %v1595, 64
  %v1598 = vpop.permute.xlu0 %1597
  %v1600 = vmul.f32 %v1582, %v1598
  %1602 = vrot.lane.b32.xlu0 %v1600, 32
  %v1603 = vpop.permute.xlu0 %1602
  %1605 = vst.msk [vmem:[%s589] sm:$0xff] %vm172, %v1603
  %v1606 = vmul.f32 %v1600, %v1240
  %v1607 = vsel %vm1243, %v1606, 0.0
  %v1608 = vrot.slane %v1607, 4
  %v1609 = vadd.f32 %v1607, %v1608
  %v1610 = vrot.slane %v1609, 2
  %v1611 = vadd.f32 %v1609, %v1610
  %v1612 = vrot.slane %v1611, 1
  %v1613 = vadd.f32 %v1611, %v1612
  %v1614 = vadd.f32 %v1493, %v1613
  %v1615 = vmul.f32 %v1606, %v1600
  %v1616 = vsel %vm1243, %v1615, 0.0
  %v1617 = vrot.slane %v1616, 4
  %v1618 = vadd.f32 %v1616, %v1617
  %v1619 = vrot.slane %v1618, 2
  %v1620 = vadd.f32 %v1618, %v1619
  %v1621 = vrot.slane %v1620, 1
  %v1622 = vadd.f32 %v1620, %v1621
  %v1623 = vadd.f32 %v1502, %v1622
  %v1624 = vld [vmem:[%s591] sm:$0xff]
  %v1625 = vsel %vm172, %v1603, 0
  %1627 = vmatprep.subr.mxu0 0.0
  %1628 = vmatpush1.msra.mxu0 %v1131
  %1629 = vmatprep.subr.mxu0 0.0
  %1630 = vmatpush1.msra.mxu0 %v1132
  %1631 = vmatprep.subr.mxu0 0.0
  %1632 = vmatpush1.msra.mxu0 %v1133
  %1633 = vmatprep.subr.mxu0 0.0
  %1634 = vmatpush1.msra.mxu0 %v1134
  %1635 = vmatprep.subr.mxu0 0.0
  %1636 = vmatpush1.msra.mxu0 0.0
  %1637 = vmatprep.subr.mxu0 0.0
  %1638 = vmatpush1.msra.mxu0 0.0
  %1639 = vmatprep.subr.mxu0 0.0
  %1640 = vmatpush1.msra.mxu0 0.0
  %1641 = vmatprep.subr.mxu0 0.0
  %1642 = vmatpush1.msra.mxu0 0.0
  %1643 = vmatprep.subr.mxu0 0.0
  %1644 = vmatpush1.msra.mxu0 0.0
  %1645 = vmatprep.subr.mxu0 0.0
  %1646 = vmatpush1.msra.mxu0 0.0
  %1647 = vmatprep.subr.mxu0 0.0
  %1648 = vmatpush1.msra.mxu0 0.0
  %1649 = vmatprep.subr.mxu0 0.0
  %1650 = vmatpush1.msra.mxu0 0.0
  %1651 = vmatprep.subr.mxu0 0.0
  %1652 = vmatpush1.msra.mxu0 0.0
  %1653 = vmatprep.subr.mxu0 0.0
  %1654 = vmatpush1.msra.mxu0 0.0
  %1655 = vmatprep.subr.mxu0 0.0
  %1656 = vmatpush1.msra.mxu0 0.0
  %1657 = vmatprep.subr.mxu0 0.0
  %1658 = vmatpush1.msra.mxu0 0.0
  %1659 = vmatprep.subr.mxu0 0.0
  %1660 = vmatpush1.msra.mxu0 0.0
  %1661 = vmatprep.subr.mxu0 0.0
  %1662 = vmatpush1.msra.mxu0 0.0
  %1663 = vmatprep.subr.mxu0 0.0
  %1664 = vmatpush1.msra.mxu0 0.0
  %1665 = vmatprep.subr.mxu0 0.0
  %1666 = vmatpush1.msra.mxu0 0.0
  %1667 = vmatprep.subr.mxu0 0.0
  %1668 = vmatpush1.msra.mxu0 0.0
  %1669 = vmatprep.subr.mxu0 0.0
  %1670 = vmatpush1.msra.mxu0 0.0
  %1671 = vmatprep.subr.mxu0 0.0
  %1672 = vmatpush1.msra.mxu0 0.0
  %1673 = vmatprep.subr.mxu0 0.0
  %1674 = vmatpush1.msra.mxu0 0.0
  %1675 = vmatprep.subr.mxu0 0.0
  %1676 = vmatpush1.msra.mxu0 0.0
  %1677 = vmatprep.subr.mxu0 0.0
  %1678 = vmatpush1.msra.mxu0 0.0
  %1679 = vmatprep.subr.mxu0 0.0
  %1680 = vmatpush1.msra.mxu0 0.0
  %1681 = vmatprep.subr.mxu0 0.0
  %1682 = vmatpush1.msra.mxu0 0.0
  %1683 = vmatprep.subr.mxu0 0.0
  %1684 = vmatpush1.msra.mxu0 0.0
  %1685 = vmatprep.subr.mxu0 0.0
  %1686 = vmatpush1.msra.mxu0 0.0
  %1687 = vmatprep.subr.mxu0 0.0
  %1688 = vmatpush1.msra.mxu0 0.0
  %1689 = vmatprep.subr.mxu0 0.0
  %1690 = vmatpush1.msra.mxu0 0.0
  %1691 = vmatprep.mubr.f32.mxu0 0.0
  %1692 = vmatmul.mubr.f32.gmra.mrb[0].mxu0 %v1625
  %v1693 = vpop.f32.mrb[0].mxu0
  %v1694 = vadd.f32 0.0, %v1693
  %v1695 = vpop.f32.mrb[0].mxu0
  %1696 = vdwg.mxu0
  %v1697 = vadd.f32 %v1624, %v1694
  %v1698 = vxor.u32 %v1697, 2147483648
  %v1699 = vmul.f32 %v1698, 1.442695
  %v1700 = vpow.pop %v1699
  %v1701 = vadd.f32 %v1700, 1.0
  %v1702 = vrcp.pop %v1701
  %v1703 = vmul.f32 1.0, %v1702
  %v1704 = vtanh.pop %v1697
  %v1705 = vmul.f32 %v1703, %v1594
  %1707 = vrot.lane.b32.xlu0 %v1704, 64
  %v1708 = vpop.permute.xlu0 %1707
  %v1710 = vmul.f32 %v1703, %v1708
  %1712 = vrot.lane.b32.xlu0 %v1710, 32
  %v1713 = vpop.permute.xlu0 %1712
  %v1715 = vadd.f32 %v1705, %v1713
  %v1716 = vtanh.pop %v1715
  %1718 = vrot.lane.b32.xlu0 %v1716, 64
  %v1719 = vpop.permute.xlu0 %1718
  %v1721 = vmul.f32 %v1703, %v1719
  %1723 = vrot.lane.b32.xlu0 %v1721, 32
  %v1724 = vpop.permute.xlu0 %1723
  %1726 = vst.msk [vmem:[%s694] sm:$0xff] %vm172, %v1724
  %v1727 = vmul.f32 %v1721, %v1240
  %v1728 = vsel %vm1243, %v1727, 0.0
  %v1729 = vrot.slane %v1728, 4
  %v1730 = vadd.f32 %v1728, %v1729
  %v1731 = vrot.slane %v1730, 2
  %v1732 = vadd.f32 %v1730, %v1731
  %v1733 = vrot.slane %v1732, 1
  %v1734 = vadd.f32 %v1732, %v1733
  %v1735 = vadd.f32 %v1614, %v1734
  %v1736 = vmul.f32 %v1727, %v1721
  %v1737 = vsel %vm1243, %v1736, 0.0
  %v1738 = vrot.slane %v1737, 4
  %v1739 = vadd.f32 %v1737, %v1738
  %v1740 = vrot.slane %v1739, 2
  %v1741 = vadd.f32 %v1739, %v1740
  %v1742 = vrot.slane %v1741, 1
  %v1743 = vadd.f32 %v1741, %v1742
  %v1744 = vadd.f32 %v1623, %v1743
  %v1745 = vld [vmem:[%s696] sm:$0xff]
  %v1746 = vsel %vm172, %v1724, 0
  %1748 = vmatprep.subr.mxu0 0.0
  %1749 = vmatpush1.msra.mxu0 %v1131
  %1750 = vmatprep.subr.mxu0 0.0
  %1751 = vmatpush1.msra.mxu0 %v1132
  %1752 = vmatprep.subr.mxu0 0.0
  %1753 = vmatpush1.msra.mxu0 %v1133
  %1754 = vmatprep.subr.mxu0 0.0
  %1755 = vmatpush1.msra.mxu0 %v1134
  %1756 = vmatprep.subr.mxu0 0.0
  %1757 = vmatpush1.msra.mxu0 0.0
  %1758 = vmatprep.subr.mxu0 0.0
  %1759 = vmatpush1.msra.mxu0 0.0
  %1760 = vmatprep.subr.mxu0 0.0
  %1761 = vmatpush1.msra.mxu0 0.0
  %1762 = vmatprep.subr.mxu0 0.0
  %1763 = vmatpush1.msra.mxu0 0.0
  %1764 = vmatprep.subr.mxu0 0.0
  %1765 = vmatpush1.msra.mxu0 0.0
  %1766 = vmatprep.subr.mxu0 0.0
  %1767 = vmatpush1.msra.mxu0 0.0
  %1768 = vmatprep.subr.mxu0 0.0
  %1769 = vmatpush1.msra.mxu0 0.0
  %1770 = vmatprep.subr.mxu0 0.0
  %1771 = vmatpush1.msra.mxu0 0.0
  %1772 = vmatprep.subr.mxu0 0.0
  %1773 = vmatpush1.msra.mxu0 0.0
  %1774 = vmatprep.subr.mxu0 0.0
  %1775 = vmatpush1.msra.mxu0 0.0
  %1776 = vmatprep.subr.mxu0 0.0
  %1777 = vmatpush1.msra.mxu0 0.0
  %1778 = vmatprep.subr.mxu0 0.0
  %1779 = vmatpush1.msra.mxu0 0.0
  %1780 = vmatprep.subr.mxu0 0.0
  %1781 = vmatpush1.msra.mxu0 0.0
  %1782 = vmatprep.subr.mxu0 0.0
  %1783 = vmatpush1.msra.mxu0 0.0
  %1784 = vmatprep.subr.mxu0 0.0
  %1785 = vmatpush1.msra.mxu0 0.0
  %1786 = vmatprep.subr.mxu0 0.0
  %1787 = vmatpush1.msra.mxu0 0.0
  %1788 = vmatprep.subr.mxu0 0.0
  %1789 = vmatpush1.msra.mxu0 0.0
  %1790 = vmatprep.subr.mxu0 0.0
  %1791 = vmatpush1.msra.mxu0 0.0
  %1792 = vmatprep.subr.mxu0 0.0
  %1793 = vmatpush1.msra.mxu0 0.0
  %1794 = vmatprep.subr.mxu0 0.0
  %1795 = vmatpush1.msra.mxu0 0.0
  %1796 = vmatprep.subr.mxu0 0.0
  %1797 = vmatpush1.msra.mxu0 0.0
  %1798 = vmatprep.subr.mxu0 0.0
  %1799 = vmatpush1.msra.mxu0 0.0
  %1800 = vmatprep.subr.mxu0 0.0
  %1801 = vmatpush1.msra.mxu0 0.0
  %1802 = vmatprep.subr.mxu0 0.0
  %1803 = vmatpush1.msra.mxu0 0.0
  %1804 = vmatprep.subr.mxu0 0.0
  %1805 = vmatpush1.msra.mxu0 0.0
  %1806 = vmatprep.subr.mxu0 0.0
  %1807 = vmatpush1.msra.mxu0 0.0
  %1808 = vmatprep.subr.mxu0 0.0
  %1809 = vmatpush1.msra.mxu0 0.0
  %1810 = vmatprep.subr.mxu0 0.0
  %1811 = vmatpush1.msra.mxu0 0.0
  %1812 = vmatprep.mubr.f32.mxu0 0.0
  %1813 = vmatmul.mubr.f32.gmra.mrb[0].mxu0 %v1746
  %v1814 = vpop.f32.mrb[0].mxu0
  %v1815 = vadd.f32 0.0, %v1814
  %v1816 = vpop.f32.mrb[0].mxu0
  %1817 = vdwg.mxu0
  %v1818 = vadd.f32 %v1745, %v1815
  %v1819 = vxor.u32 %v1818, 2147483648
  %v1820 = vmul.f32 %v1819, 1.442695
  %v1821 = vpow.pop %v1820
  %v1822 = vadd.f32 %v1821, 1.0
  %v1823 = vrcp.pop %v1822
  %v1824 = vmul.f32 1.0, %v1823
  %v1825 = vtanh.pop %v1818
  %v1826 = vmul.f32 %v1824, %v1715
  %1828 = vrot.lane.b32.xlu0 %v1825, 64
  %v1829 = vpop.permute.xlu0 %1828
  %v1831 = vmul.f32 %v1824, %v1829
  %1833 = vrot.lane.b32.xlu0 %v1831, 32
  %v1834 = vpop.permute.xlu0 %1833
  %v1836 = vadd.f32 %v1826, %v1834
  %v1837 = vtanh.pop %v1836
  %1839 = vrot.lane.b32.xlu0 %v1837, 64
  %v1840 = vpop.permute.xlu0 %1839
  %v1842 = vmul.f32 %v1824, %v1840
  %1844 = vrot.lane.b32.xlu0 %v1842, 32
  %v1845 = vpop.permute.xlu0 %1844
  %1847 = vst.msk [vmem:[%s799] sm:$0xff] %vm172, %v1845
  %v1848 = vmul.f32 %v1842, %v1240
  %v1849 = vsel %vm1243, %v1848, 0.0
  %v1850 = vrot.slane %v1849, 4
  %v1851 = vadd.f32 %v1849, %v1850
  %v1852 = vrot.slane %v1851, 2
  %v1853 = vadd.f32 %v1851, %v1852
  %v1854 = vrot.slane %v1853, 1
  %v1855 = vadd.f32 %v1853, %v1854
  %v1856 = vadd.f32 %v1735, %v1855
  %v1857 = vmul.f32 %v1848, %v1842
  %v1858 = vsel %vm1243, %v1857, 0.0
  %v1859 = vrot.slane %v1858, 4
  %v1860 = vadd.f32 %v1858, %v1859
  %v1861 = vrot.slane %v1860, 2
  %v1862 = vadd.f32 %v1860, %v1861
  %v1863 = vrot.slane %v1862, 1
  %v1864 = vadd.f32 %v1862, %v1863
  %v1865 = vadd.f32 %v1744, %v1864
  %v1866 = vld [vmem:[%s801] sm:$0xff]
  %v1867 = vsel %vm172, %v1845, 0
  %1869 = vmatprep.subr.mxu0 0.0
  %1870 = vmatpush1.msra.mxu0 %v1131
  %1871 = vmatprep.subr.mxu0 0.0
  %1872 = vmatpush1.msra.mxu0 %v1132
  %1873 = vmatprep.subr.mxu0 0.0
  %1874 = vmatpush1.msra.mxu0 %v1133
  %1875 = vmatprep.subr.mxu0 0.0
  %1876 = vmatpush1.msra.mxu0 %v1134
  %1877 = vmatprep.subr.mxu0 0.0
  %1878 = vmatpush1.msra.mxu0 0.0
  %1879 = vmatprep.subr.mxu0 0.0
  %1880 = vmatpush1.msra.mxu0 0.0
  %1881 = vmatprep.subr.mxu0 0.0
  %1882 = vmatpush1.msra.mxu0 0.0
  %1883 = vmatprep.subr.mxu0 0.0
  %1884 = vmatpush1.msra.mxu0 0.0
  %1885 = vmatprep.subr.mxu0 0.0
  %1886 = vmatpush1.msra.mxu0 0.0
  %1887 = vmatprep.subr.mxu0 0.0
  %1888 = vmatpush1.msra.mxu0 0.0
  %1889 = vmatprep.subr.mxu0 0.0
  %1890 = vmatpush1.msra.mxu0 0.0
  %1891 = vmatprep.subr.mxu0 0.0
  %1892 = vmatpush1.msra.mxu0 0.0
  %1893 = vmatprep.subr.mxu0 0.0
  %1894 = vmatpush1.msra.mxu0 0.0
  %1895 = vmatprep.subr.mxu0 0.0
  %1896 = vmatpush1.msra.mxu0 0.0
  %1897 = vmatprep.subr.mxu0 0.0
  %1898 = vmatpush1.msra.mxu0 0.0
  %1899 = vmatprep.subr.mxu0 0.0
  %1900 = vmatpush1.msra.mxu0 0.0
  %1901 = vmatprep.subr.mxu0 0.0
  %1902 = vmatpush1.msra.mxu0 0.0
  %1903 = vmatprep.subr.mxu0 0.0
  %1904 = vmatpush1.msra.mxu0 0.0
  %1905 = vmatprep.subr.mxu0 0.0
  %1906 = vmatpush1.msra.mxu0 0.0
  %1907 = vmatprep.subr.mxu0 0.0
  %1908 = vmatpush1.msra.mxu0 0.0
  %1909 = vmatprep.subr.mxu0 0.0
  %1910 = vmatpush1.msra.mxu0 0.0
  %1911 = vmatprep.subr.mxu0 0.0
  %1912 = vmatpush1.msra.mxu0 0.0
  %1913 = vmatprep.subr.mxu0 0.0
  %1914 = vmatpush1.msra.mxu0 0.0
  %1915 = vmatprep.subr.mxu0 0.0
  %1916 = vmatpush1.msra.mxu0 0.0
  %1917 = vmatprep.subr.mxu0 0.0
  %1918 = vmatpush1.msra.mxu0 0.0
  %1919 = vmatprep.subr.mxu0 0.0
  %1920 = vmatpush1.msra.mxu0 0.0
  %1921 = vmatprep.subr.mxu0 0.0
  %1922 = vmatpush1.msra.mxu0 0.0
  %1923 = vmatprep.subr.mxu0 0.0
  %1924 = vmatpush1.msra.mxu0 0.0
  %1925 = vmatprep.subr.mxu0 0.0
  %1926 = vmatpush1.msra.mxu0 0.0
  %1927 = vmatprep.subr.mxu0 0.0
  %1928 = vmatpush1.msra.mxu0 0.0
  %1929 = vmatprep.subr.mxu0 0.0
  %1930 = vmatpush1.msra.mxu0 0.0
  %1931 = vmatprep.subr.mxu0 0.0
  %1932 = vmatpush1.msra.mxu0 0.0
  %1933 = vmatprep.mubr.f32.mxu0 0.0
  %1934 = vmatmul.mubr.f32.gmra.mrb[0].mxu0 %v1867
  %v1935 = vpop.f32.mrb[0].mxu0
  %v1936 = vadd.f32 0.0, %v1935
  %v1937 = vpop.f32.mrb[0].mxu0
  %1938 = vdwg.mxu0
  %v1939 = vadd.f32 %v1866, %v1936
  %v1940 = vxor.u32 %v1939, 2147483648
  %v1941 = vmul.f32 %v1940, 1.442695
  %v1942 = vpow.pop %v1941
  %v1943 = vadd.f32 %v1942, 1.0
  %v1944 = vrcp.pop %v1943
  %v1945 = vmul.f32 1.0, %v1944
  %v1946 = vtanh.pop %v1939
  %v1947 = vmul.f32 %v1945, %v1836
  %1949 = vrot.lane.b32.xlu0 %v1946, 64
  %v1950 = vpop.permute.xlu0 %1949
  %v1952 = vmul.f32 %v1945, %v1950
  %1954 = vrot.lane.b32.xlu0 %v1952, 32
  %v1955 = vpop.permute.xlu0 %1954
  %v1957 = vadd.f32 %v1947, %v1955
  %v1958 = vtanh.pop %v1957
  %1960 = vrot.lane.b32.xlu0 %v1958, 64
  %v1961 = vpop.permute.xlu0 %1960
  %v1963 = vmul.f32 %v1945, %v1961
  %1965 = vrot.lane.b32.xlu0 %v1963, 32
  %v1966 = vpop.permute.xlu0 %1965
  %1968 = vst.msk [vmem:[%s904] sm:$0xff] %vm172, %v1966
  %v1969 = vmul.f32 %v1963, %v1240
  %v1970 = vsel %vm1243, %v1969, 0.0
  %v1971 = vrot.slane %v1970, 4
  %v1972 = vadd.f32 %v1970, %v1971
  %v1973 = vrot.slane %v1972, 2
  %v1974 = vadd.f32 %v1972, %v1973
  %v1975 = vrot.slane %v1974, 1
  %v1976 = vadd.f32 %v1974, %v1975
  %v1977 = vadd.f32 %v1856, %v1976
  %v1978 = vmul.f32 %v1969, %v1963
  %v1979 = vsel %vm1243, %v1978, 0.0
  %v1980 = vrot.slane %v1979, 4
  %v1981 = vadd.f32 %v1979, %v1980
  %v1982 = vrot.slane %v1981, 2
  %v1983 = vadd.f32 %v1981, %v1982
  %v1984 = vrot.slane %v1983, 1
  %v1985 = vadd.f32 %v1983, %v1984
  %v1986 = vadd.f32 %v1865, %v1985
  %v1987 = vld [vmem:[%s906] sm:$0xff]
  %v1988 = vsel %vm172, %v1966, 0
  %1990 = vmatprep.subr.mxu0 0.0
  %1991 = vmatpush1.msra.mxu0 %v1131
  %1992 = vmatprep.subr.mxu0 0.0
  %1993 = vmatpush1.msra.mxu0 %v1132
  %1994 = vmatprep.subr.mxu0 0.0
  %1995 = vmatpush1.msra.mxu0 %v1133
  %1996 = vmatprep.subr.mxu0 0.0
  %1997 = vmatpush1.msra.mxu0 %v1134
  %1998 = vmatprep.subr.mxu0 0.0
  %1999 = vmatpush1.msra.mxu0 0.0
  %2000 = vmatprep.subr.mxu0 0.0
  %2001 = vmatpush1.msra.mxu0 0.0
  %2002 = vmatprep.subr.mxu0 0.0
  %2003 = vmatpush1.msra.mxu0 0.0
  %2004 = vmatprep.subr.mxu0 0.0
  %2005 = vmatpush1.msra.mxu0 0.0
  %2006 = vmatprep.subr.mxu0 0.0
  %2007 = vmatpush1.msra.mxu0 0.0
  %2008 = vmatprep.subr.mxu0 0.0
  %2009 = vmatpush1.msra.mxu0 0.0
  %2010 = vmatprep.subr.mxu0 0.0
  %2011 = vmatpush1.msra.mxu0 0.0
  %2012 = vmatprep.subr.mxu0 0.0
  %2013 = vmatpush1.msra.mxu0 0.0
  %2014 = vmatprep.subr.mxu0 0.0
  %2015 = vmatpush1.msra.mxu0 0.0
  %2016 = vmatprep.subr.mxu0 0.0
  %2017 = vmatpush1.msra.mxu0 0.0
  %2018 = vmatprep.subr.mxu0 0.0
  %2019 = vmatpush1.msra.mxu0 0.0
  %2020 = vmatprep.subr.mxu0 0.0
  %2021 = vmatpush1.msra.mxu0 0.0
  %2022 = vmatprep.subr.mxu0 0.0
  %2023 = vmatpush1.msra.mxu0 0.0
  %2024 = vmatprep.subr.mxu0 0.0
  %2025 = vmatpush1.msra.mxu0 0.0
  %2026 = vmatprep.subr.mxu0 0.0
  %2027 = vmatpush1.msra.mxu0 0.0
  %2028 = vmatprep.subr.mxu0 0.0
  %2029 = vmatpush1.msra.mxu0 0.0
  %2030 = vmatprep.subr.mxu0 0.0
  %2031 = vmatpush1.msra.mxu0 0.0
  %2032 = vmatprep.subr.mxu0 0.0
  %2033 = vmatpush1.msra.mxu0 0.0
  %2034 = vmatprep.subr.mxu0 0.0
  %2035 = vmatpush1.msra.mxu0 0.0
  %2036 = vmatprep.subr.mxu0 0.0
  %2037 = vmatpush1.msra.mxu0 0.0
  %2038 = vmatprep.subr.mxu0 0.0
  %2039 = vmatpush1.msra.mxu0 0.0
  %2040 = vmatprep.subr.mxu0 0.0
  %2041 = vmatpush1.msra.mxu0 0.0
  %2042 = vmatprep.subr.mxu0 0.0
  %2043 = vmatpush1.msra.mxu0 0.0
  %2044 = vmatprep.subr.mxu0 0.0
  %2045 = vmatpush1.msra.mxu0 0.0
  %2046 = vmatprep.subr.mxu0 0.0
  %2047 = vmatpush1.msra.mxu0 0.0
  %2048 = vmatprep.subr.mxu0 0.0
  %2049 = vmatpush1.msra.mxu0 0.0
  %2050 = vmatprep.subr.mxu0 0.0
  %2051 = vmatpush1.msra.mxu0 0.0
  %2052 = vmatprep.subr.mxu0 0.0
  %2053 = vmatpush1.msra.mxu0 0.0
  %2054 = vmatprep.mubr.f32.mxu0 0.0
  %2055 = vmatmul.mubr.f32.gmra.mrb[0].mxu0 %v1988
  %v2056 = vpop.f32.mrb[0].mxu0
  %v2057 = vadd.f32 0.0, %v2056
  %v2058 = vpop.f32.mrb[0].mxu0
  %2059 = vdwg.mxu0
  %v2060 = vadd.f32 %v1987, %v2057
  %v2061 = vxor.u32 %v2060, 2147483648
  %v2062 = vmul.f32 %v2061, 1.442695
  %v2063 = vpow.pop %v2062
  %v2064 = vadd.f32 %v2063, 1.0
  %v2065 = vrcp.pop %v2064
  %v2066 = vmul.f32 1.0, %v2065
  %v2067 = vtanh.pop %v2060
  %v2068 = vmul.f32 %v2066, %v1957
  %2070 = vrot.lane.b32.xlu0 %v2067, 64
  %v2071 = vpop.permute.xlu0 %2070
  %v2073 = vmul.f32 %v2066, %v2071
  %2075 = vrot.lane.b32.xlu0 %v2073, 32
  %v2076 = vpop.permute.xlu0 %2075
  %v2078 = vadd.f32 %v2068, %v2076
  %v2079 = vtanh.pop %v2078
  %2081 = vrot.lane.b32.xlu0 %v2079, 64
  %v2082 = vpop.permute.xlu0 %2081
  %v2084 = vmul.f32 %v2066, %v2082
  %2086 = vrot.lane.b32.xlu0 %v2084, 32
  %v2087 = vpop.permute.xlu0 %2086
  %2089 = vst.msk [vmem:[%s1009] sm:$0xff] %vm172, %v2087
  %v2090 = vmul.f32 %v2084, %v1240
  %v2091 = vsel %vm1243, %v2090, 0.0
  %v2092 = vrot.slane %v2091, 4
  %v2093 = vadd.f32 %v2091, %v2092
  %v2094 = vrot.slane %v2093, 2
  %v2095 = vadd.f32 %v2093, %v2094
  %v2096 = vrot.slane %v2095, 1
  %v2097 = vadd.f32 %v2095, %v2096
  %v2098 = vadd.f32 %v1977, %v2097
  %v2099 = vmul.f32 %v2090, %v2084
  %v2100 = vsel %vm1243, %v2099, 0.0
  %v2101 = vrot.slane %v2100, 4
  %v2102 = vadd.f32 %v2100, %v2101
  %v2103 = vrot.slane %v2102, 2
  %v2104 = vadd.f32 %v2102, %v2103
  %v2105 = vrot.slane %v2104, 1
  %v2106 = vadd.f32 %v2104, %v2105
  %v2107 = vadd.f32 %v1986, %v2106
  %v2108 = vmul.f32 %v2098, 0.0625
  %v2109 = vmul.f32 %v2107, 0.0625
  %v2110 = vmul.f32 %v2108, %v2108
  %v2111 = vsub.f32 %v2109, %v2110
  %v2112 = vadd.f32 %v2111, 1e-05
  %v2113 = vrsqrt.pop %v2112
  %v2114 = vld [vmem:[%s8] sm:$0x1]
  %v2116 = vlaneseq
  %v2117 = vshrl.u32 %v2116, 7
  %v2118 = vsub.s32 0, %v2117
  %v2119 = vrot.slane %v2114, %v2118
  %2120 = vrot.lane.b32.xlu0 %v2119, 96
  %v2121 = vpop.permute.xlu0 %2120
  %v2123 = vmul.f32 %v2113, %v2121
  %v2124 = vld [vmem:[#allocation3 + $0x38] sm:$0xff]
  %2126 = vrot.lane.b32.xlu0 %v2108, 32
  %v2127 = vpop.permute.xlu0 %2126
  %v2129 = vsub.f32 %v2124, %v2127
  %v2130 = vlaneseq
  %v2131 = vshrl.u32 %v2130, 7
  %v2132 = vsub.s32 0, %v2131
  %v2133 = vrot.slane %v2123, %v2132
  %2135 = vrot.lane.b32.xlu0 %v2133, 32
  %v2136 = vpop.permute.xlu0 %2135
  %v2138 = vmul.f32 %v2129, %v2136
  %v2139 = vld [vmem:[%s9] sm:$0x1]
  %v2141 = vlaneseq
  %v2142 = vshrl.u32 %v2141, 7
  %v2143 = vsub.s32 0, %v2142
  %v2144 = vrot.slane %v2139, %v2143
  %v2146 = vadd.f32 %v2138, %v2144
  %v2147 = vld [vmem:[%s14] sm:$0xff]
  %v2148 = vmul.f32 %v2146, %v2147
  %v2149 = vld [vmem:[%s10] sm:$0xff]
  %v2150 = vld [vmem:[%s10 + $0x8] sm:$0xff]
  %v2151 = vld [vmem:[%s10 + $0x10] sm:$0xff]
  %v2152 = vld [vmem:[%s10 + $0x18] sm:$0xff]
  %v2153 = vld [vmem:[%s11] sm:$0x1]
  %v2155 = vlaneseq
  %v2156 = vshrl.u32 %v2155, 7
  %v2157 = vsub.s32 0, %v2156
  %v2158 = vrot.slane %v2153, %v2157
  %v2161 = vsel %vm172, %v2148, 0
  %2163 = vmatprep.subr.mxu0 0.0
  %2164 = vmatpush1.msra.mxu0 %v2149
  %2165 = vmatprep.subr.mxu0 0.0
  %2166 = vmatpush1.msra.mxu0 %v2150
  %2167 = vmatprep.subr.mxu0 0.0
  %2168 = vmatpush1.msra.mxu0 %v2151
  %2169 = vmatprep.subr.mxu0 0.0
  %2170 = vmatpush1.msra.mxu0 %v2152
  %2171 = vmatprep.subr.mxu0 0.0
  %2172 = vmatpush1.msra.mxu0 0.0
  %2173 = vmatprep.subr.mxu0 0.0
  %2174 = vmatpush1.msra.mxu0 0.0
  %2175 = vmatprep.subr.mxu0 0.0
  %2176 = vmatpush1.msra.mxu0 0.0
  %2177 = vmatprep.subr.mxu0 0.0
  %2178 = vmatpush1.msra.mxu0 0.0
  %2179 = vmatprep.subr.mxu0 0.0
  %2180 = vmatpush1.msra.mxu0 0.0
  %2181 = vmatprep.subr.mxu0 0.0
  %2182 = vmatpush1.msra.mxu0 0.0
  %2183 = vmatprep.subr.mxu0 0.0
  %2184 = vmatpush1.msra.mxu0 0.0
  %2185 = vmatprep.subr.mxu0 0.0
  %2186 = vmatpush1.msra.mxu0 0.0
  %2187 = vmatprep.subr.mxu0 0.0
  %2188 = vmatpush1.msra.mxu0 0.0
  %2189 = vmatprep.subr.mxu0 0.0
  %2190 = vmatpush1.msra.mxu0 0.0
  %2191 = vmatprep.subr.mxu0 0.0
  %2192 = vmatpush1.msra.mxu0 0.0
  %2193 = vmatprep.subr.mxu0 0.0
  %2194 = vmatpush1.msra.mxu0 0.0
  %2195 = vmatprep.subr.mxu0 0.0
  %2196 = vmatpush1.msra.mxu0 0.0
  %2197 = vmatprep.subr.mxu0 0.0
  %2198 = vmatpush1.msra.mxu0 0.0
  %2199 = vmatprep.subr.mxu0 0.0
  %2200 = vmatpush1.msra.mxu0 0.0
  %2201 = vmatprep.subr.mxu0 0.0
  %2202 = vmatpush1.msra.mxu0 0.0
  %2203 = vmatprep.subr.mxu0 0.0
  %2204 = vmatpush1.msra.mxu0 0.0
  %2205 = vmatprep.subr.mxu0 0.0
  %2206 = vmatpush1.msra.mxu0 0.0
  %2207 = vmatprep.subr.mxu0 0.0
  %2208 = vmatpush1.msra.mxu0 0.0
  %2209 = vmatprep.subr.mxu0 0.0
  %2210 = vmatpush1.msra.mxu0 0.0
  %2211 = vmatprep.subr.mxu0 0.0
  %2212 = vmatpush1.msra.mxu0 0.0
  %2213 = vmatprep.subr.mxu0 0.0
  %2214 = vmatpush1.msra.mxu0 0.0
  %2215 = vmatprep.subr.mxu0 0.0
  %2216 = vmatpush1.msra.mxu0 0.0
  %2217 = vmatprep.subr.mxu0 0.0
  %2218 = vmatpush1.msra.mxu0 0.0
  %2219 = vmatprep.subr.mxu0 0.0
  %2220 = vmatpush1.msra.mxu0 0.0
  %2221 = vmatprep.subr.mxu0 0.0
  %2222 = vmatpush1.msra.mxu0 0.0
  %2223 = vmatprep.subr.mxu0 0.0
  %2224 = vmatpush1.msra.mxu0 0.0
  %2225 = vmatprep.subr.mxu0 0.0
  %2226 = vmatpush1.msra.mxu0 0.0
  %2227 = vmatprep.mubr.f32.mxu0 0.0
  %2228 = vmatmul.mubr.f32.gmra.mrb[0].mxu0 %v2161
  %v2229 = vpop.f32.mrb[0].mxu0
  %v2230 = vadd.f32 %v2158, %v2229
  %v2231 = vpop.f32.mrb[0].mxu0
  %2232 = vdwg.mxu0
  %v2233 = vld [vmem:[%s12] sm:$0xff]
  %v2234 = vld [vmem:[%s12 + $0x8] sm:$0xff]
  %v2235 = vld [vmem:[%s13] sm:$0x1]
  %v2237 = vlaneseq
  %v2238 = vshrl.u32 %v2237, 7
  %v2239 = vsub.s32 0, %v2238
  %v2240 = vrot.slane %v2235, %v2239
  %v2243 = vsel %vm81, %v2230, 0
  %2245 = vmatprep.subr.mxu0 0.0
  %2246 = vmatpush1.msra.mxu0 %v2233
  %2247 = vmatprep.subr.mxu0 0.0
  %2248 = vmatpush1.msra.mxu0 %v2234
  %2249 = vmatprep.subr.mxu0 0.0
  %2250 = vmatpush1.msra.mxu0 0.0
  %2251 = vmatprep.subr.mxu0 0.0
  %2252 = vmatpush1.msra.mxu0 0.0
  %2253 = vmatprep.subr.mxu0 0.0
  %2254 = vmatpush1.msra.mxu0 0.0
  %2255 = vmatprep.subr.mxu0 0.0
  %2256 = vmatpush1.msra.mxu0 0.0
  %2257 = vmatprep.subr.mxu0 0.0
  %2258 = vmatpush1.msra.mxu0 0.0
  %2259 = vmatprep.subr.mxu0 0.0
  %2260 = vmatpush1.msra.mxu0 0.0
  %2261 = vmatprep.subr.mxu0 0.0
  %2262 = vmatpush1.msra.mxu0 0.0
  %2263 = vmatprep.subr.mxu0 0.0
  %2264 = vmatpush1.msra.mxu0 0.0
  %2265 = vmatprep.subr.mxu0 0.0
  %2266 = vmatpush1.msra.mxu0 0.0
  %2267 = vmatprep.subr.mxu0 0.0
  %2268 = vmatpush1.msra.mxu0 0.0
  %2269 = vmatprep.subr.mxu0 0.0
  %2270 = vmatpush1.msra.mxu0 0.0
  %2271 = vmatprep.subr.mxu0 0.0
  %2272 = vmatpush1.msra.mxu0 0.0
  %2273 = vmatprep.subr.mxu0 0.0
  %2274 = vmatpush1.msra.mxu0 0.0
  %2275 = vmatprep.subr.mxu0 0.0
  %2276 = vmatpush1.msra.mxu0 0.0
  %2277 = vmatprep.subr.mxu0 0.0
  %2278 = vmatpush1.msra.mxu0 0.0
  %2279 = vmatprep.subr.mxu0 0.0
  %2280 = vmatpush1.msra.mxu0 0.0
  %2281 = vmatprep.subr.mxu0 0.0
  %2282 = vmatpush1.msra.mxu0 0.0
  %2283 = vmatprep.subr.mxu0 0.0
  %2284 = vmatpush1.msra.mxu0 0.0
  %2285 = vmatprep.subr.mxu0 0.0
  %2286 = vmatpush1.msra.mxu0 0.0
  %2287 = vmatprep.subr.mxu0 0.0
  %2288 = vmatpush1.msra.mxu0 0.0
  %2289 = vmatprep.subr.mxu0 0.0
  %2290 = vmatpush1.msra.mxu0 0.0
  %2291 = vmatprep.subr.mxu0 0.0
  %2292 = vmatpush1.msra.mxu0 0.0
  %2293 = vmatprep.subr.mxu0 0.0
  %2294 = vmatpush1.msra.mxu0 0.0
  %2295 = vmatprep.subr.mxu0 0.0
  %2296 = vmatpush1.msra.mxu0 0.0
  %2297 = vmatprep.subr.mxu0 0.0
  %2298 = vmatpush1.msra.mxu0 0.0
  %2299 = vmatprep.subr.mxu0 0.0
  %2300 = vmatpush1.msra.mxu0 0.0
  %2301 = vmatprep.subr.mxu0 0.0
  %2302 = vmatpush1.msra.mxu0 0.0
  %2303 = vmatprep.subr.mxu0 0.0
  %2304 = vmatpush1.msra.mxu0 0.0
  %2305 = vmatprep.subr.mxu0 0.0
  %2306 = vmatpush1.msra.mxu0 0.0
  %2307 = vmatprep.subr.mxu0 0.0
  %2308 = vmatpush1.msra.mxu0 0.0
  %2309 = vmatprep.mubr.f32.mxu0 0.0
  %2310 = vmatmul.mubr.f32.gmra.mrb[0].mxu0 %v2243
  %v2311 = vpop.f32.mrb[0].mxu0
  %v2312 = vadd.f32 %v2240, %v2311
  %v2313 = vpop.f32.mrb[0].mxu0
  %2314 = vdwg.mxu0
  %v2315 = vld [vmem:[%s15] sm:$0xff]
  %v2316 = vmul.f32 %v2312, %v2315
  %v2317 = vxor.u32 %v2316, 2147483648
  %v2318 = vmul.f32 %v2317, 1.442695
  %v2319 = vpow.pop %v2318
  %v2320 = vadd.f32 %v2319, 1.0
  %v2321 = vrcp.pop %v2320
  %v2322 = vmul.f32 1.0, %v2321
  %vm2323 = vcmask 15360
  %2324 = vst.msk [vmem:[%s16] sm:$0xff] %vm2323, %v2322
  // Predicated region
  $region66: #{tpu_custom_call.1} parent=0 // pred_check
    _
  $region67: #{tpu_custom_call.1} parent=0 // pred_check_branch
    %2326 = sbr.rel (0) target = $region69
  $region68: #{tpu_custom_call.1} parent=0 // pred_region
    _
  $region69: #{tpu_custom_call.1} parent=0 // pred_fallthru
    _
  // Predicated region
  $region70: #{tpu_custom_call.1} parent=0 // pred_check
    _
  $region71: #{tpu_custom_call.1} parent=0 // pred_check_branch
    %2328 = sbr.rel (0) target = $region73
  $region72: #{tpu_custom_call.1} parent=0 // pred_region
    _
  $region73: #{tpu_custom_call.1} parent=0 // pred_fallthru
    _

</llo_original>
